<compile_context>
chip_gen: v7x
topology: tpu7x:2x2x1
jax: 0.10.0
libtpu: 0.0.40
codegen_flags: <defaults>
</compile_context>

<pallas_src>
import jax
import jax.numpy as jnp
import numpy as np
from jax.experimental import pallas as pl
from jax.experimental.pallas import tpu as pltpu


def _round_up(x, m):
    return (x + m - 1) // m * m


# ---------------------------------------------------------------------------
# Pallas kernels: fused (W @ P) GEMM + BatchNorm affine + Hardtanh(0, 20)
#   w_ref     : (nk, C_out, tk) bf16  VMEM-resident weight slab (constant index_map)
#   p_ref     : (tk, tm)        bf16  im2col patch columns (M on the lane axis)
#   scale_ref : (C_out, 1)      f32   folded BN scale  = gamma / sqrt(var + eps)
#   bias_ref  : (C_out, 1)      f32   folded conv-bias + BN shift
#   o_ref     : (C_out, tm)           lane-dense output tile
# ---------------------------------------------------------------------------
def _gemm_bn_htanh_kernel(w_ref, p_ref, scale_ref, bias_ref, o_ref):
    """Single-K-block path (conv1): no accumulator / init / finalize needed."""
    y = jnp.dot(w_ref[0], p_ref[...], preferred_element_type=jnp.float32)
    y = y * scale_ref[...] + bias_ref[...]
    o_ref[...] = jnp.clip(y, 0.0, 20.0).astype(o_ref.dtype)


def _gemm_bn_htanh_acc_kernel(w_ref, p_ref, scale_ref, bias_ref, o_ref):
    """Multi-K-block path (conv2): accumulate into the resident f32 output block."""
    k = pl.program_id(1)

    @pl.when(k == 0)
    def _init():
        o_ref[...] = jnp.zeros_like(o_ref)

    # w_ref[k]: dynamic first-axis index into the resident slab (no weight re-DMA).
    o_ref[...] += jnp.dot(w_ref[k], p_ref[...], preferred_element_type=jnp.float32)

    @pl.when(k == pl.num_programs(1) - 1)
    def _finalize():
        # Epilogue runs once per M tile.
        y = o_ref[...] * scale_ref[...] + bias_ref[...]
        o_ref[...] = jnp.clip(y, 0.0, 20.0).astype(o_ref.dtype)


# ---------------------------------------------------------------------------
# Per-generation tile / VMEM-budget selection
# ---------------------------------------------------------------------------
def _vmem_budget_bytes():
    try:
        cap = int(pltpu.get_tpu_info().vmem_capacity_bytes)   # 128 MiB v5e/v6e, 64 MiB v7x
    except Exception:
        cap = 64 * 1024 * 1024                                # conservative fallback (v7x)
    # Leave headroom for Mosaic internal scratch; cap the request.
    return min((cap * 3) // 4, 100 * 1024 * 1024)


def _choose_tiles(M, tk, c_out):
    budget = _vmem_budget_bytes()
    if M <= 128:
        return M, budget                                      # toy shapes: full-extent block
    fixed = 4 * 1024 * 1024                                   # resident W + scale/bias + slack
    tm = 256
    for cand in (4096, 3072, 2048, 1536, 1024, 768, 512, 384, 256):
        need = 2 * (tk * cand * 2) + 2 * (c_out * cand * 4) + fixed   # dbl-buf bf16 P + out
        if need <= budget:
            tm = cand
            break
    # Keep at least 2 M tiles so the "parallel" axis can shard across v7x's two TCs.
    tm = min(tm, max(128, _round_up(pl.cdiv(M, 2), 128)))
    return tm, budget


def _fused_gemm(w_kt, patches_t, scale, bias, *, out_dtype):
    """clip(W @ P * scale + bias, 0, 20) -> (C_out, M) in out_dtype."""
    nk, C_out, tk = w_kt.shape
    K_pad, M = patches_t.shape
    assert K_pad == nk * tk

    tm, vmem_limit = _choose_tiles(M, tk, C_out)
    nm = pl.cdiv(M, tm)
    out_shape = jax.ShapeDtypeStruct((C_out, M), out_dtype)   # exact M: edge blocks masked

    if nk == 1:
        return pl.pallas_call(
            _gemm_bn_htanh_kernel,
            out_shape=out_shape,
            grid=(nm,),
            in_specs=[
                pl.BlockSpec((1, C_out, tk), lambda m: (0, 0, 0)),   # resident W slab
                pl.BlockSpec((tk, tm), lambda m: (0, m)),            # patch columns
                pl.BlockSpec((C_out, 1), lambda m: (0, 0)),          # BN scale
                pl.BlockSpec((C_out, 1), lambda m: (0, 0)),          # BN bias
            ],
            out_specs=pl.BlockSpec((C_out, tm), lambda m: (0, m)),
            compiler_params=pltpu.CompilerParams(
                dimension_semantics=("parallel",),
                vmem_limit_bytes=vmem_limit),
        )(w_kt, patches_t, scale, bias)

    # Multi-K-tile path accumulates directly in the resident output block.
    assert out_dtype == jnp.float32
    return pl.pallas_call(
        _gemm_bn_htanh_acc_kernel,
        out_shape=out_shape,
        grid=(nm, nk),                                         # reduction (K) axis last
        in_specs=[
            pl.BlockSpec((nk, C_out, tk), lambda m, k: (0, 0, 0)),   # resident W slab
            pl.BlockSpec((tk, tm), lambda m, k: (k, m)),
            pl.BlockSpec((C_out, 1), lambda m, k: (0, 0)),
            pl.BlockSpec((C_out, 1), lambda m, k: (0, 0)),
        ],
        out_specs=pl.BlockSpec((C_out, tm), lambda m, k: (0, m)),
        compiler_params=pltpu.CompilerParams(
            dimension_semantics=("parallel", "arbitrary"),
            vmem_limit_bytes=vmem_limit),
    )(w_kt, patches_t, scale, bias)


# ---------------------------------------------------------------------------
# Glue (plain JAX): transposed im2col in kernel-native layout, K tiling, folding
# ---------------------------------------------------------------------------
def _k_tiling(K, max_tk=3840):
    """(K_pad, tk): tk a lane/sublane-friendly multiple, minimal zero padding."""
    K16 = _round_up(K, 16)                        # bf16 sublane packing; conv1: 451 -> 464
    if K16 <= max_tk:
        return K16, K16                           # single full-extent K block
    nk = -(-K16 // max_tk)                        # conv2: 7392 -> nk=2
    tk = _round_up(-(-K16 // nk), 128)            #         tk=3712, K_pad=7424
    return nk * tk, tk


def _im2col_T(x_cnhw, kh, kw, sh, sw, ph, pw, k_pad):
    """Transposed im2col from a (C, N, H, W) activation -> (K_pad, M) with
    M = N*Ho*Wo on the lane axis and rows ordered (kh, kw, c_in) to match the
    weight flattening.  A single stack is the only materialization (the trailing
    reshape is a free adjacent-dim merge); no transpose pass is needed because the
    activation is already carried in the kernel-native layout.
    """
    C, N, H, W = x_cnhw.shape
    xp = jnp.pad(x_cnhw, ((0, 0), (0, 0), (ph, ph), (pw, pw)))
    Ho = (H + 2 * ph - kh) // sh + 1
    Wo = (W + 2 * pw - kw) // sw + 1

    taps = [xp[:, :, i:i + sh * Ho:sh, j:j + sw * Wo:sw]      # (C, N, Ho, Wo)
            for i in range(kh) for j in range(kw)]
    n_zero_taps, rem = divmod(k_pad - kh * kw * C, C)
    if n_zero_taps > 0:
        taps.extend([jnp.zeros((C, N, Ho, Wo), x_cnhw.dtype)] * n_zero_taps)

    p = jnp.stack(taps, axis=0)                   # (n_taps, C, N, Ho, Wo): one copy
    p = p.reshape(p.shape[0] * C, N * Ho * Wo)    # free reshape (adjacent dims merge)
    if rem:                                       # not hit for these conv shapes
        p = jnp.pad(p, ((0, rem), (0, 0)))
    return p, Ho, Wo


def _fold_conv_bn(w, b, gamma, beta, r_mean, r_var, k_pad, tk, eps):
    C_out, C_in, KH, KW = w.shape
    K = KH * KW * C_in
    # (C_out, C_in, KH, KW) -> (C_out, KH*KW*C_in); K ordering (kh, kw, c_in).
    w_t = jnp.transpose(w, (0, 2, 3, 1)).reshape(C_out, K)
    if k_pad > K:
        w_t = jnp.pad(w_t, ((0, 0), (0, k_pad - K)))
    nk = k_pad // tk
    # (C_out, nk*tk) -> (nk, C_out, tk): the whole slab is one full-extent,
    # VMEM-resident block; the kernel picks its K tile with a first-axis index.
    w_kt = jnp.transpose(w_t.reshape(C_out, nk, tk), (1, 0, 2)).astype(jnp.bfloat16)
    # Fold conv bias and inference-mode BatchNorm into per-channel scale / bias.
    scale = gamma / jnp.sqrt(r_var + eps)
    bias = (b - r_mean) * scale + beta
    return (w_kt,
            scale.reshape(C_out, 1).astype(jnp.float32),
            bias.reshape(C_out, 1).astype(jnp.float32))


def conv_bn_hardtanh(x_cnhw, w, b, gamma, beta, r_mean, r_var, *,
                     stride, padding, out_dtype, eps=1e-5, max_tk=3840):
    """Fused Conv2d+BN+Hardtanh.  Takes and returns activations in the
    kernel-native (C, N, H, W) layout."""
    C_out, C_in, KH, KW = w.shape
    sh, sw = stride
    ph, pw = padding
    C, N = x_cnhw.shape[0], x_cnhw.shape[1]
    assert C == C_in

    K_pad, tk = _k_tiling(KH * KW * C_in, max_tk)
    patches_t, Ho, Wo = _im2col_T(x_cnhw.astype(jnp.bfloat16),
                                  KH, KW, sh, sw, ph, pw, K_pad)
    w_kt, scale, bias = _fold_conv_bn(w, b, gamma, beta, r_mean, r_var, K_pad, tk, eps)

    out = _fused_gemm(w_kt, patches_t, scale, bias, out_dtype=out_dtype)  # (C_out, M)
    return out.reshape(C_out, N, Ho, Wo)          # free reshape, stays kernel-native


def _pad_sequence(x, lengths):
    # Faithful to the reference: `x.masked_fill(mask, 0)` is NOT in-place and its
    # result is discarded, so the original _pad_sequence returns x unchanged.
    del lengths
    return x


# ---------------------------------------------------------------------------
# CNN module: parameters + forward
# ---------------------------------------------------------------------------
def init_cnn_params(key):
    ks = jax.random.split(key, 8)

    def conv_init(kw_key, kb_key, c_out, c_in, kh, kw_):
        fan_in = c_in * kh * kw_
        bound = 1.0 / (fan_in ** 0.5)
        w = jax.random.uniform(kw_key, (c_out, c_in, kh, kw_), jnp.float32,
                               -bound, bound)
        b = jax.random.uniform(kb_key, (c_out,), jnp.float32, -bound, bound)
        return w, b

    w1, b1 = conv_init(ks[0], ks[1], 32, 1, 41, 11)
    w2, b2 = conv_init(ks[2], ks[3], 32, 32, 21, 11)

    # Fresh BatchNorm2d(32): gamma=1, beta=0, running_mean=0, running_var=1.
    # Perturb gamma/beta deterministically so the affine path is exercised.
    g1 = 1.0 + 0.1 * jax.random.normal(ks[4], (32,), jnp.float32)
    be1 = 0.1 * jax.random.normal(ks[5], (32,), jnp.float32)
    g2 = 1.0 + 0.1 * jax.random.normal(ks[6], (32,), jnp.float32)
    be2 = 0.1 * jax.random.normal(ks[7], (32,), jnp.float32)
    zeros = jnp.zeros((32,), jnp.float32)
    ones = jnp.ones((32,), jnp.float32)

    return dict(
        conv1=dict(w=w1, b=b1, gamma=g1, beta=be1, mean=zeros, var=ones),
        conv2=dict(w=w2, b=b2, gamma=g2, beta=be2, mean=zeros, var=ones),
    )


@jax.jit
def cnn_forward(params, x, lengths):
    # Kernel-native (C, N, H, W) layout is kept between the two conv blocks;
    # NCHW is restored exactly once, at the very end.
    x = jnp.transpose(x, (1, 0, 2, 3))            # NCHW -> CNHW (C=1: effectively free)
    p1 = params["conv1"]
    x = conv_bn_hardtanh(x, p1["w"], p1["b"], p1["gamma"], p1["beta"],
                         p1["mean"], p1["var"], stride=(2, 2), padding=(20, 5),
                         out_dtype=jnp.bfloat16)  # bf16 intermediate straight from kernel
    x = _pad_sequence(x, lengths)
    p2 = params["conv2"]
    x = conv_bn_hardtanh(x, p2["w"], p2["b"], p2["gamma"], p2["beta"],
                         p2["mean"], p2["var"], stride=(2, 1), padding=(10, 5),
                         out_dtype=jnp.float32)
    x = _pad_sequence(x, lengths)
    return jnp.transpose(x, (1, 0, 2, 3))         # CNHW -> NCHW once, at the end


def _reference_forward(params, x):
    """Pure-JAX f32 reference (lax.conv) for tolerance checking."""
    def block(x, p, stride, padding):
        y = jax.lax.conv_general_dilated(
            x, p["w"], window_strides=stride,
            padding=[(padding[0], padding[0]), (padding[1], padding[1])],
            dimension_numbers=("NCHW", "OIHW", "NCHW"),
            precision=jax.lax.Precision.HIGHEST)
        y = y + p["b"][None, :, None, None]
        scale = (p["gamma"] / jnp.sqrt(p["var"] + 1e-5))[None, :, None, None]
        y = (y - p["mean"][None, :, None, None]) * scale + p["beta"][None, :, None, None]
        return jnp.clip(y, 0.0, 20.0)

    x = block(x, params["conv1"], (2, 2), (20, 5))
    x = block(x, params["conv2"], (2, 1), (10, 5))
    return x


if __name__ == "__main__":
    key = jax.random.PRNGKey(0)
    k_params, k_x = jax.random.split(key)

    params = init_cnn_params(k_params)

    # x: (batch=2, channels=1, freq=16, time=16), NCHW like PyTorch.
    x = jax.random.normal(k_x, (2, 1, 16, 16), jnp.float32)
    lengths = jnp.array([16, 12], jnp.int32)

    out = cnn_forward(params, x, lengths)
    out = jax.block_until_ready(out)

    # conv1: (2,32,8,8) -> conv2: (2,32,4,8)
    assert out.shape == (2, 32, 4, 8), out.shape
    assert bool(jnp.all(out >= 0.0)) and bool(jnp.all(out <= 20.0))

    # Compare against the pure-JAX f32 reference; tolerance covers the bf16
    # patch / weight / intermediate-activation path (accumulation stays f32).
    ref = jax.jit(_reference_forward)(params, x)
    np.testing.assert_allclose(np.asarray(out), np.asarray(ref), rtol=0.1, atol=0.3)

    print("KERNEL_OK")
</pallas_src>

<mosaic_0001>
module attributes {stable_mosaic.version = 11 : i64} {
  func.func @_gemm_bn_htanh_kernel(%arg0: i32, %arg1: memref<1x32x464xbf16, #tpu.memory_space<vmem>>, %arg2: memref<464x128xbf16, #tpu.memory_space<vmem>>, %arg3: memref<32x1xf32, #tpu.memory_space<vmem>>, %arg4: memref<32x1xf32, #tpu.memory_space<vmem>>, %arg5: memref<32x128xbf16, #tpu.memory_space<vmem>>) attributes {dimension_semantics = [#tpu.dimension_semantics<parallel>], iteration_bounds = array<i64: 1>, scalar_prefetch = 0 : i64, scratch_operands = 0 : i64, tpu.core_type = #tpu.core_type<tc>, window_params = [{pipeline_mode = #tpu.pipeline_mode<synchronous>, transform_indices = @transform_0, window_bounds = array<i64: 1, 32, 464>}, {transform_indices = @transform_1, window_bounds = array<i64: 464, 128>}, {pipeline_mode = #tpu.pipeline_mode<synchronous>, transform_indices = @transform_2, window_bounds = array<i64: 32, 1>}, {pipeline_mode = #tpu.pipeline_mode<synchronous>, transform_indices = @transform_3, window_bounds = array<i64: 32, 1>}, {transform_indices = @transform_4, window_bounds = array<i64: 32, 128>}]} {
    %c0 = arith.constant 0 : index
    %c0_0 = arith.constant 0 : index
    %c0_1 = arith.constant 0 : index
    %0 = vector.load %arg1[%c0, %c0_0, %c0_1] : memref<1x32x464xbf16, #tpu.memory_space<vmem>>, vector<1x32x464xbf16>
    %1 = vector.shape_cast %0 : vector<1x32x464xbf16> to vector<32x464xbf16>
    %c0_2 = arith.constant 0 : index
    %c0_3 = arith.constant 0 : index
    %2 = vector.load %arg2[%c0_2, %c0_3] : memref<464x128xbf16, #tpu.memory_space<vmem>>, vector<464x128xbf16>
    %cst = arith.constant dense<0.000000e+00> : vector<32x128xf32>
    %3 = tpu.matmul %1, %2, %cst {dimension_numbers = #tpu.dot_dimension_numbers<[1], [0], [0], [1], [0, 0, 1, 1], [], []>} : vector<32x464xbf16>, vector<464x128xbf16>, vector<32x128xf32> -> vector<32x128xf32>
    %c0_4 = arith.constant 0 : index
    %c0_5 = arith.constant 0 : index
    %4 = vector.load %arg3[%c0_4, %c0_5] : memref<32x1xf32, #tpu.memory_space<vmem>>, vector<32x1xf32>
    %5 = vector.broadcast %4 : vector<32x1xf32> to vector<32x128xf32>
    %6 = arith.mulf %3, %5 : vector<32x128xf32>
    %c0_6 = arith.constant 0 : index
    %c0_7 = arith.constant 0 : index
    %7 = vector.load %arg4[%c0_6, %c0_7] : memref<32x1xf32, #tpu.memory_space<vmem>>, vector<32x1xf32>
    %8 = vector.broadcast %7 : vector<32x1xf32> to vector<32x128xf32>
    %9 = arith.addf %6, %8 : vector<32x128xf32>
    %cst_8 = arith.constant 0.000000e+00 : f32
    %cst_9 = arith.constant 2.000000e+01 : f32
    %10 = vector.broadcast %cst_8 : f32 to vector<32x128xf32>
    %11 = arith.maximumf %10, %9 : vector<32x128xf32>
    %12 = vector.broadcast %cst_9 : f32 to vector<32x128xf32>
    %13 = arith.minimumf %12, %11 : vector<32x128xf32>
    %14 = arith.truncf %13 : vector<32x128xf32> to vector<32x128xbf16>
    %c0_10 = arith.constant 0 : index
    %c0_11 = arith.constant 0 : index
    %15 = vector.load %arg5[%c0_10, %c0_11] : memref<32x128xbf16, #tpu.memory_space<vmem>>, vector<32x128xbf16>
    tpu.vector_store %arg5[%c0_10, %c0_11], %14 {strides = array<i32>} : memref<32x128xbf16, #tpu.memory_space<vmem>>, vector<32x128xbf16>,
    return
  }
  func.func @transform_0(%arg0: i32) -> (i32, i32, i32) {
    %c0_i32 = arith.constant 0 : i32
    %c0_i32_0 = arith.constant 0 : i32
    %c0_i32_1 = arith.constant 0 : i32
    %c0_i32_2 = arith.constant 0 : i32
    return %c0_i32, %c0_i32_0, %c0_i32_1 : i32, i32, i32
  }
  func.func @transform_1(%arg0: i32) -> (i32, i32) {
    %c0_i32 = arith.constant 0 : i32
    %c0_i32_0 = arith.constant 0 : i32
    return %c0_i32, %arg0 : i32, i32
  }
  func.func @transform_2(%arg0: i32) -> (i32, i32) {
    %c0_i32 = arith.constant 0 : i32
    %c0_i32_0 = arith.constant 0 : i32
    %c0_i32_1 = arith.constant 0 : i32
    return %c0_i32, %c0_i32_0 : i32, i32
  }
  func.func @transform_3(%arg0: i32) -> (i32, i32) {
    %c0_i32 = arith.constant 0 : i32
    %c0_i32_0 = arith.constant 0 : i32
    %c0_i32_1 = arith.constant 0 : i32
    return %c0_i32, %c0_i32_0 : i32, i32
  }
  func.func @transform_4(%arg0: i32) -> (i32, i32) {
    %c0_i32 = arith.constant 0 : i32
    %c0_i32_0 = arith.constant 0 : i32
    return %c0_i32, %arg0 : i32, i32
  }
}

module attributes {stable_mosaic.version = 11 : i64} {
  func.func @_gemm_bn_htanh_acc_kernel(%arg0: i32, %arg1: i32, %arg2: memref<2x32x3712xbf16, #tpu.memory_space<vmem>>, %arg3: memref<3712x64xbf16, #tpu.memory_space<vmem>>, %arg4: memref<32x1xf32, #tpu.memory_space<vmem>>, %arg5: memref<32x1xf32, #tpu.memory_space<vmem>>, %arg6: memref<32x64xf32, #tpu.memory_space<vmem>>) attributes {dimension_semantics = [#tpu.dimension_semantics<parallel>, #tpu.dimension_semantics<arbitrary>], iteration_bounds = array<i64: 1, 2>, scalar_prefetch = 0 : i64, scratch_operands = 0 : i64, tpu.core_type = #tpu.core_type<tc>, window_params = [{pipeline_mode = #tpu.pipeline_mode<synchronous>, transform_indices = @transform_0, window_bounds = array<i64: 2, 32, 3712>}, {transform_indices = @transform_1, window_bounds = array<i64: 3712, 64>}, {pipeline_mode = #tpu.pipeline_mode<synchronous>, transform_indices = @transform_2, window_bounds = array<i64: 32, 1>}, {pipeline_mode = #tpu.pipeline_mode<synchronous>, transform_indices = @transform_3, window_bounds = array<i64: 32, 1>}, {transform_indices = @transform_4, window_bounds = array<i64: 32, 64>}]} {
    %c0_i32 = arith.constant 0 : i32
    %0 = arith.cmpi eq, %arg1, %c0_i32 : i32
    %1 = arith.extui %0 : i1 to i32
    %c0_i32_0 = arith.constant 0 : i32
    %2 = arith.cmpi ne, %1, %c0_i32_0 : i32
    scf.if %2 {
      %cst_9 = arith.constant 0.000000e+00 : f32
      %14 = vector.broadcast %cst_9 : f32 to vector<32x64xf32>
      %c0_10 = arith.constant 0 : index
      %c0_11 = arith.constant 0 : index
      %15 = vector.load %arg6[%c0_10, %c0_11] : memref<32x64xf32, #tpu.memory_space<vmem>>, vector<32x64xf32>
      tpu.vector_store %arg6[%c0_10, %c0_11], %14 {strides = array<i32>} : memref<32x64xf32, #tpu.memory_space<vmem>>, vector<32x64xf32>,
    } else {
    }
    %c0 = arith.constant 0 : index
    %c0_1 = arith.constant 0 : index
    %3 = vector.load %arg6[%c0, %c0_1] : memref<32x64xf32, #tpu.memory_space<vmem>>, vector<32x64xf32>
    %4 = arith.index_cast %arg1 : i32 to index
    %c0_2 = arith.constant 0 : index
    %c0_3 = arith.constant 0 : index
    %5 = vector.load %arg2[%4, %c0_2, %c0_3] : memref<2x32x3712xbf16, #tpu.memory_space<vmem>>, vector<1x32x3712xbf16>
    %6 = vector.shape_cast %5 : vector<1x32x3712xbf16> to vector<32x3712xbf16>
    %c0_4 = arith.constant 0 : index
    %c0_5 = arith.constant 0 : index
    %7 = vector.load %arg3[%c0_4, %c0_5] : memref<3712x64xbf16, #tpu.memory_space<vmem>>, vector<3712x64xbf16>
    %cst = arith.constant dense<0.000000e+00> : vector<32x64xf32>
    %8 = tpu.matmul %6, %7, %cst {dimension_numbers = #tpu.dot_dimension_numbers<[1], [0], [0], [1], [0, 0, 1, 1], [], []>} : vector<32x3712xbf16>, vector<3712x64xbf16>, vector<32x64xf32> -> vector<32x64xf32>
    %9 = arith.addf %3, %8 : vector<32x64xf32>
    %c0_6 = arith.constant 0 : index
    %c0_7 = arith.constant 0 : index
    %10 = vector.load %arg6[%c0_6, %c0_7] : memref<32x64xf32, #tpu.memory_space<vmem>>, vector<32x64xf32>
    tpu.vector_store %arg6[%c0_6, %c0_7], %9 {strides = array<i32>} : memref<32x64xf32, #tpu.memory_space<vmem>>, vector<32x64xf32>,
    %c1_i32 = arith.constant 1 : i32
    %11 = arith.cmpi eq, %arg1, %c1_i32 : i32
    %12 = arith.extui %11 : i1 to i32
    %c0_i32_8 = arith.constant 0 : i32
    %13 = arith.cmpi ne, %12, %c0_i32_8 : i32
    scf.if %13 {
      %c0_9 = arith.constant 0 : index
      %c0_10 = arith.constant 0 : index
      %14 = vector.load %arg6[%c0_9, %c0_10] : memref<32x64xf32, #tpu.memory_space<vmem>>, vector<32x64xf32>
      %c0_11 = arith.constant 0 : index
      %c0_12 = arith.constant 0 : index
      %15 = vector.load %arg4[%c0_11, %c0_12] : memref<32x1xf32, #tpu.memory_space<vmem>>, vector<32x1xf32>
      %16 = vector.broadcast %15 : vector<32x1xf32> to vector<32x64xf32>
      %17 = arith.mulf %14, %16 : vector<32x64xf32>
      %c0_13 = arith.constant 0 : index
      %c0_14 = arith.constant 0 : index
      %18 = vector.load %arg5[%c0_13, %c0_14] : memref<32x1xf32, #tpu.memory_space<vmem>>, vector<32x1xf32>
      %19 = vector.broadcast %18 : vector<32x1xf32> to vector<32x64xf32>
      %20 = arith.addf %17, %19 : vector<32x64xf32>
      %cst_15 = arith.constant 0.000000e+00 : f32
      %cst_16 = arith.constant 2.000000e+01 : f32
      %21 = vector.broadcast %cst_15 : f32 to vector<32x64xf32>
      %22 = arith.maximumf %21, %20 : vector<32x64xf32>
      %23 = vector.broadcast %cst_16 : f32 to vector<32x64xf32>
      %24 = arith.minimumf %23, %22 : vector<32x64xf32>
      %c0_17 = arith.constant 0 : index
      %c0_18 = arith.constant 0 : index
      %25 = vector.load %arg6[%c0_17, %c0_18] : memref<32x64xf32, #tpu.memory_space<vmem>>, vector<32x64xf32>
      tpu.vector_store %arg6[%c0_17, %c0_18], %24 {strides = array<i32>} : memref<32x64xf32, #tpu.memory_space<vmem>>, vector<32x64xf32>,
    } else {
    }
    return
  }
  func.func @transform_0(%arg0: i32, %arg1: i32) -> (i32, i32, i32) {
    %c0_i32 = arith.constant 0 : i32
    %c0_i32_0 = arith.constant 0 : i32
    %c0_i32_1 = arith.constant 0 : i32
    %c0_i32_2 = arith.constant 0 : i32
    return %c0_i32, %c0_i32_0, %c0_i32_1 : i32, i32, i32
  }
  func.func @transform_1(%arg0: i32, %arg1: i32) -> (i32, i32) {
    %c0_i32 = arith.constant 0 : i32
    return %arg1, %arg0 : i32, i32
  }
  func.func @transform_2(%arg0: i32, %arg1: i32) -> (i32, i32) {
    %c0_i32 = arith.constant 0 : i32
    %c0_i32_0 = arith.constant 0 : i32
    %c0_i32_1 = arith.constant 0 : i32
    return %c0_i32, %c0_i32_0 : i32, i32
  }
  func.func @transform_3(%arg0: i32, %arg1: i32) -> (i32, i32) {
    %c0_i32 = arith.constant 0 : i32
    %c0_i32_0 = arith.constant 0 : i32
    %c0_i32_1 = arith.constant 0 : i32
    return %c0_i32, %c0_i32_0 : i32, i32
  }
  func.func @transform_4(%arg0: i32, %arg1: i32) -> (i32, i32) {
    %c0_i32 = arith.constant 0 : i32
    %c0_i32_0 = arith.constant 0 : i32
    return %c0_i32, %arg0 : i32, i32
  }
}

</mosaic_0001>

<llo_original>
// kernel: cnn_forward.2
$region0: #{cnn_forward.2}
  #allocation0 [shape = 'u32[]', space=smem, size = 0x4, offset = 0x4, fixed_abs, tag = 'smem constant byte address 0x4 - core index']
  #allocation1 [shape = 'u32[144,128]{1,0:T(1,128)}', space=vmem, size = 0x12000, scoped, tag = 'internal scratch']
  %s0 = inlined_call_operand.vmem [shape: bf16[1,32,464], index: 0, kind: input, shape index: {}]
  %s1 = inlined_call_operand.vmem [shape: bf16[464,128], index: 1, kind: input, shape index: {}]
  %s2 = inlined_call_operand.vmem [shape: f32[32,1], index: 2, kind: input, shape index: {}]
  %s3 = inlined_call_operand.vmem [shape: f32[32,1], index: 3, kind: input, shape index: {}]
  %s4 = inlined_call_operand.vmem [shape: bf16[32,128], index: 4, kind: output, shape index: {}]
  %s5 = sld [smem:[#allocation0]]
  $region26: #{cnn_forward.2} parent=0
    _
  %s7 = ssub.s32 1, %s5
  %s8 = scalar_select 0, %s7, %s5
  // Predicated region
  $region2: #{cnn_forward.2} parent=0 // pred_check
    _
  $region3: #{cnn_forward.2} parent=0 // pred_check_branch
    %10 = sbr.rel (0) target = $region5
  $region4: #{cnn_forward.2} parent=0 // pred_region
    _
  $region5: #{cnn_forward.2} parent=0 // pred_fallthru
    _
  // Predicated region
  $region6: #{cnn_forward.2} parent=0 // pred_check
    _
  $region7: #{cnn_forward.2} parent=0 // pred_check_branch
    %12 = sbr.rel (0) target = $region9
  $region8: #{cnn_forward.2} parent=0 // pred_region
    _
  $region9: #{cnn_forward.2} parent=0 // pred_fallthru
    _
  // Predicated region
  $region10: #{cnn_forward.2} parent=0 // pred_check
    _
  $region11: #{cnn_forward.2} parent=0 // pred_check_branch
    %14 = sbr.rel (0) target = $region13
  $region12: #{cnn_forward.2} parent=0 // pred_region
    _
  $region13: #{cnn_forward.2} parent=0 // pred_fallthru
    _
  // Predicated region
  $region14: #{cnn_forward.2} parent=0 // pred_check
    _
  $region15: #{cnn_forward.2} parent=0 // pred_check_branch
    %16 = sbr.rel (0) target = $region17
  $region16: #{cnn_forward.2} parent=0 // pred_region
    _
  $region17: #{cnn_forward.2} parent=0 // pred_fallthru
    _
  %v18 = vld [vmem:[%s0] sm:$0xff]
  %v19 = vld [vmem:[%s0 + $0x8] sm:$0xff]
  %v20 = vld [vmem:[%s0 + $0x10] sm:$0xff]
  %v21 = vld [vmem:[%s0 + $0x18] sm:$0xff]
  %v22 = vld [vmem:[%s0 + $0x20] sm:$0xff]
  %v23 = vld [vmem:[%s0 + $0x28] sm:$0xff]
  %v24 = vld [vmem:[%s0 + $0x30] sm:$0xff]
  %v25 = vld [vmem:[%s0 + $0x38] sm:$0xff]
  %v26 = vld [vmem:[%s1] sm:$0xf]
  %v27 = vld [vmem:[%s1 + $0x4] sm:$0xf]
  %v28 = vld [vmem:[%s1 + $0x8] sm:$0xf]
  %v29 = vld [vmem:[%s1 + $0xc] sm:$0xf]
  %v30 = vld [vmem:[%s1 + $0x10] sm:$0xf]
  %v31 = vld [vmem:[%s1 + $0x14] sm:$0xf]
  %v32 = vld [vmem:[%s1 + $0x18] sm:$0xf]
  %v33 = vld [vmem:[%s1 + $0x1c] sm:$0xf]
  %v34 = vld [vmem:[%s1 + $0x20] sm:$0xf]
  %v35 = vld [vmem:[%s1 + $0x24] sm:$0xf]
  %v36 = vld [vmem:[%s1 + $0x28] sm:$0xf]
  %v37 = vld [vmem:[%s1 + $0x2c] sm:$0xf]
  %v38 = vld [vmem:[%s1 + $0x30] sm:$0xf]
  %v39 = vld [vmem:[%s1 + $0x34] sm:$0xf]
  %v40 = vld [vmem:[%s1 + $0x38] sm:$0xf]
  %v41 = vld [vmem:[%s1 + $0x3c] sm:$0xf]
  %v42 = vld [vmem:[%s1 + $0x40] sm:$0xf]
  %v43 = vld [vmem:[%s1 + $0x44] sm:$0xf]
  %v44 = vld [vmem:[%s1 + $0x48] sm:$0xf]
  %v45 = vld [vmem:[%s1 + $0x4c] sm:$0xf]
  %v46 = vld [vmem:[%s1 + $0x50] sm:$0xf]
  %v47 = vld [vmem:[%s1 + $0x54] sm:$0xf]
  %v48 = vld [vmem:[%s1 + $0x58] sm:$0xf]
  %v49 = vld [vmem:[%s1 + $0x5c] sm:$0xf]
  %v50 = vld [vmem:[%s1 + $0x60] sm:$0xf]
  %v51 = vld [vmem:[%s1 + $0x64] sm:$0xf]
  %v52 = vld [vmem:[%s1 + $0x68] sm:$0xf]
  %v53 = vld [vmem:[%s1 + $0x6c] sm:$0xf]
  %v54 = vld [vmem:[%s1 + $0x70] sm:$0xf]
  %v55 = vld [vmem:[%s1 + $0x74] sm:$0xf]
  %v56 = vld [vmem:[%s1 + $0x78] sm:$0xf]
  %v57 = vld [vmem:[%s1 + $0x7c] sm:$0xf]
  %v58 = vld [vmem:[%s1 + $0x80] sm:$0xf]
  %v59 = vld [vmem:[%s1 + $0x84] sm:$0xf]
  %v60 = vld [vmem:[%s1 + $0x88] sm:$0xf]
  %v61 = vld [vmem:[%s1 + $0x8c] sm:$0xf]
  %v62 = vld [vmem:[%s1 + $0x90] sm:$0xf]
  %v63 = vld [vmem:[%s1 + $0x94] sm:$0xf]
  %v64 = vld [vmem:[%s1 + $0x98] sm:$0xf]
  %v65 = vld [vmem:[%s1 + $0x9c] sm:$0xf]
  %v66 = vld [vmem:[%s1 + $0xa0] sm:$0xf]
  %v67 = vld [vmem:[%s1 + $0xa4] sm:$0xf]
  %v68 = vld [vmem:[%s1 + $0xa8] sm:$0xf]
  %v69 = vld [vmem:[%s1 + $0xac] sm:$0xf]
  %v70 = vld [vmem:[%s1 + $0xb0] sm:$0xf]
  %v71 = vld [vmem:[%s1 + $0xb4] sm:$0xf]
  %v72 = vld [vmem:[%s1 + $0xb8] sm:$0xf]
  %v73 = vld [vmem:[%s1 + $0xbc] sm:$0xf]
  %v74 = vld [vmem:[%s1 + $0xc0] sm:$0xf]
  %v75 = vld [vmem:[%s1 + $0xc4] sm:$0xf]
  %v76 = vld [vmem:[%s1 + $0xc8] sm:$0xf]
  %v77 = vld [vmem:[%s1 + $0xcc] sm:$0xf]
  %v78 = vld [vmem:[%s1 + $0xd0] sm:$0xf]
  %v79 = vld [vmem:[%s1 + $0xd4] sm:$0xf]
  %v80 = vld [vmem:[%s1 + $0xd8] sm:$0xf]
  %v81 = vld [vmem:[%s1 + $0xdc] sm:$0xf]
  %v82 = vld [vmem:[%s1 + $0xe0] sm:$0xf]
  %v83 = vld [vmem:[%s1 + $0xe4] sm:$0xf]
  %v92 = vunpack.c.l.b16 %v18
  %v93 = vunpack.c.h.b16 %v18
  %v94 = vunpack.c.l.b16 %v19
  %v95 = vunpack.c.h.b16 %v19
  %v96 = vunpack.c.l.b16 %v20
  %v97 = vunpack.c.h.b16 %v20
  %v98 = vunpack.c.l.b16 %v21
  %v99 = vunpack.c.h.b16 %v21
  %v100 = vunpack.c.l.b16 %v22
  %v101 = vunpack.c.h.b16 %v22
  %v102 = vunpack.c.l.b16 %v23
  %v103 = vunpack.c.h.b16 %v23
  %v104 = vunpack.c.l.b16 %v24
  %v105 = vunpack.c.h.b16 %v24
  %v106 = vunpack.c.l.b16 %v25
  %v107 = vunpack.c.h.b16 %v25
  %v108 = vpack.c.b16 %v96, %v92
  %v109 = vpack.c.b16 %v97, %v93
  %v110 = vpack.c.b16 %v98, %v94
  %v111 = vpack.c.b16 %v99, %v95
  %v112 = vpack.c.b16 %v104, %v100
  %v113 = vpack.c.b16 %v105, %v101
  %v114 = vpack.c.b16 %v106, %v102
  %v115 = vpack.c.b16 %v107, %v103
  %v180 = vunpack.c.l.b16 %v26
  %v181 = vunpack.c.l.b16 %v27
  %v182 = vunpack.c.l.b16 %v28
  %v183 = vunpack.c.l.b16 %v29
  %v184 = vunpack.c.l.b16 %v30
  %v185 = vunpack.c.l.b16 %v31
  %v186 = vunpack.c.l.b16 %v32
  %v187 = vunpack.c.l.b16 %v33
  %v188 = vunpack.c.l.b16 %v34
  %v189 = vunpack.c.l.b16 %v35
  %v190 = vunpack.c.l.b16 %v36
  %v191 = vunpack.c.l.b16 %v37
  %v192 = vunpack.c.l.b16 %v38
  %v193 = vunpack.c.l.b16 %v39
  %v194 = vunpack.c.l.b16 %v40
  %v195 = vunpack.c.l.b16 %v41
  %v196 = vunpack.c.l.b16 %v42
  %v197 = vunpack.c.l.b16 %v43
  %v198 = vunpack.c.l.b16 %v44
  %v199 = vunpack.c.l.b16 %v45
  %v200 = vunpack.c.l.b16 %v46
  %v201 = vunpack.c.l.b16 %v47
  %v202 = vunpack.c.l.b16 %v48
  %v203 = vunpack.c.l.b16 %v49
  %v204 = vunpack.c.l.b16 %v50
  %v205 = vunpack.c.l.b16 %v51
  %v206 = vunpack.c.l.b16 %v52
  %v207 = vunpack.c.l.b16 %v53
  %v208 = vunpack.c.l.b16 %v54
  %v209 = vunpack.c.l.b16 %v55
  %v210 = vunpack.c.l.b16 %v56
  %v211 = vunpack.c.l.b16 %v57
  %v212 = vunpack.c.l.b16 %v58
  %v213 = vunpack.c.l.b16 %v59
  %v214 = vunpack.c.l.b16 %v60
  %v215 = vunpack.c.l.b16 %v61
  %v216 = vunpack.c.l.b16 %v62
  %v217 = vunpack.c.l.b16 %v63
  %v218 = vunpack.c.l.b16 %v64
  %v219 = vunpack.c.l.b16 %v65
  %v220 = vunpack.c.l.b16 %v66
  %v221 = vunpack.c.l.b16 %v67
  %v222 = vunpack.c.l.b16 %v68
  %v223 = vunpack.c.l.b16 %v69
  %v224 = vunpack.c.l.b16 %v70
  %v225 = vunpack.c.l.b16 %v71
  %v226 = vunpack.c.l.b16 %v72
  %v227 = vunpack.c.l.b16 %v73
  %v228 = vunpack.c.l.b16 %v74
  %v229 = vunpack.c.l.b16 %v75
  %v230 = vunpack.c.l.b16 %v76
  %v231 = vunpack.c.l.b16 %v77
  %v232 = vunpack.c.l.b16 %v78
  %v233 = vunpack.c.l.b16 %v79
  %v234 = vunpack.c.l.b16 %v80
  %v235 = vunpack.c.l.b16 %v81
  %v236 = vunpack.c.l.b16 %v82
  %v237 = vunpack.c.l.b16 %v83
  %v238 = vpack.c.b16 %v181, %v180
  %v239 = vpack.c.b16 %v183, %v182
  %v240 = vpack.c.b16 %v185, %v184
  %v241 = vpack.c.b16 %v187, %v186
  %v242 = vpack.c.b16 %v189, %v188
  %v243 = vpack.c.b16 %v191, %v190
  %v244 = vpack.c.b16 %v193, %v192
  %v245 = vpack.c.b16 %v195, %v194
  %v246 = vpack.c.b16 %v197, %v196
  %v247 = vpack.c.b16 %v199, %v198
  %v248 = vpack.c.b16 %v201, %v200
  %v249 = vpack.c.b16 %v203, %v202
  %v250 = vpack.c.b16 %v205, %v204
  %v251 = vpack.c.b16 %v207, %v206
  %v252 = vpack.c.b16 %v209, %v208
  %v253 = vpack.c.b16 %v211, %v210
  %v254 = vpack.c.b16 %v213, %v212
  %v255 = vpack.c.b16 %v215, %v214
  %v256 = vpack.c.b16 %v217, %v216
  %v257 = vpack.c.b16 %v219, %v218
  %v258 = vpack.c.b16 %v221, %v220
  %v259 = vpack.c.b16 %v223, %v222
  %v260 = vpack.c.b16 %v225, %v224
  %v261 = vpack.c.b16 %v227, %v226
  %v262 = vpack.c.b16 %v229, %v228
  %v263 = vpack.c.b16 %v231, %v230
  %v264 = vpack.c.b16 %v233, %v232
  %v265 = vpack.c.b16 %v235, %v234
  %v266 = vpack.c.b16 %v237, %v236
  %vm296 = vcmask 654336
  %v298 = vsel %vm296, %v111, 0
  %v301 = vsel %vm296, %v115, 0
  %303 = vmatprep.subr.bf16.mxu0 0
  %304 = vmatpush1.bf16.msra.mxu0 %v238
  %305 = vmatprep.subr.bf16.mxu0 0
  %306 = vmatpush1.bf16.msra.mxu0 %v239
  %307 = vmatprep.subr.bf16.mxu0 0
  %308 = vmatpush1.bf16.msra.mxu0 %v240
  %309 = vmatprep.subr.bf16.mxu0 0
  %310 = vmatpush1.bf16.msra.mxu0 %v241
  %311 = vmatprep.subr.bf16.mxu0 0
  %312 = vmatpush1.bf16.msra.mxu0 %v242
  %313 = vmatprep.subr.bf16.mxu0 0
  %314 = vmatpush1.bf16.msra.mxu0 %v243
  %315 = vmatprep.subr.bf16.mxu0 0
  %316 = vmatpush1.bf16.msra.mxu0 %v244
  %317 = vmatprep.subr.bf16.mxu0 0
  %318 = vmatpush1.bf16.msra.mxu0 %v245
  %319 = vmatprep.subr.bf16.mxu0 0
  %320 = vmatpush1.bf16.msra.mxu0 %v246
  %321 = vmatprep.subr.bf16.mxu0 0
  %322 = vmatpush1.bf16.msra.mxu0 %v247
  %323 = vmatprep.subr.bf16.mxu0 0
  %324 = vmatpush1.bf16.msra.mxu0 %v248
  %325 = vmatprep.subr.bf16.mxu0 0
  %326 = vmatpush1.bf16.msra.mxu0 %v249
  %327 = vmatprep.subr.bf16.mxu0 0
  %328 = vmatpush1.bf16.msra.mxu0 %v250
  %329 = vmatprep.subr.bf16.mxu0 0
  %330 = vmatpush1.bf16.msra.mxu0 %v251
  %331 = vmatprep.subr.bf16.mxu0 0
  %332 = vmatpush1.bf16.msra.mxu0 %v252
  %333 = vmatprep.subr.bf16.mxu0 0
  %334 = vmatpush1.bf16.msra.mxu0 %v253
  %335 = vmatprep.mubr.bf16.mxu0 %v109
  %336 = vmatmul.mubr.bf16.gmra.mrb[0].mxu0 %v108
  %v337 = vpop.f32.mrb[0].mxu0
  %v338 = vadd.f32 0.0, %v337
  %v339 = vpop.f32.mrb[0].mxu0
  %v340 = vpop.f32.mrb[0].mxu0
  %v341 = vadd.f32 0.0, %v340
  %v342 = vpop.f32.mrb[0].mxu0
  %343 = vmatprep.mubr.bf16.mxu0 %v113
  %344 = vmatmul.mubr.bf16.gmra.mrb[0].mxu0 %v112
  %v345 = vpop.f32.mrb[0].mxu0
  %v346 = vadd.f32 0.0, %v345
  %v347 = vpop.f32.mrb[0].mxu0
  %v348 = vpop.f32.mrb[0].mxu0
  %v349 = vadd.f32 0.0, %v348
  %v350 = vpop.f32.mrb[0].mxu0
  %351 = vdwg.mxu0
  %352 = vmatprep.subr.bf16.mxu0 0
  %353 = vmatpush1.bf16.msra.mxu0 %v254
  %354 = vmatprep.subr.bf16.mxu0 0
  %355 = vmatpush1.bf16.msra.mxu0 %v255
  %356 = vmatprep.subr.bf16.mxu0 0
  %357 = vmatpush1.bf16.msra.mxu0 %v256
  %358 = vmatprep.subr.bf16.mxu0 0
  %359 = vmatpush1.bf16.msra.mxu0 %v257
  %360 = vmatprep.subr.bf16.mxu0 0
  %361 = vmatpush1.bf16.msra.mxu0 %v258
  %362 = vmatprep.subr.bf16.mxu0 0
  %363 = vmatpush1.bf16.msra.mxu0 %v259
  %364 = vmatprep.subr.bf16.mxu0 0
  %365 = vmatpush1.bf16.msra.mxu0 %v260
  %366 = vmatprep.subr.bf16.mxu0 0
  %367 = vmatpush1.bf16.msra.mxu0 %v261
  %368 = vmatprep.subr.bf16.mxu0 0
  %369 = vmatpush1.bf16.msra.mxu0 %v262
  %370 = vmatprep.subr.bf16.mxu0 0
  %371 = vmatpush1.bf16.msra.mxu0 %v263
  %372 = vmatprep.subr.bf16.mxu0 0
  %373 = vmatpush1.bf16.msra.mxu0 %v264
  %374 = vmatprep.subr.bf16.mxu0 0
  %375 = vmatpush1.bf16.msra.mxu0 %v265
  %376 = vmatprep.subr.bf16.mxu0 0
  %377 = vmatpush1.bf16.msra.mxu0 %v266
  %378 = vmatprep.subr.bf16.mxu0 0
  %379 = vmatpush1.bf16.msra.mxu0 0
  %380 = vmatprep.subr.bf16.mxu0 0
  %381 = vmatpush1.bf16.msra.mxu0 0
  %382 = vmatprep.subr.bf16.mxu0 0
  %383 = vmatpush1.bf16.msra.mxu0 0
  %384 = vmatprep.mubr.bf16.mxu0 %v298
  %385 = vmatmul.mubr.bf16.gmra.mrb[0].mxu0 %v110
  %v386 = vpop.f32.mrb[0].mxu0
  %v387 = vadd.f32 %v338, %v386
  %v388 = vpop.f32.mrb[0].mxu0
  %v389 = vpop.f32.mrb[0].mxu0
  %v390 = vadd.f32 %v341, %v389
  %v391 = vpop.f32.mrb[0].mxu0
  %392 = vmatprep.mubr.bf16.mxu0 %v301
  %393 = vmatmul.mubr.bf16.gmra.mrb[0].mxu0 %v114
  %v394 = vpop.f32.mrb[0].mxu0
  %v395 = vadd.f32 %v346, %v394
  %v396 = vpop.f32.mrb[0].mxu0
  %v397 = vpop.f32.mrb[0].mxu0
  %v398 = vadd.f32 %v349, %v397
  %v399 = vpop.f32.mrb[0].mxu0
  %400 = vdwg.mxu0
  %v401 = vld [vmem:[%s2] sm:$0xff]
  %v402 = vld [vmem:[%s2 + $0x8] sm:$0xff]
  %v403 = vld [vmem:[%s2 + $0x10] sm:$0xff]
  %v404 = vld [vmem:[%s2 + $0x18] sm:$0xff]
  %406 = vset.pattern.permute.xlu0 0
  %407 = vperm.xlu0 %406, %v401
  %v408 = vpop.permute.xlu0 %407
  %411 = vset.pattern.permute.xlu0 0
  %412 = vperm.xlu0 %411, %v402
  %v413 = vpop.permute.xlu0 %412
  %416 = vset.pattern.permute.xlu0 0
  %417 = vperm.xlu0 %416, %v403
  %v418 = vpop.permute.xlu0 %417
  %421 = vset.pattern.permute.xlu0 0
  %422 = vperm.xlu0 %421, %v404
  %v423 = vpop.permute.xlu0 %422
  %v425 = vmul.f32 %v387, %v408
  %v426 = vmul.f32 %v390, %v413
  %v427 = vmul.f32 %v395, %v418
  %v428 = vmul.f32 %v398, %v423
  %v429 = vld [vmem:[%s3] sm:$0xff]
  %v430 = vld [vmem:[%s3 + $0x8] sm:$0xff]
  %v431 = vld [vmem:[%s3 + $0x10] sm:$0xff]
  %v432 = vld [vmem:[%s3 + $0x18] sm:$0xff]
  %434 = vset.pattern.permute.xlu0 0
  %435 = vperm.xlu0 %434, %v429
  %v436 = vpop.permute.xlu0 %435
  %439 = vset.pattern.permute.xlu0 0
  %440 = vperm.xlu0 %439, %v430
  %v441 = vpop.permute.xlu0 %440
  %444 = vset.pattern.permute.xlu0 0
  %445 = vperm.xlu0 %444, %v431
  %v446 = vpop.permute.xlu0 %445
  %449 = vset.pattern.permute.xlu0 0
  %450 = vperm.xlu0 %449, %v432
  %v451 = vpop.permute.xlu0 %450
  %v453 = vadd.f32 %v425, %v436
  %v454 = vadd.f32 %v426, %v441
  %v455 = vadd.f32 %v427, %v446
  %v456 = vadd.f32 %v428, %v451
  %v457 = vmax.f32 %v453, 0.0
  %v458 = vmax.f32 %v454, 0.0
  %v459 = vmax.f32 %v455, 0.0
  %v460 = vmax.f32 %v456, 0.0
  %v461 = vmin.f32 %v457, 20.0
  %v462 = vmin.f32 %v458, 20.0
  %v463 = vmin.f32 %v459, 20.0
  %v464 = vmin.f32 %v460, 20.0
  %v465 = vpack.c.bf16 %v462, %v461
  %v466 = vpack.c.bf16 %v464, %v463
  %v469 = vunpack.c.l.b16 %v465
  %v470 = vunpack.c.h.b16 %v465
  %v471 = vunpack.c.l.b16 %v466
  %v472 = vunpack.c.h.b16 %v466
  %v473 = vpack.c.b16 %v469, %v469
  %v474 = vpack.c.b16 %v470, %v470
  %v475 = vpack.c.b16 %v471, %v471
  %v476 = vpack.c.b16 %v472, %v472
  %481 = vst [vmem:[%s4] sm:$0xf] %v473
  %482 = vst [vmem:[%s4 + $0x4] sm:$0xf] %v474
  %483 = vst [vmem:[%s4 + $0x8] sm:$0xf] %v475
  %484 = vst [vmem:[%s4 + $0xc] sm:$0xf] %v476
  // Predicated region
  $region18: #{cnn_forward.2} parent=0 // pred_check
    _
  $region19: #{cnn_forward.2} parent=0 // pred_check_branch
    %486 = sbr.rel (0) target = $region21
  $region20: #{cnn_forward.2} parent=0 // pred_region
    _
  $region21: #{cnn_forward.2} parent=0 // pred_fallthru
    _
  // Predicated region
  $region22: #{cnn_forward.2} parent=0 // pred_check
    _
  $region23: #{cnn_forward.2} parent=0 // pred_check_branch
    %488 = sbr.rel (0) target = $region25
  $region24: #{cnn_forward.2} parent=0 // pred_region
    _
  $region25: #{cnn_forward.2} parent=0 // pred_fallthru
    _

// kernel: cnn_forward.3
$region0: #{cnn_forward.3}
  #allocation0 [shape = 'u32[]', space=smem, size = 0x4, offset = 0x4, fixed_abs, tag = 'smem constant byte address 0x4 - core index']
  #allocation1 [shape = 'u32[144,128]{1,0:T(1,128)}', space=vmem, size = 0x12000, scoped, tag = 'internal scratch']
  %s0 = inlined_call_operand.vmem [shape: bf16[2,32,3712], index: 0, kind: input, shape index: {}]
  %s1 = inlined_call_operand.vmem [shape: bf16[7424,64], index: 1, kind: input, shape index: {}]
  %s2 = inlined_call_operand.vmem [shape: f32[32,1], index: 2, kind: input, shape index: {}]
  %s3 = inlined_call_operand.vmem [shape: f32[32,1], index: 3, kind: input, shape index: {}]
  %s4 = inlined_call_operand.vmem [shape: f32[32,64], index: 4, kind: output, shape index: {}]
  %s5 = sld [smem:[#allocation0]]
  $region57: #{cnn_forward.3} parent=0
    _
  %s7 = ssub.s32 1, %s5
  %s8 = scalar_select 0, %s7, %s5
  loop: start=0, step=1, limit=4
  $region2: #{cnn_forward.3} parent=0 // loop_pre_header
    _
  $region3: #{cnn_forward.3} parent=0 // loop_header
    %s10 = sphi 0, %s14
    %p11 = scmp.ge.s32.totalorder %s10, 4
    %s17 = sphi 0, %s29
    %s18 = sphi 0, %s25
    %s19 = sphi 0, %s17
    %s20 = sphi 0, %s18
    %s21 = sphi 0, %s19
    %s22 = sphi 0, %s20
    %s30 = sphi 0, %s30
    %s32 = sphi 0, %s30
    %s33 = sphi 0, %s32
    %s47 = sphi 0, %s33
    %s55 = sphi 0, %s57
    %s58 = sphi 0, %s55
    %s59 = sphi 0, %s58
    %s75 = sphi 0, %s59
    %s79 = sphi 0, %s79
    %s81 = sphi 0, %s79
    %s82 = sphi 0, %s81
    %s96 = sphi 0, %s82
    %s100 = sphi 0, %s100
    %s102 = sphi 0, %s100
    %s103 = sphi 0, %s102
    %s117 = sphi 0, %s103
    %s123 = sphi 0, %s125
    %s126 = sphi 0, %s123
    %s127 = sphi 0, %s126
    %s143 = sphi 0, %s127
  $region4: #{cnn_forward.3} parent=0 // loop_header_branch
    %13 = sbr.rel (%p11) target = $region8
  $region5: #{cnn_forward.3} parent=0 // loop_body
    %s15 = ssub.s32 %s10, 1
    %s16 = ssub.s32 %s10, 2
    %s23 = sadd.s32 1, %s18
    %p24 = scmp.ge.s32.totalorder %s23, 2
    %s25 = scalar_select %p24, 0, %s23
    %s26 = sadd.s32 1, %s17
    %s27 = scalar_select %p24, %s26, %s17
    %p28 = scmp.ge.s32.totalorder %s27, 1
    %s29 = scalar_select %p28, 0, %s27
    %s31 = sadd.s32 %s30, 1
    %p34 = scmp.eq.s32.totalorder %s10, 1
    %p35 = scmp.ne.s32.totalorder %s30, %s32
    %p36 = scmp.eq.s32.totalorder %s10, 0
    %p37 = por %p35, %p36
    %p38 = scmp.ne.s32.totalorder %s30, %s32
    %p39 = scmp.eq.s32.totalorder %s15, 1
    %p40 = por %p38, %p39
    %p41 = scmp.ne.s32.totalorder %s32, %s33
    %p42 = scmp.eq.s32.totalorder %s15, 0
    %p43 = por %p41, %p42
    %p44 = scmp.ne.s32.totalorder %s32, %s33
    %p45 = scmp.eq.s32.totalorder %s16, 1
    %p46 = por %p44, %p45
    %p48 = scmp.ne.s32.totalorder %s33, %s47
    %p49 = scmp.eq.s32.totalorder %s16, 0
    %p50 = por %p48, %p49
    %s51 = ssub.s32 %s18, %s25
    %s52 = ssub.s32 %s17, %s29
    %s53 = sor.u32 %s51, %s52
    %p54 = scmp.eq.s32.totalorder %s53, 0
    %s56 = sadd.s32 %s55, 1
    %s57 = scalar_select %p54, %s55, %s56
    %p60 = pneg %p54
    %p61 = scmp.eq.s32.totalorder %s10, 1
    %p62 = por %p60, %p61
    %p63 = scmp.ne.s32.totalorder %s55, %s58
    %p64 = scmp.eq.s32.totalorder %s10, 0
    %p65 = por %p63, %p64
    %p66 = scmp.ne.s32.totalorder %s55, %s58
    %p67 = scmp.eq.s32.totalorder %s15, 1
    %p68 = por %p66, %p67
    %p69 = scmp.ne.s32.totalorder %s58, %s59
    %p70 = scmp.eq.s32.totalorder %s15, 0
    %p71 = por %p69, %p70
    %p72 = scmp.ne.s32.totalorder %s58, %s59
    %p73 = scmp.eq.s32.totalorder %s16, 1
    %p74 = por %p72, %p73
    %p76 = scmp.ne.s32.totalorder %s59, %s75
    %p77 = scmp.eq.s32.totalorder %s16, 0
    %p78 = por %p76, %p77
    %s80 = sadd.s32 %s79, 1
    %p83 = scmp.eq.s32.totalorder %s10, 1
    %p84 = scmp.ne.s32.totalorder %s79, %s81
    %p85 = scmp.eq.s32.totalorder %s10, 0
    %p86 = por %p84, %p85
    %p87 = scmp.ne.s32.totalorder %s79, %s81
    %p88 = scmp.eq.s32.totalorder %s15, 1
    %p89 = por %p87, %p88
    %p90 = scmp.ne.s32.totalorder %s81, %s82
    %p91 = scmp.eq.s32.totalorder %s15, 0
    %p92 = por %p90, %p91
    %p93 = scmp.ne.s32.totalorder %s81, %s82
    %p94 = scmp.eq.s32.totalorder %s16, 1
    %p95 = por %p93, %p94
    %p97 = scmp.ne.s32.totalorder %s82, %s96
    %p98 = scmp.eq.s32.totalorder %s16, 0
    %p99 = por %p97, %p98
    %s101 = sadd.s32 %s100, 1
    %p104 = scmp.eq.s32.totalorder %s10, 1
    %p105 = scmp.ne.s32.totalorder %s100, %s102
    %p106 = scmp.eq.s32.totalorder %s10, 0
    %p107 = por %p105, %p106
    %p108 = scmp.ne.s32.totalorder %s100, %s102
    %p109 = scmp.eq.s32.totalorder %s15, 1
    %p110 = por %p108, %p109
    %p111 = scmp.ne.s32.totalorder %s102, %s103
    %p112 = scmp.eq.s32.totalorder %s15, 0
    %p113 = por %p111, %p112
    %p114 = scmp.ne.s32.totalorder %s102, %s103
    %p115 = scmp.eq.s32.totalorder %s16, 1
    %p116 = por %p114, %p115
    %p118 = scmp.ne.s32.totalorder %s103, %s117
    %p119 = scmp.eq.s32.totalorder %s16, 0
    %p120 = por %p118, %p119
    %s121 = ssub.s32 %s17, %s29
    %p122 = scmp.eq.s32.totalorder %s121, 0
    %s124 = sadd.s32 %s123, 1
    %s125 = scalar_select %p122, %s123, %s124
    %p128 = pneg %p122
    %p129 = scmp.eq.s32.totalorder %s10, 1
    %p130 = por %p128, %p129
    %p131 = scmp.ne.s32.totalorder %s123, %s126
    %p132 = scmp.eq.s32.totalorder %s10, 0
    %p133 = por %p131, %p132
    %p134 = scmp.ne.s32.totalorder %s123, %s126
    %p135 = scmp.eq.s32.totalorder %s15, 1
    %p136 = por %p134, %p135
    %p137 = scmp.ne.s32.totalorder %s126, %s127
    %p138 = scmp.eq.s32.totalorder %s15, 0
    %p139 = por %p137, %p138
    %p140 = scmp.ne.s32.totalorder %s126, %s127
    %p141 = scmp.eq.s32.totalorder %s16, 1
    %p142 = por %p140, %p141
    %p144 = scmp.ne.s32.totalorder %s127, %s143
    %p145 = scmp.eq.s32.totalorder %s16, 0
    %p146 = por %p144, %p145
    %p147 = scmp.le.s32.totalorder 1, %s10
    %p148 = scmp.lt.s32.totalorder %s10, 3
    %p149 = pnand %p147, %p148
    %p150 = pneg %p149
    // Predicated region
    $region9: #{cnn_forward.3} parent=5 // pred_check
      _
    $region10: #{cnn_forward.3} parent=5 // pred_check_branch
      %152 = sbr.rel (%p149) target = $region12
    $region11: #{cnn_forward.3} parent=5 // pred_region
      %s153 = ssub.s32 %s10, 1
      // Predicated region
      $region13: #{cnn_forward.3} parent=11 // pred_check
        %p154 = pneg %p43
      $region14: #{cnn_forward.3} parent=11 // pred_check_branch
        %156 = sbr.rel (%p154) target = $region16
      $region15: #{cnn_forward.3} parent=11 // pred_region
        _
      $region16: #{cnn_forward.3} parent=11 // pred_fallthru
        _
      // Predicated region
      $region17: #{cnn_forward.3} parent=11 // pred_check
        %p157 = pneg %p92
      $region18: #{cnn_forward.3} parent=11 // pred_check_branch
        %159 = sbr.rel (%p157) target = $region20
      $region19: #{cnn_forward.3} parent=11 // pred_region
        _
      $region20: #{cnn_forward.3} parent=11 // pred_fallthru
        _
      // Predicated region
      $region21: #{cnn_forward.3} parent=11 // pred_check
        %p160 = pneg %p113
      $region22: #{cnn_forward.3} parent=11 // pred_check_branch
        %162 = sbr.rel (%p160) target = $region24
      $region23: #{cnn_forward.3} parent=11 // pred_region
        _
      $region24: #{cnn_forward.3} parent=11 // pred_fallthru
        _
    $region12: #{cnn_forward.3} parent=5 // pred_fallthru
      _
    %p163 = scmp.lt.s32.totalorder %s10, 2
    // Predicated region
    $region25: #{cnn_forward.3} parent=5 // pred_check
      %p164 = pneg %p163
    $region26: #{cnn_forward.3} parent=5 // pred_check_branch
      %166 = sbr.rel (%p164) target = $region28
    $region27: #{cnn_forward.3} parent=5 // pred_region
      // Predicated region
      $region29: #{cnn_forward.3} parent=27 // pred_check
        %p167 = pneg %p65
      $region30: #{cnn_forward.3} parent=27 // pred_check_branch
        %169 = sbr.rel (%p167) target = $region32
      $region31: #{cnn_forward.3} parent=27 // pred_region
        %s170 = smul.u32 464, %s18
        %p171 = scmp.lt.s32.totalorder %s170, 927
        %s172 = scalar_select %p171, %s170, 927
        %p173 = scmp.lt.s32.totalorder %s17, 0
        %s174 = scalar_select %p173, %s17, 0
        %s175 = sadd.s32 %s174, %s172
        %s176 = smul.addr %s175, 4
        %s177 = scalar_lea.vmem %s1, %s176
        %s178 = smul.u32 464, %s18
      $region32: #{cnn_forward.3} parent=27 // pred_fallthru
        _
    $region28: #{cnn_forward.3} parent=5 // pred_fallthru
      _
    %p179 = scmp.le.s32.totalorder 1, %s10
    %p180 = scmp.lt.s32.totalorder %s10, 3
    %p181 = pnand %p179, %p180
    %p182 = pneg %p181
    // Predicated region
    $region33: #{cnn_forward.3} parent=5 // pred_check
      _
    $region34: #{cnn_forward.3} parent=5 // pred_check_branch
      %184 = sbr.rel (%p181) target = $region36
    $region35: #{cnn_forward.3} parent=5 // pred_region
      %s185 = ssub.s32 %s10, 1
      %p186 = pneg %p43
      %p187 = pneg %p40
      %s188 = smul.u32 464, %s20
      %p189 = scmp.lt.s32.totalorder %s188, 927
      %s190 = scalar_select %p189, %s188, 927
      %p191 = scmp.lt.s32.totalorder %s19, 0
      %s192 = scalar_select %p191, %s19, 0
      %s193 = sadd.s32 %s192, %s190
      %s194 = smul.addr %s193, 4
      %s195 = scalar_lea.vmem %s1, %s194
      %p196 = pneg %p71
      %p197 = pneg %p68
      %p198 = pneg %p92
      %p199 = pneg %p89
      %p200 = pneg %p113
      %p201 = pneg %p110
      %p202 = pneg %p139
      %p203 = pneg %p136
      %p204 = scmp.lt.s32.totalorder %s19, 0
      %s205 = scalar_select %p204, %s19, 0
      %s206 = smul.addr %s205, 8
      %s207 = scalar_lea.vmem %s4, %s206
      %s208 = smul.u32 464, %s20
      %p209 = scmp.lt.s32.totalorder %s208, 927
      %s210 = scalar_select %p209, %s208, 927
      %p211 = scmp.lt.s32.totalorder %s19, 0
      %s212 = scalar_select %p211, %s19, 0
      %s213 = sadd.s32 %s212, %s210
      %s214 = smul.addr %s213, 4
      %s215 = scalar_lea.vmem %s1, %s214
      %s216 = smul.u32 464, %s20
      %p217 = scmp.lt.s32.totalorder %s19, 0
      %s218 = scalar_select %p217, %s19, 0
      %s219 = smul.addr %s218, 8
      %s220 = scalar_lea.vmem %s4, %s219
      %p222 = scmp.eq.s32.totalorder %s20, 0
      // Predicated region
      $region37: #{cnn_forward.3} parent=35 // pred_check
        %p223 = pneg %p222
      $region38: #{cnn_forward.3} parent=35 // pred_check_branch
        %225 = sbr.rel (%p223) target = $region40
      $region39: #{cnn_forward.3} parent=35 // pred_region
        %vm226 = vcmask 523264
        %227 = vst.msk [vmem:[%s220] sm:$0xff] %vm226, 0.0
        %228 = vst.msk [vmem:[%s220 + $0x8] sm:$0xff] %vm226, 0.0
        %229 = vst.msk [vmem:[%s220 + $0x10] sm:$0xff] %vm226, 0.0
        %230 = vst.msk [vmem:[%s220 + $0x18] sm:$0xff] %vm226, 0.0
      $region40: #{cnn_forward.3} parent=35 // pred_fallthru
        _
      %v231 = vld [vmem:[%s220] sm:$0xff]
      %v232 = vld [vmem:[%s220 + $0x8] sm:$0xff]
      %v233 = vld [vmem:[%s220 + $0x10] sm:$0xff]
      %v234 = vld [vmem:[%s220 + $0x18] sm:$0xff]
      %s235 = smul.u32 %s20, 116
      %s236 = smul.addr %s235, 4
      %s237 = scalar_lea.vmem %s0, %s236
      %v238 = vld [vmem:[%s237] sm:$0xff]
      %v239 = vld [vmem:[%s237 + $0x8] sm:$0xff]
      %v240 = vld [vmem:[%s237 + $0x10] sm:$0xff]
      %v241 = vld [vmem:[%s237 + $0x18] sm:$0xff]
      %v242 = vld [vmem:[%s237 + $0x20] sm:$0xff]
      %v243 = vld [vmem:[%s237 + $0x28] sm:$0xff]
      %v244 = vld [vmem:[%s237 + $0x30] sm:$0xff]
      %v245 = vld [vmem:[%s237 + $0x38] sm:$0xff]
      %v246 = vld [vmem:[%s237 + $0x40] sm:$0xff]
      %v247 = vld [vmem:[%s237 + $0x48] sm:$0xff]
      %v248 = vld [vmem:[%s237 + $0x50] sm:$0xff]
      %v249 = vld [vmem:[%s237 + $0x58] sm:$0xff]
      %v250 = vld [vmem:[%s237 + $0x60] sm:$0xff]
      %v251 = vld [vmem:[%s237 + $0x68] sm:$0xff]
      %v252 = vld [vmem:[%s237 + $0x70] sm:$0xf]
      %v253 = vld [vmem:[%s237 + $0x74] sm:$0xff]
      %v254 = vld [vmem:[%s237 + $0x7c] sm:$0xff]
      %v255 = vld [vmem:[%s237 + $0x84] sm:$0xff]
      %v256 = vld [vmem:[%s237 + $0x8c] sm:$0xff]
      %v257 = vld [vmem:[%s237 + $0x94] sm:$0xff]
      %v258 = vld [vmem:[%s237 + $0x9c] sm:$0xff]
      %v259 = vld [vmem:[%s237 + $0xa4] sm:$0xff]
      %v260 = vld [vmem:[%s237 + $0xac] sm:$0xff]
      %v261 = vld [vmem:[%s237 + $0xb4] sm:$0xff]
      %v262 = vld [vmem:[%s237 + $0xbc] sm:$0xff]
      %v263 = vld [vmem:[%s237 + $0xc4] sm:$0xff]
      %v264 = vld [vmem:[%s237 + $0xcc] sm:$0xff]
      %v265 = vld [vmem:[%s237 + $0xd4] sm:$0xff]
      %v266 = vld [vmem:[%s237 + $0xdc] sm:$0xff]
      %v267 = vld [vmem:[%s237 + $0xe4] sm:$0xf]
      %v268 = vld [vmem:[%s237 + $0xe8] sm:$0xff]
      %v269 = vld [vmem:[%s237 + $0xf0] sm:$0xff]
      %v270 = vld [vmem:[%s237 + $0xf8] sm:$0xff]
      %v271 = vld [vmem:[%s237 + $0x100] sm:$0xff]
      %v272 = vld [vmem:[%s237 + $0x108] sm:$0xff]
      %v273 = vld [vmem:[%s237 + $0x110] sm:$0xff]
      %v274 = vld [vmem:[%s237 + $0x118] sm:$0xff]
      %v275 = vld [vmem:[%s237 + $0x120] sm:$0xff]
      %v276 = vld [vmem:[%s237 + $0x128] sm:$0xff]
      %v277 = vld [vmem:[%s237 + $0x130] sm:$0xff]
      %v278 = vld [vmem:[%s237 + $0x138] sm:$0xff]
      %v279 = vld [vmem:[%s237 + $0x140] sm:$0xff]
      %v280 = vld [vmem:[%s237 + $0x148] sm:$0xff]
      %v281 = vld [vmem:[%s237 + $0x150] sm:$0xff]
      %v282 = vld [vmem:[%s237 + $0x158] sm:$0xf]
      %v283 = vld [vmem:[%s237 + $0x15c] sm:$0xff]
      %v284 = vld [vmem:[%s237 + $0x164] sm:$0xff]
      %v285 = vld [vmem:[%s237 + $0x16c] sm:$0xff]
      %v286 = vld [vmem:[%s237 + $0x174] sm:$0xff]
      %v287 = vld [vmem:[%s237 + $0x17c] sm:$0xff]
      %v288 = vld [vmem:[%s237 + $0x184] sm:$0xff]
      %v289 = vld [vmem:[%s237 + $0x18c] sm:$0xff]
      %v290 = vld [vmem:[%s237 + $0x194] sm:$0xff]
      %v291 = vld [vmem:[%s237 + $0x19c] sm:$0xff]
      %v292 = vld [vmem:[%s237 + $0x1a4] sm:$0xff]
      %v293 = vld [vmem:[%s237 + $0x1ac] sm:$0xff]
      %v294 = vld [vmem:[%s237 + $0x1b4] sm:$0xff]
      %v295 = vld [vmem:[%s237 + $0x1bc] sm:$0xff]
      %v296 = vld [vmem:[%s237 + $0x1c4] sm:$0xff]
      %v297 = vld [vmem:[%s237 + $0x1cc] sm:$0xf]
      %v298 = vld [vmem:[%s215] sm:$0xf]
      %v299 = vld [vmem:[%s215 + $0x4] sm:$0xf]
      %v300 = vld [vmem:[%s215 + $0x8] sm:$0xf]
      %v301 = vld [vmem:[%s215 + $0xc] sm:$0xf]
      %v302 = vld [vmem:[%s215 + $0x10] sm:$0xf]
      %v303 = vld [vmem:[%s215 + $0x14] sm:$0xf]
      %v304 = vld [vmem:[%s215 + $0x18] sm:$0xf]
      %v305 = vld [vmem:[%s215 + $0x1c] sm:$0xf]
      %v306 = vld [vmem:[%s215 + $0x20] sm:$0xf]
      %v307 = vld [vmem:[%s215 + $0x24] sm:$0xf]
      %v308 = vld [vmem:[%s215 + $0x28] sm:$0xf]
      %v309 = vld [vmem:[%s215 + $0x2c] sm:$0xf]
      %v310 = vld [vmem:[%s215 + $0x30] sm:$0xf]
      %v311 = vld [vmem:[%s215 + $0x34] sm:$0xf]
      %v312 = vld [vmem:[%s215 + $0x38] sm:$0xf]
      %v313 = vld [vmem:[%s215 + $0x3c] sm:$0xf]
      %v314 = vld [vmem:[%s215 + $0x40] sm:$0xf]
      %v315 = vld [vmem:[%s215 + $0x44] sm:$0xf]
      %v316 = vld [vmem:[%s215 + $0x48] sm:$0xf]
      %v317 = vld [vmem:[%s215 + $0x4c] sm:$0xf]
      %v318 = vld [vmem:[%s215 + $0x50] sm:$0xf]
      %v319 = vld [vmem:[%s215 + $0x54] sm:$0xf]
      %v320 = vld [vmem:[%s215 + $0x58] sm:$0xf]
      %v321 = vld [vmem:[%s215 + $0x5c] sm:$0xf]
      %v322 = vld [vmem:[%s215 + $0x60] sm:$0xf]
      %v323 = vld [vmem:[%s215 + $0x64] sm:$0xf]
      %v324 = vld [vmem:[%s215 + $0x68] sm:$0xf]
      %v325 = vld [vmem:[%s215 + $0x6c] sm:$0xf]
      %v326 = vld [vmem:[%s215 + $0x70] sm:$0xf]
      %v327 = vld [vmem:[%s215 + $0x74] sm:$0xf]
      %v328 = vld [vmem:[%s215 + $0x78] sm:$0xf]
      %v329 = vld [vmem:[%s215 + $0x7c] sm:$0xf]
      %v330 = vld [vmem:[%s215 + $0x80] sm:$0xf]
      %v331 = vld [vmem:[%s215 + $0x84] sm:$0xf]
      %v332 = vld [vmem:[%s215 + $0x88] sm:$0xf]
      %v333 = vld [vmem:[%s215 + $0x8c] sm:$0xf]
      %v334 = vld [vmem:[%s215 + $0x90] sm:$0xf]
      %v335 = vld [vmem:[%s215 + $0x94] sm:$0xf]
      %v336 = vld [vmem:[%s215 + $0x98] sm:$0xf]
      %v337 = vld [vmem:[%s215 + $0x9c] sm:$0xf]
      %v338 = vld [vmem:[%s215 + $0xa0] sm:$0xf]
      %v339 = vld [vmem:[%s215 + $0xa4] sm:$0xf]
      %v340 = vld [vmem:[%s215 + $0xa8] sm:$0xf]
      %v341 = vld [vmem:[%s215 + $0xac] sm:$0xf]
      %v342 = vld [vmem:[%s215 + $0xb0] sm:$0xf]
      %v343 = vld [vmem:[%s215 + $0xb4] sm:$0xf]
      %v344 = vld [vmem:[%s215 + $0xb8] sm:$0xf]
      %v345 = vld [vmem:[%s215 + $0xbc] sm:$0xf]
      %v346 = vld [vmem:[%s215 + $0xc0] sm:$0xf]
      %v347 = vld [vmem:[%s215 + $0xc4] sm:$0xf]
      %v348 = vld [vmem:[%s215 + $0xc8] sm:$0xf]
      %v349 = vld [vmem:[%s215 + $0xcc] sm:$0xf]
      %v350 = vld [vmem:[%s215 + $0xd0] sm:$0xf]
      %v351 = vld [vmem:[%s215 + $0xd4] sm:$0xf]
      %v352 = vld [vmem:[%s215 + $0xd8] sm:$0xf]
      %v353 = vld [vmem:[%s215 + $0xdc] sm:$0xf]
      %v354 = vld [vmem:[%s215 + $0xe0] sm:$0xf]
      %v355 = vld [vmem:[%s215 + $0xe4] sm:$0xf]
      %v356 = vld [vmem:[%s215 + $0xe8] sm:$0xf]
      %v357 = vld [vmem:[%s215 + $0xec] sm:$0xf]
      %v358 = vld [vmem:[%s215 + $0xf0] sm:$0xf]
      %v359 = vld [vmem:[%s215 + $0xf4] sm:$0xf]
      %v360 = vld [vmem:[%s215 + $0xf8] sm:$0xf]
      %v361 = vld [vmem:[%s215 + $0xfc] sm:$0xf]
      %v362 = vld [vmem:[%s215 + $0x100] sm:$0xf]
      %v363 = vld [vmem:[%s215 + $0x104] sm:$0xf]
      %v364 = vld [vmem:[%s215 + $0x108] sm:$0xf]
      %v365 = vld [vmem:[%s215 + $0x10c] sm:$0xf]
      %v366 = vld [vmem:[%s215 + $0x110] sm:$0xf]
      %v367 = vld [vmem:[%s215 + $0x114] sm:$0xf]
      %v368 = vld [vmem:[%s215 + $0x118] sm:$0xf]
      %v369 = vld [vmem:[%s215 + $0x11c] sm:$0xf]
      %v370 = vld [vmem:[%s215 + $0x120] sm:$0xf]
      %v371 = vld [vmem:[%s215 + $0x124] sm:$0xf]
      %v372 = vld [vmem:[%s215 + $0x128] sm:$0xf]
      %v373 = vld [vmem:[%s215 + $0x12c] sm:$0xf]
      %v374 = vld [vmem:[%s215 + $0x130] sm:$0xf]
      %v375 = vld [vmem:[%s215 + $0x134] sm:$0xf]
      %v376 = vld [vmem:[%s215 + $0x138] sm:$0xf]
      %v377 = vld [vmem:[%s215 + $0x13c] sm:$0xf]
      %v378 = vld [vmem:[%s215 + $0x140] sm:$0xf]
      %v379 = vld [vmem:[%s215 + $0x144] sm:$0xf]
      %v380 = vld [vmem:[%s215 + $0x148] sm:$0xf]
      %v381 = vld [vmem:[%s215 + $0x14c] sm:$0xf]
      %v382 = vld [vmem:[%s215 + $0x150] sm:$0xf]
      %v383 = vld [vmem:[%s215 + $0x154] sm:$0xf]
      %v384 = vld [vmem:[%s215 + $0x158] sm:$0xf]
      %v385 = vld [vmem:[%s215 + $0x15c] sm:$0xf]
      %v386 = vld [vmem:[%s215 + $0x160] sm:$0xf]
      %v387 = vld [vmem:[%s215 + $0x164] sm:$0xf]
      %v388 = vld [vmem:[%s215 + $0x168] sm:$0xf]
      %v389 = vld [vmem:[%s215 + $0x16c] sm:$0xf]
      %v390 = vld [vmem:[%s215 + $0x170] sm:$0xf]
      %v391 = vld [vmem:[%s215 + $0x174] sm:$0xf]
      %v392 = vld [vmem:[%s215 + $0x178] sm:$0xf]
      %v393 = vld [vmem:[%s215 + $0x17c] sm:$0xf]
      %v394 = vld [vmem:[%s215 + $0x180] sm:$0xf]
      %v395 = vld [vmem:[%s215 + $0x184] sm:$0xf]
      %v396 = vld [vmem:[%s215 + $0x188] sm:$0xf]
      %v397 = vld [vmem:[%s215 + $0x18c] sm:$0xf]
      %v398 = vld [vmem:[%s215 + $0x190] sm:$0xf]
      %v399 = vld [vmem:[%s215 + $0x194] sm:$0xf]
      %v400 = vld [vmem:[%s215 + $0x198] sm:$0xf]
      %v401 = vld [vmem:[%s215 + $0x19c] sm:$0xf]
      %v402 = vld [vmem:[%s215 + $0x1a0] sm:$0xf]
      %v403 = vld [vmem:[%s215 + $0x1a4] sm:$0xf]
      %v404 = vld [vmem:[%s215 + $0x1a8] sm:$0xf]
      %v405 = vld [vmem:[%s215 + $0x1ac] sm:$0xf]
      %v406 = vld [vmem:[%s215 + $0x1b0] sm:$0xf]
      %v407 = vld [vmem:[%s215 + $0x1b4] sm:$0xf]
      %v408 = vld [vmem:[%s215 + $0x1b8] sm:$0xf]
      %v409 = vld [vmem:[%s215 + $0x1bc] sm:$0xf]
      %v410 = vld [vmem:[%s215 + $0x1c0] sm:$0xf]
      %v411 = vld [vmem:[%s215 + $0x1c4] sm:$0xf]
      %v412 = vld [vmem:[%s215 + $0x1c8] sm:$0xf]
      %v413 = vld [vmem:[%s215 + $0x1cc] sm:$0xf]
      %v414 = vld [vmem:[%s215 + $0x1d0] sm:$0xf]
      %v415 = vld [vmem:[%s215 + $0x1d4] sm:$0xf]
      %v416 = vld [vmem:[%s215 + $0x1d8] sm:$0xf]
      %v417 = vld [vmem:[%s215 + $0x1dc] sm:$0xf]
      %v418 = vld [vmem:[%s215 + $0x1e0] sm:$0xf]
      %v419 = vld [vmem:[%s215 + $0x1e4] sm:$0xf]
      %v420 = vld [vmem:[%s215 + $0x1e8] sm:$0xf]
      %v421 = vld [vmem:[%s215 + $0x1ec] sm:$0xf]
      %v422 = vld [vmem:[%s215 + $0x1f0] sm:$0xf]
      %v423 = vld [vmem:[%s215 + $0x1f4] sm:$0xf]
      %v424 = vld [vmem:[%s215 + $0x1f8] sm:$0xf]
      %v425 = vld [vmem:[%s215 + $0x1fc] sm:$0xf]
      %v426 = vld [vmem:[%s215 + $0x200] sm:$0xf]
      %v427 = vld [vmem:[%s215 + $0x204] sm:$0xf]
      %v428 = vld [vmem:[%s215 + $0x208] sm:$0xf]
      %v429 = vld [vmem:[%s215 + $0x20c] sm:$0xf]
      %v430 = vld [vmem:[%s215 + $0x210] sm:$0xf]
      %v431 = vld [vmem:[%s215 + $0x214] sm:$0xf]
      %v432 = vld [vmem:[%s215 + $0x218] sm:$0xf]
      %v433 = vld [vmem:[%s215 + $0x21c] sm:$0xf]
      %v434 = vld [vmem:[%s215 + $0x220] sm:$0xf]
      %v435 = vld [vmem:[%s215 + $0x224] sm:$0xf]
      %v436 = vld [vmem:[%s215 + $0x228] sm:$0xf]
      %v437 = vld [vmem:[%s215 + $0x22c] sm:$0xf]
      %v438 = vld [vmem:[%s215 + $0x230] sm:$0xf]
      %v439 = vld [vmem:[%s215 + $0x234] sm:$0xf]
      %v440 = vld [vmem:[%s215 + $0x238] sm:$0xf]
      %v441 = vld [vmem:[%s215 + $0x23c] sm:$0xf]
      %v442 = vld [vmem:[%s215 + $0x240] sm:$0xf]
      %v443 = vld [vmem:[%s215 + $0x244] sm:$0xf]
      %v444 = vld [vmem:[%s215 + $0x248] sm:$0xf]
      %v445 = vld [vmem:[%s215 + $0x24c] sm:$0xf]
      %v446 = vld [vmem:[%s215 + $0x250] sm:$0xf]
      %v447 = vld [vmem:[%s215 + $0x254] sm:$0xf]
      %v448 = vld [vmem:[%s215 + $0x258] sm:$0xf]
      %v449 = vld [vmem:[%s215 + $0x25c] sm:$0xf]
      %v450 = vld [vmem:[%s215 + $0x260] sm:$0xf]
      %v451 = vld [vmem:[%s215 + $0x264] sm:$0xf]
      %v452 = vld [vmem:[%s215 + $0x268] sm:$0xf]
      %v453 = vld [vmem:[%s215 + $0x26c] sm:$0xf]
      %v454 = vld [vmem:[%s215 + $0x270] sm:$0xf]
      %v455 = vld [vmem:[%s215 + $0x274] sm:$0xf]
      %v456 = vld [vmem:[%s215 + $0x278] sm:$0xf]
      %v457 = vld [vmem:[%s215 + $0x27c] sm:$0xf]
      %v458 = vld [vmem:[%s215 + $0x280] sm:$0xf]
      %v459 = vld [vmem:[%s215 + $0x284] sm:$0xf]
      %v460 = vld [vmem:[%s215 + $0x288] sm:$0xf]
      %v461 = vld [vmem:[%s215 + $0x28c] sm:$0xf]
      %v462 = vld [vmem:[%s215 + $0x290] sm:$0xf]
      %v463 = vld [vmem:[%s215 + $0x294] sm:$0xf]
      %v464 = vld [vmem:[%s215 + $0x298] sm:$0xf]
      %v465 = vld [vmem:[%s215 + $0x29c] sm:$0xf]
      %v466 = vld [vmem:[%s215 + $0x2a0] sm:$0xf]
      %v467 = vld [vmem:[%s215 + $0x2a4] sm:$0xf]
      %v468 = vld [vmem:[%s215 + $0x2a8] sm:$0xf]
      %v469 = vld [vmem:[%s215 + $0x2ac] sm:$0xf]
      %v470 = vld [vmem:[%s215 + $0x2b0] sm:$0xf]
      %v471 = vld [vmem:[%s215 + $0x2b4] sm:$0xf]
      %v472 = vld [vmem:[%s215 + $0x2b8] sm:$0xf]
      %v473 = vld [vmem:[%s215 + $0x2bc] sm:$0xf]
      %v474 = vld [vmem:[%s215 + $0x2c0] sm:$0xf]
      %v475 = vld [vmem:[%s215 + $0x2c4] sm:$0xf]
      %v476 = vld [vmem:[%s215 + $0x2c8] sm:$0xf]
      %v477 = vld [vmem:[%s215 + $0x2cc] sm:$0xf]
      %v478 = vld [vmem:[%s215 + $0x2d0] sm:$0xf]
      %v479 = vld [vmem:[%s215 + $0x2d4] sm:$0xf]
      %v480 = vld [vmem:[%s215 + $0x2d8] sm:$0xf]
      %v481 = vld [vmem:[%s215 + $0x2dc] sm:$0xf]
      %v482 = vld [vmem:[%s215 + $0x2e0] sm:$0xf]
      %v483 = vld [vmem:[%s215 + $0x2e4] sm:$0xf]
      %v484 = vld [vmem:[%s215 + $0x2e8] sm:$0xf]
      %v485 = vld [vmem:[%s215 + $0x2ec] sm:$0xf]
      %v486 = vld [vmem:[%s215 + $0x2f0] sm:$0xf]
      %v487 = vld [vmem:[%s215 + $0x2f4] sm:$0xf]
      %v488 = vld [vmem:[%s215 + $0x2f8] sm:$0xf]
      %v489 = vld [vmem:[%s215 + $0x2fc] sm:$0xf]
      %v490 = vld [vmem:[%s215 + $0x300] sm:$0xf]
      %v491 = vld [vmem:[%s215 + $0x304] sm:$0xf]
      %v492 = vld [vmem:[%s215 + $0x308] sm:$0xf]
      %v493 = vld [vmem:[%s215 + $0x30c] sm:$0xf]
      %v494 = vld [vmem:[%s215 + $0x310] sm:$0xf]
      %v495 = vld [vmem:[%s215 + $0x314] sm:$0xf]
      %v496 = vld [vmem:[%s215 + $0x318] sm:$0xf]
      %v497 = vld [vmem:[%s215 + $0x31c] sm:$0xf]
      %v498 = vld [vmem:[%s215 + $0x320] sm:$0xf]
      %v499 = vld [vmem:[%s215 + $0x324] sm:$0xf]
      %v500 = vld [vmem:[%s215 + $0x328] sm:$0xf]
      %v501 = vld [vmem:[%s215 + $0x32c] sm:$0xf]
      %v502 = vld [vmem:[%s215 + $0x330] sm:$0xf]
      %v503 = vld [vmem:[%s215 + $0x334] sm:$0xf]
      %v504 = vld [vmem:[%s215 + $0x338] sm:$0xf]
      %v505 = vld [vmem:[%s215 + $0x33c] sm:$0xf]
      %v506 = vld [vmem:[%s215 + $0x340] sm:$0xf]
      %v507 = vld [vmem:[%s215 + $0x344] sm:$0xf]
      %v508 = vld [vmem:[%s215 + $0x348] sm:$0xf]
      %v509 = vld [vmem:[%s215 + $0x34c] sm:$0xf]
      %v510 = vld [vmem:[%s215 + $0x350] sm:$0xf]
      %v511 = vld [vmem:[%s215 + $0x354] sm:$0xf]
      %v512 = vld [vmem:[%s215 + $0x358] sm:$0xf]
      %v513 = vld [vmem:[%s215 + $0x35c] sm:$0xf]
      %v514 = vld [vmem:[%s215 + $0x360] sm:$0xf]
      %v515 = vld [vmem:[%s215 + $0x364] sm:$0xf]
      %v516 = vld [vmem:[%s215 + $0x368] sm:$0xf]
      %v517 = vld [vmem:[%s215 + $0x36c] sm:$0xf]
      %v518 = vld [vmem:[%s215 + $0x370] sm:$0xf]
      %v519 = vld [vmem:[%s215 + $0x374] sm:$0xf]
      %v520 = vld [vmem:[%s215 + $0x378] sm:$0xf]
      %v521 = vld [vmem:[%s215 + $0x37c] sm:$0xf]
      %v522 = vld [vmem:[%s215 + $0x380] sm:$0xf]
      %v523 = vld [vmem:[%s215 + $0x384] sm:$0xf]
      %v524 = vld [vmem:[%s215 + $0x388] sm:$0xf]
      %v525 = vld [vmem:[%s215 + $0x38c] sm:$0xf]
      %v526 = vld [vmem:[%s215 + $0x390] sm:$0xf]
      %v527 = vld [vmem:[%s215 + $0x394] sm:$0xf]
      %v528 = vld [vmem:[%s215 + $0x398] sm:$0xf]
      %v529 = vld [vmem:[%s215 + $0x39c] sm:$0xf]
      %v530 = vld [vmem:[%s215 + $0x3a0] sm:$0xf]
      %v531 = vld [vmem:[%s215 + $0x3a4] sm:$0xf]
      %v532 = vld [vmem:[%s215 + $0x3a8] sm:$0xf]
      %v533 = vld [vmem:[%s215 + $0x3ac] sm:$0xf]
      %v534 = vld [vmem:[%s215 + $0x3b0] sm:$0xf]
      %v535 = vld [vmem:[%s215 + $0x3b4] sm:$0xf]
      %v536 = vld [vmem:[%s215 + $0x3b8] sm:$0xf]
      %v537 = vld [vmem:[%s215 + $0x3bc] sm:$0xf]
      %v538 = vld [vmem:[%s215 + $0x3c0] sm:$0xf]
      %v539 = vld [vmem:[%s215 + $0x3c4] sm:$0xf]
      %v540 = vld [vmem:[%s215 + $0x3c8] sm:$0xf]
      %v541 = vld [vmem:[%s215 + $0x3cc] sm:$0xf]
      %v542 = vld [vmem:[%s215 + $0x3d0] sm:$0xf]
      %v543 = vld [vmem:[%s215 + $0x3d4] sm:$0xf]
      %v544 = vld [vmem:[%s215 + $0x3d8] sm:$0xf]
      %v545 = vld [vmem:[%s215 + $0x3dc] sm:$0xf]
      %v546 = vld [vmem:[%s215 + $0x3e0] sm:$0xf]
      %v547 = vld [vmem:[%s215 + $0x3e4] sm:$0xf]
      %v548 = vld [vmem:[%s215 + $0x3e8] sm:$0xf]
      %v549 = vld [vmem:[%s215 + $0x3ec] sm:$0xf]
      %v550 = vld [vmem:[%s215 + $0x3f0] sm:$0xf]
      %v551 = vld [vmem:[%s215 + $0x3f4] sm:$0xf]
      %v552 = vld [vmem:[%s215 + $0x3f8] sm:$0xf]
      %v553 = vld [vmem:[%s215 + $0x3fc] sm:$0xf]
      %v554 = vld [vmem:[%s215 + $0x400] sm:$0xf]
      %v555 = vld [vmem:[%s215 + $0x404] sm:$0xf]
      %v556 = vld [vmem:[%s215 + $0x408] sm:$0xf]
      %v557 = vld [vmem:[%s215 + $0x40c] sm:$0xf]
      %v558 = vld [vmem:[%s215 + $0x410] sm:$0xf]
      %v559 = vld [vmem:[%s215 + $0x414] sm:$0xf]
      %v560 = vld [vmem:[%s215 + $0x418] sm:$0xf]
      %v561 = vld [vmem:[%s215 + $0x41c] sm:$0xf]
      %v562 = vld [vmem:[%s215 + $0x420] sm:$0xf]
      %v563 = vld [vmem:[%s215 + $0x424] sm:$0xf]
      %v564 = vld [vmem:[%s215 + $0x428] sm:$0xf]
      %v565 = vld [vmem:[%s215 + $0x42c] sm:$0xf]
      %v566 = vld [vmem:[%s215 + $0x430] sm:$0xf]
      %v567 = vld [vmem:[%s215 + $0x434] sm:$0xf]
      %v568 = vld [vmem:[%s215 + $0x438] sm:$0xf]
      %v569 = vld [vmem:[%s215 + $0x43c] sm:$0xf]
      %v570 = vld [vmem:[%s215 + $0x440] sm:$0xf]
      %v571 = vld [vmem:[%s215 + $0x444] sm:$0xf]
      %v572 = vld [vmem:[%s215 + $0x448] sm:$0xf]
      %v573 = vld [vmem:[%s215 + $0x44c] sm:$0xf]
      %v574 = vld [vmem:[%s215 + $0x450] sm:$0xf]
      %v575 = vld [vmem:[%s215 + $0x454] sm:$0xf]
      %v576 = vld [vmem:[%s215 + $0x458] sm:$0xf]
      %v577 = vld [vmem:[%s215 + $0x45c] sm:$0xf]
      %v578 = vld [vmem:[%s215 + $0x460] sm:$0xf]
      %v579 = vld [vmem:[%s215 + $0x464] sm:$0xf]
      %v580 = vld [vmem:[%s215 + $0x468] sm:$0xf]
      %v581 = vld [vmem:[%s215 + $0x46c] sm:$0xf]
      %v582 = vld [vmem:[%s215 + $0x470] sm:$0xf]
      %v583 = vld [vmem:[%s215 + $0x474] sm:$0xf]
      %v584 = vld [vmem:[%s215 + $0x478] sm:$0xf]
      %v585 = vld [vmem:[%s215 + $0x47c] sm:$0xf]
      %v586 = vld [vmem:[%s215 + $0x480] sm:$0xf]
      %v587 = vld [vmem:[%s215 + $0x484] sm:$0xf]
      %v588 = vld [vmem:[%s215 + $0x488] sm:$0xf]
      %v589 = vld [vmem:[%s215 + $0x48c] sm:$0xf]
      %v590 = vld [vmem:[%s215 + $0x490] sm:$0xf]
      %v591 = vld [vmem:[%s215 + $0x494] sm:$0xf]
      %v592 = vld [vmem:[%s215 + $0x498] sm:$0xf]
      %v593 = vld [vmem:[%s215 + $0x49c] sm:$0xf]
      %v594 = vld [vmem:[%s215 + $0x4a0] sm:$0xf]
      %v595 = vld [vmem:[%s215 + $0x4a4] sm:$0xf]
      %v596 = vld [vmem:[%s215 + $0x4a8] sm:$0xf]
      %v597 = vld [vmem:[%s215 + $0x4ac] sm:$0xf]
      %v598 = vld [vmem:[%s215 + $0x4b0] sm:$0xf]
      %v599 = vld [vmem:[%s215 + $0x4b4] sm:$0xf]
      %v600 = vld [vmem:[%s215 + $0x4b8] sm:$0xf]
      %v601 = vld [vmem:[%s215 + $0x4bc] sm:$0xf]
      %v602 = vld [vmem:[%s215 + $0x4c0] sm:$0xf]
      %v603 = vld [vmem:[%s215 + $0x4c4] sm:$0xf]
      %v604 = vld [vmem:[%s215 + $0x4c8] sm:$0xf]
      %v605 = vld [vmem:[%s215 + $0x4cc] sm:$0xf]
      %v606 = vld [vmem:[%s215 + $0x4d0] sm:$0xf]
      %v607 = vld [vmem:[%s215 + $0x4d4] sm:$0xf]
      %v608 = vld [vmem:[%s215 + $0x4d8] sm:$0xf]
      %v609 = vld [vmem:[%s215 + $0x4dc] sm:$0xf]
      %v610 = vld [vmem:[%s215 + $0x4e0] sm:$0xf]
      %v611 = vld [vmem:[%s215 + $0x4e4] sm:$0xf]
      %v612 = vld [vmem:[%s215 + $0x4e8] sm:$0xf]
      %v613 = vld [vmem:[%s215 + $0x4ec] sm:$0xf]
      %v614 = vld [vmem:[%s215 + $0x4f0] sm:$0xf]
      %v615 = vld [vmem:[%s215 + $0x4f4] sm:$0xf]
      %v616 = vld [vmem:[%s215 + $0x4f8] sm:$0xf]
      %v617 = vld [vmem:[%s215 + $0x4fc] sm:$0xf]
      %v618 = vld [vmem:[%s215 + $0x500] sm:$0xf]
      %v619 = vld [vmem:[%s215 + $0x504] sm:$0xf]
      %v620 = vld [vmem:[%s215 + $0x508] sm:$0xf]
      %v621 = vld [vmem:[%s215 + $0x50c] sm:$0xf]
      %v622 = vld [vmem:[%s215 + $0x510] sm:$0xf]
      %v623 = vld [vmem:[%s215 + $0x514] sm:$0xf]
      %v624 = vld [vmem:[%s215 + $0x518] sm:$0xf]
      %v625 = vld [vmem:[%s215 + $0x51c] sm:$0xf]
      %v626 = vld [vmem:[%s215 + $0x520] sm:$0xf]
      %v627 = vld [vmem:[%s215 + $0x524] sm:$0xf]
      %v628 = vld [vmem:[%s215 + $0x528] sm:$0xf]
      %v629 = vld [vmem:[%s215 + $0x52c] sm:$0xf]
      %v630 = vld [vmem:[%s215 + $0x530] sm:$0xf]
      %v631 = vld [vmem:[%s215 + $0x534] sm:$0xf]
      %v632 = vld [vmem:[%s215 + $0x538] sm:$0xf]
      %v633 = vld [vmem:[%s215 + $0x53c] sm:$0xf]
      %v634 = vld [vmem:[%s215 + $0x540] sm:$0xf]
      %v635 = vld [vmem:[%s215 + $0x544] sm:$0xf]
      %v636 = vld [vmem:[%s215 + $0x548] sm:$0xf]
      %v637 = vld [vmem:[%s215 + $0x54c] sm:$0xf]
      %v638 = vld [vmem:[%s215 + $0x550] sm:$0xf]
      %v639 = vld [vmem:[%s215 + $0x554] sm:$0xf]
      %v640 = vld [vmem:[%s215 + $0x558] sm:$0xf]
      %v641 = vld [vmem:[%s215 + $0x55c] sm:$0xf]
      %v642 = vld [vmem:[%s215 + $0x560] sm:$0xf]
      %v643 = vld [vmem:[%s215 + $0x564] sm:$0xf]
      %v644 = vld [vmem:[%s215 + $0x568] sm:$0xf]
      %v645 = vld [vmem:[%s215 + $0x56c] sm:$0xf]
      %v646 = vld [vmem:[%s215 + $0x570] sm:$0xf]
      %v647 = vld [vmem:[%s215 + $0x574] sm:$0xf]
      %v648 = vld [vmem:[%s215 + $0x578] sm:$0xf]
      %v649 = vld [vmem:[%s215 + $0x57c] sm:$0xf]
      %v650 = vld [vmem:[%s215 + $0x580] sm:$0xf]
      %v651 = vld [vmem:[%s215 + $0x584] sm:$0xf]
      %v652 = vld [vmem:[%s215 + $0x588] sm:$0xf]
      %v653 = vld [vmem:[%s215 + $0x58c] sm:$0xf]
      %v654 = vld [vmem:[%s215 + $0x590] sm:$0xf]
      %v655 = vld [vmem:[%s215 + $0x594] sm:$0xf]
      %v656 = vld [vmem:[%s215 + $0x598] sm:$0xf]
      %v657 = vld [vmem:[%s215 + $0x59c] sm:$0xf]
      %v658 = vld [vmem:[%s215 + $0x5a0] sm:$0xf]
      %v659 = vld [vmem:[%s215 + $0x5a4] sm:$0xf]
      %v660 = vld [vmem:[%s215 + $0x5a8] sm:$0xf]
      %v661 = vld [vmem:[%s215 + $0x5ac] sm:$0xf]
      %v662 = vld [vmem:[%s215 + $0x5b0] sm:$0xf]
      %v663 = vld [vmem:[%s215 + $0x5b4] sm:$0xf]
      %v664 = vld [vmem:[%s215 + $0x5b8] sm:$0xf]
      %v665 = vld [vmem:[%s215 + $0x5bc] sm:$0xf]
      %v666 = vld [vmem:[%s215 + $0x5c0] sm:$0xf]
      %v667 = vld [vmem:[%s215 + $0x5c4] sm:$0xf]
      %v668 = vld [vmem:[%s215 + $0x5c8] sm:$0xf]
      %v669 = vld [vmem:[%s215 + $0x5cc] sm:$0xf]
      %v670 = vld [vmem:[%s215 + $0x5d0] sm:$0xf]
      %v671 = vld [vmem:[%s215 + $0x5d4] sm:$0xf]
      %v672 = vld [vmem:[%s215 + $0x5d8] sm:$0xf]
      %v673 = vld [vmem:[%s215 + $0x5dc] sm:$0xf]
      %v674 = vld [vmem:[%s215 + $0x5e0] sm:$0xf]
      %v675 = vld [vmem:[%s215 + $0x5e4] sm:$0xf]
      %v676 = vld [vmem:[%s215 + $0x5e8] sm:$0xf]
      %v677 = vld [vmem:[%s215 + $0x5ec] sm:$0xf]
      %v678 = vld [vmem:[%s215 + $0x5f0] sm:$0xf]
      %v679 = vld [vmem:[%s215 + $0x5f4] sm:$0xf]
      %v680 = vld [vmem:[%s215 + $0x5f8] sm:$0xf]
      %v681 = vld [vmem:[%s215 + $0x5fc] sm:$0xf]
      %v682 = vld [vmem:[%s215 + $0x600] sm:$0xf]
      %v683 = vld [vmem:[%s215 + $0x604] sm:$0xf]
      %v684 = vld [vmem:[%s215 + $0x608] sm:$0xf]
      %v685 = vld [vmem:[%s215 + $0x60c] sm:$0xf]
      %v686 = vld [vmem:[%s215 + $0x610] sm:$0xf]
      %v687 = vld [vmem:[%s215 + $0x614] sm:$0xf]
      %v688 = vld [vmem:[%s215 + $0x618] sm:$0xf]
      %v689 = vld [vmem:[%s215 + $0x61c] sm:$0xf]
      %v690 = vld [vmem:[%s215 + $0x620] sm:$0xf]
      %v691 = vld [vmem:[%s215 + $0x624] sm:$0xf]
      %v692 = vld [vmem:[%s215 + $0x628] sm:$0xf]
      %v693 = vld [vmem:[%s215 + $0x62c] sm:$0xf]
      %v694 = vld [vmem:[%s215 + $0x630] sm:$0xf]
      %v695 = vld [vmem:[%s215 + $0x634] sm:$0xf]
      %v696 = vld [vmem:[%s215 + $0x638] sm:$0xf]
      %v697 = vld [vmem:[%s215 + $0x63c] sm:$0xf]
      %v698 = vld [vmem:[%s215 + $0x640] sm:$0xf]
      %v699 = vld [vmem:[%s215 + $0x644] sm:$0xf]
      %v700 = vld [vmem:[%s215 + $0x648] sm:$0xf]
      %v701 = vld [vmem:[%s215 + $0x64c] sm:$0xf]
      %v702 = vld [vmem:[%s215 + $0x650] sm:$0xf]
      %v703 = vld [vmem:[%s215 + $0x654] sm:$0xf]
      %v704 = vld [vmem:[%s215 + $0x658] sm:$0xf]
      %v705 = vld [vmem:[%s215 + $0x65c] sm:$0xf]
      %v706 = vld [vmem:[%s215 + $0x660] sm:$0xf]
      %v707 = vld [vmem:[%s215 + $0x664] sm:$0xf]
      %v708 = vld [vmem:[%s215 + $0x668] sm:$0xf]
      %v709 = vld [vmem:[%s215 + $0x66c] sm:$0xf]
      %v710 = vld [vmem:[%s215 + $0x670] sm:$0xf]
      %v711 = vld [vmem:[%s215 + $0x674] sm:$0xf]
      %v712 = vld [vmem:[%s215 + $0x678] sm:$0xf]
      %v713 = vld [vmem:[%s215 + $0x67c] sm:$0xf]
      %v714 = vld [vmem:[%s215 + $0x680] sm:$0xf]
      %v715 = vld [vmem:[%s215 + $0x684] sm:$0xf]
      %v716 = vld [vmem:[%s215 + $0x688] sm:$0xf]
      %v717 = vld [vmem:[%s215 + $0x68c] sm:$0xf]
      %v718 = vld [vmem:[%s215 + $0x690] sm:$0xf]
      %v719 = vld [vmem:[%s215 + $0x694] sm:$0xf]
      %v720 = vld [vmem:[%s215 + $0x698] sm:$0xf]
      %v721 = vld [vmem:[%s215 + $0x69c] sm:$0xf]
      %v722 = vld [vmem:[%s215 + $0x6a0] sm:$0xf]
      %v723 = vld [vmem:[%s215 + $0x6a4] sm:$0xf]
      %v724 = vld [vmem:[%s215 + $0x6a8] sm:$0xf]
      %v725 = vld [vmem:[%s215 + $0x6ac] sm:$0xf]
      %v726 = vld [vmem:[%s215 + $0x6b0] sm:$0xf]
      %v727 = vld [vmem:[%s215 + $0x6b4] sm:$0xf]
      %v728 = vld [vmem:[%s215 + $0x6b8] sm:$0xf]
      %v729 = vld [vmem:[%s215 + $0x6bc] sm:$0xf]
      %v730 = vld [vmem:[%s215 + $0x6c0] sm:$0xf]
      %v731 = vld [vmem:[%s215 + $0x6c4] sm:$0xf]
      %v732 = vld [vmem:[%s215 + $0x6c8] sm:$0xf]
      %v733 = vld [vmem:[%s215 + $0x6cc] sm:$0xf]
      %v734 = vld [vmem:[%s215 + $0x6d0] sm:$0xf]
      %v735 = vld [vmem:[%s215 + $0x6d4] sm:$0xf]
      %v736 = vld [vmem:[%s215 + $0x6d8] sm:$0xf]
      %v737 = vld [vmem:[%s215 + $0x6dc] sm:$0xf]
      %v738 = vld [vmem:[%s215 + $0x6e0] sm:$0xf]
      %v739 = vld [vmem:[%s215 + $0x6e4] sm:$0xf]
      %v740 = vld [vmem:[%s215 + $0x6e8] sm:$0xf]
      %v741 = vld [vmem:[%s215 + $0x6ec] sm:$0xf]
      %v742 = vld [vmem:[%s215 + $0x6f0] sm:$0xf]
      %v743 = vld [vmem:[%s215 + $0x6f4] sm:$0xf]
      %v744 = vld [vmem:[%s215 + $0x6f8] sm:$0xf]
      %v745 = vld [vmem:[%s215 + $0x6fc] sm:$0xf]
      %v746 = vld [vmem:[%s215 + $0x700] sm:$0xf]
      %v747 = vld [vmem:[%s215 + $0x704] sm:$0xf]
      %v748 = vld [vmem:[%s215 + $0x708] sm:$0xf]
      %v749 = vld [vmem:[%s215 + $0x70c] sm:$0xf]
      %v750 = vld [vmem:[%s215 + $0x710] sm:$0xf]
      %v751 = vld [vmem:[%s215 + $0x714] sm:$0xf]
      %v752 = vld [vmem:[%s215 + $0x718] sm:$0xf]
      %v753 = vld [vmem:[%s215 + $0x71c] sm:$0xf]
      %v754 = vld [vmem:[%s215 + $0x720] sm:$0xf]
      %v755 = vld [vmem:[%s215 + $0x724] sm:$0xf]
      %v756 = vld [vmem:[%s215 + $0x728] sm:$0xf]
      %v757 = vld [vmem:[%s215 + $0x72c] sm:$0xf]
      %v758 = vld [vmem:[%s215 + $0x730] sm:$0xf]
      %v759 = vld [vmem:[%s215 + $0x734] sm:$0xf]
      %v760 = vld [vmem:[%s215 + $0x738] sm:$0xf]
      %v761 = vld [vmem:[%s215 + $0x73c] sm:$0xf]
      %v822 = vunpack.c.l.b16 %v238
      %v823 = vunpack.c.h.b16 %v238
      %v824 = vunpack.c.l.b16 %v239
      %v825 = vunpack.c.h.b16 %v239
      %v826 = vunpack.c.l.b16 %v240
      %v827 = vunpack.c.h.b16 %v240
      %v828 = vunpack.c.l.b16 %v241
      %v829 = vunpack.c.h.b16 %v241
      %v830 = vunpack.c.l.b16 %v242
      %v831 = vunpack.c.h.b16 %v242
      %v832 = vunpack.c.l.b16 %v243
      %v833 = vunpack.c.h.b16 %v243
      %v834 = vunpack.c.l.b16 %v244
      %v835 = vunpack.c.h.b16 %v244
      %v836 = vunpack.c.l.b16 %v245
      %v837 = vunpack.c.h.b16 %v245
      %v838 = vunpack.c.l.b16 %v246
      %v839 = vunpack.c.h.b16 %v246
      %v840 = vunpack.c.l.b16 %v247
      %v841 = vunpack.c.h.b16 %v247
      %v842 = vunpack.c.l.b16 %v248
      %v843 = vunpack.c.h.b16 %v248
      %v844 = vunpack.c.l.b16 %v249
      %v845 = vunpack.c.h.b16 %v249
      %v846 = vunpack.c.l.b16 %v250
      %v847 = vunpack.c.h.b16 %v250
      %v848 = vunpack.c.l.b16 %v251
      %v849 = vunpack.c.h.b16 %v251
      %v850 = vunpack.c.l.b16 %v252
      %v851 = vunpack.c.l.b16 %v253
      %v852 = vunpack.c.h.b16 %v253
      %v853 = vunpack.c.l.b16 %v254
      %v854 = vunpack.c.h.b16 %v254
      %v855 = vunpack.c.l.b16 %v255
      %v856 = vunpack.c.h.b16 %v255
      %v857 = vunpack.c.l.b16 %v256
      %v858 = vunpack.c.h.b16 %v256
      %v859 = vunpack.c.l.b16 %v257
      %v860 = vunpack.c.h.b16 %v257
      %v861 = vunpack.c.l.b16 %v258
      %v862 = vunpack.c.h.b16 %v258
      %v863 = vunpack.c.l.b16 %v259
      %v864 = vunpack.c.h.b16 %v259
      %v865 = vunpack.c.l.b16 %v260
      %v866 = vunpack.c.h.b16 %v260
      %v867 = vunpack.c.l.b16 %v261
      %v868 = vunpack.c.h.b16 %v261
      %v869 = vunpack.c.l.b16 %v262
      %v870 = vunpack.c.h.b16 %v262
      %v871 = vunpack.c.l.b16 %v263
      %v872 = vunpack.c.h.b16 %v263
      %v873 = vunpack.c.l.b16 %v264
      %v874 = vunpack.c.h.b16 %v264
      %v875 = vunpack.c.l.b16 %v265
      %v876 = vunpack.c.h.b16 %v265
      %v877 = vunpack.c.l.b16 %v266
      %v878 = vunpack.c.h.b16 %v266
      %v879 = vunpack.c.l.b16 %v267
      %v880 = vunpack.c.l.b16 %v268
      %v881 = vunpack.c.h.b16 %v268
      %v882 = vunpack.c.l.b16 %v269
      %v883 = vunpack.c.h.b16 %v269
      %v884 = vunpack.c.l.b16 %v270
      %v885 = vunpack.c.h.b16 %v270
      %v886 = vunpack.c.l.b16 %v271
      %v887 = vunpack.c.h.b16 %v271
      %v888 = vunpack.c.l.b16 %v272
      %v889 = vunpack.c.h.b16 %v272
      %v890 = vunpack.c.l.b16 %v273
      %v891 = vunpack.c.h.b16 %v273
      %v892 = vunpack.c.l.b16 %v274
      %v893 = vunpack.c.h.b16 %v274
      %v894 = vunpack.c.l.b16 %v275
      %v895 = vunpack.c.h.b16 %v275
      %v896 = vunpack.c.l.b16 %v276
      %v897 = vunpack.c.h.b16 %v276
      %v898 = vunpack.c.l.b16 %v277
      %v899 = vunpack.c.h.b16 %v277
      %v900 = vunpack.c.l.b16 %v278
      %v901 = vunpack.c.h.b16 %v278
      %v902 = vunpack.c.l.b16 %v279
      %v903 = vunpack.c.h.b16 %v279
      %v904 = vunpack.c.l.b16 %v280
      %v905 = vunpack.c.h.b16 %v280
      %v906 = vunpack.c.l.b16 %v281
      %v907 = vunpack.c.h.b16 %v281
      %v908 = vunpack.c.l.b16 %v282
      %v909 = vunpack.c.l.b16 %v283
      %v910 = vunpack.c.h.b16 %v283
      %v911 = vunpack.c.l.b16 %v284
      %v912 = vunpack.c.h.b16 %v284
      %v913 = vunpack.c.l.b16 %v285
      %v914 = vunpack.c.h.b16 %v285
      %v915 = vunpack.c.l.b16 %v286
      %v916 = vunpack.c.h.b16 %v286
      %v917 = vunpack.c.l.b16 %v287
      %v918 = vunpack.c.h.b16 %v287
      %v919 = vunpack.c.l.b16 %v288
      %v920 = vunpack.c.h.b16 %v288
      %v921 = vunpack.c.l.b16 %v289
      %v922 = vunpack.c.h.b16 %v289
      %v923 = vunpack.c.l.b16 %v290
      %v924 = vunpack.c.h.b16 %v290
      %v925 = vunpack.c.l.b16 %v291
      %v926 = vunpack.c.h.b16 %v291
      %v927 = vunpack.c.l.b16 %v292
      %v928 = vunpack.c.h.b16 %v292
      %v929 = vunpack.c.l.b16 %v293
      %v930 = vunpack.c.h.b16 %v293
      %v931 = vunpack.c.l.b16 %v294
      %v932 = vunpack.c.h.b16 %v294
      %v933 = vunpack.c.l.b16 %v295
      %v934 = vunpack.c.h.b16 %v295
      %v935 = vunpack.c.l.b16 %v296
      %v936 = vunpack.c.h.b16 %v296
      %v937 = vunpack.c.l.b16 %v297
      %v938 = vpack.c.b16 %v851, %v822
      %v939 = vpack.c.b16 %v852, %v823
      %v940 = vpack.c.b16 %v853, %v824
      %v941 = vpack.c.b16 %v854, %v825
      %v942 = vpack.c.b16 %v855, %v826
      %v943 = vpack.c.b16 %v856, %v827
      %v944 = vpack.c.b16 %v857, %v828
      %v945 = vpack.c.b16 %v858, %v829
      %v946 = vpack.c.b16 %v859, %v830
      %v947 = vpack.c.b16 %v860, %v831
      %v948 = vpack.c.b16 %v861, %v832
      %v949 = vpack.c.b16 %v862, %v833
      %v950 = vpack.c.b16 %v863, %v834
      %v951 = vpack.c.b16 %v864, %v835
      %v952 = vpack.c.b16 %v865, %v836
      %v953 = vpack.c.b16 %v866, %v837
      %v954 = vpack.c.b16 %v867, %v838
      %v955 = vpack.c.b16 %v868, %v839
      %v956 = vpack.c.b16 %v869, %v840
      %v957 = vpack.c.b16 %v870, %v841
      %v958 = vpack.c.b16 %v871, %v842
      %v959 = vpack.c.b16 %v872, %v843
      %v960 = vpack.c.b16 %v873, %v844
      %v961 = vpack.c.b16 %v874, %v845
      %v962 = vpack.c.b16 %v875, %v846
      %v963 = vpack.c.b16 %v876, %v847
      %v964 = vpack.c.b16 %v877, %v848
      %v965 = vpack.c.b16 %v878, %v849
      %v966 = vpack.c.b16 %v879, %v850
      %v967 = vpack.c.b16 %v909, %v880
      %v968 = vpack.c.b16 %v910, %v881
      %v969 = vpack.c.b16 %v911, %v882
      %v970 = vpack.c.b16 %v912, %v883
      %v971 = vpack.c.b16 %v913, %v884
      %v972 = vpack.c.b16 %v914, %v885
      %v973 = vpack.c.b16 %v915, %v886
      %v974 = vpack.c.b16 %v916, %v887
      %v975 = vpack.c.b16 %v917, %v888
      %v976 = vpack.c.b16 %v918, %v889
      %v977 = vpack.c.b16 %v919, %v890
      %v978 = vpack.c.b16 %v920, %v891
      %v979 = vpack.c.b16 %v921, %v892
      %v980 = vpack.c.b16 %v922, %v893
      %v981 = vpack.c.b16 %v923, %v894
      %v982 = vpack.c.b16 %v924, %v895
      %v983 = vpack.c.b16 %v925, %v896
      %v984 = vpack.c.b16 %v926, %v897
      %v985 = vpack.c.b16 %v927, %v898
      %v986 = vpack.c.b16 %v928, %v899
      %v987 = vpack.c.b16 %v929, %v900
      %v988 = vpack.c.b16 %v930, %v901
      %v989 = vpack.c.b16 %v931, %v902
      %v990 = vpack.c.b16 %v932, %v903
      %v991 = vpack.c.b16 %v933, %v904
      %v992 = vpack.c.b16 %v934, %v905
      %v993 = vpack.c.b16 %v935, %v906
      %v994 = vpack.c.b16 %v936, %v907
      %v995 = vpack.c.b16 %v937, %v908
      %v1518 = vunpack.c.l.b16 %v298
      %v1519 = vunpack.c.l.b16 %v299
      %v1520 = vunpack.c.l.b16 %v300
      %v1521 = vunpack.c.l.b16 %v301
      %v1522 = vunpack.c.l.b16 %v302
      %v1523 = vunpack.c.l.b16 %v303
      %v1524 = vunpack.c.l.b16 %v304
      %v1525 = vunpack.c.l.b16 %v305
      %v1526 = vunpack.c.l.b16 %v306
      %v1527 = vunpack.c.l.b16 %v307
      %v1528 = vunpack.c.l.b16 %v308
      %v1529 = vunpack.c.l.b16 %v309
      %v1530 = vunpack.c.l.b16 %v310
      %v1531 = vunpack.c.l.b16 %v311
      %v1532 = vunpack.c.l.b16 %v312
      %v1533 = vunpack.c.l.b16 %v313
      %v1534 = vunpack.c.l.b16 %v314
      %v1535 = vunpack.c.l.b16 %v315
      %v1536 = vunpack.c.l.b16 %v316
      %v1537 = vunpack.c.l.b16 %v317
      %v1538 = vunpack.c.l.b16 %v318
      %v1539 = vunpack.c.l.b16 %v319
      %v1540 = vunpack.c.l.b16 %v320
      %v1541 = vunpack.c.l.b16 %v321
      %v1542 = vunpack.c.l.b16 %v322
      %v1543 = vunpack.c.l.b16 %v323
      %v1544 = vunpack.c.l.b16 %v324
      %v1545 = vunpack.c.l.b16 %v325
      %v1546 = vunpack.c.l.b16 %v326
      %v1547 = vunpack.c.l.b16 %v327
      %v1548 = vunpack.c.l.b16 %v328
      %v1549 = vunpack.c.l.b16 %v329
      %v1550 = vunpack.c.l.b16 %v330
      %v1551 = vunpack.c.l.b16 %v331
      %v1552 = vunpack.c.l.b16 %v332
      %v1553 = vunpack.c.l.b16 %v333
      %v1554 = vunpack.c.l.b16 %v334
      %v1555 = vunpack.c.l.b16 %v335
      %v1556 = vunpack.c.l.b16 %v336
      %v1557 = vunpack.c.l.b16 %v337
      %v1558 = vunpack.c.l.b16 %v338
      %v1559 = vunpack.c.l.b16 %v339
      %v1560 = vunpack.c.l.b16 %v340
      %v1561 = vunpack.c.l.b16 %v341
      %v1562 = vunpack.c.l.b16 %v342
      %v1563 = vunpack.c.l.b16 %v343
      %v1564 = vunpack.c.l.b16 %v344
      %v1565 = vunpack.c.l.b16 %v345
      %v1566 = vunpack.c.l.b16 %v346
      %v1567 = vunpack.c.l.b16 %v347
      %v1568 = vunpack.c.l.b16 %v348
      %v1569 = vunpack.c.l.b16 %v349
      %v1570 = vunpack.c.l.b16 %v350
      %v1571 = vunpack.c.l.b16 %v351
      %v1572 = vunpack.c.l.b16 %v352
      %v1573 = vunpack.c.l.b16 %v353
      %v1574 = vunpack.c.l.b16 %v354
      %v1575 = vunpack.c.l.b16 %v355
      %v1576 = vunpack.c.l.b16 %v356
      %v1577 = vunpack.c.l.b16 %v357
      %v1578 = vunpack.c.l.b16 %v358
      %v1579 = vunpack.c.l.b16 %v359
      %v1580 = vunpack.c.l.b16 %v360
      %v1581 = vunpack.c.l.b16 %v361
      %v1582 = vunpack.c.l.b16 %v362
      %v1583 = vunpack.c.l.b16 %v363
      %v1584 = vunpack.c.l.b16 %v364
      %v1585 = vunpack.c.l.b16 %v365
      %v1586 = vunpack.c.l.b16 %v366
      %v1587 = vunpack.c.l.b16 %v367
      %v1588 = vunpack.c.l.b16 %v368
      %v1589 = vunpack.c.l.b16 %v369
      %v1590 = vunpack.c.l.b16 %v370
      %v1591 = vunpack.c.l.b16 %v371
      %v1592 = vunpack.c.l.b16 %v372
      %v1593 = vunpack.c.l.b16 %v373
      %v1594 = vunpack.c.l.b16 %v374
      %v1595 = vunpack.c.l.b16 %v375
      %v1596 = vunpack.c.l.b16 %v376
      %v1597 = vunpack.c.l.b16 %v377
      %v1598 = vunpack.c.l.b16 %v378
      %v1599 = vunpack.c.l.b16 %v379
      %v1600 = vunpack.c.l.b16 %v380
      %v1601 = vunpack.c.l.b16 %v381
      %v1602 = vunpack.c.l.b16 %v382
      %v1603 = vunpack.c.l.b16 %v383
      %v1604 = vunpack.c.l.b16 %v384
      %v1605 = vunpack.c.l.b16 %v385
      %v1606 = vunpack.c.l.b16 %v386
      %v1607 = vunpack.c.l.b16 %v387
      %v1608 = vunpack.c.l.b16 %v388
      %v1609 = vunpack.c.l.b16 %v389
      %v1610 = vunpack.c.l.b16 %v390
      %v1611 = vunpack.c.l.b16 %v391
      %v1612 = vunpack.c.l.b16 %v392
      %v1613 = vunpack.c.l.b16 %v393
      %v1614 = vunpack.c.l.b16 %v394
      %v1615 = vunpack.c.l.b16 %v395
      %v1616 = vunpack.c.l.b16 %v396
      %v1617 = vunpack.c.l.b16 %v397
      %v1618 = vunpack.c.l.b16 %v398
      %v1619 = vunpack.c.l.b16 %v399
      %v1620 = vunpack.c.l.b16 %v400
      %v1621 = vunpack.c.l.b16 %v401
      %v1622 = vunpack.c.l.b16 %v402
      %v1623 = vunpack.c.l.b16 %v403
      %v1624 = vunpack.c.l.b16 %v404
      %v1625 = vunpack.c.l.b16 %v405
      %v1626 = vunpack.c.l.b16 %v406
      %v1627 = vunpack.c.l.b16 %v407
      %v1628 = vunpack.c.l.b16 %v408
      %v1629 = vunpack.c.l.b16 %v409
      %v1630 = vunpack.c.l.b16 %v410
      %v1631 = vunpack.c.l.b16 %v411
      %v1632 = vunpack.c.l.b16 %v412
      %v1633 = vunpack.c.l.b16 %v413
      %v1634 = vunpack.c.l.b16 %v414
      %v1635 = vunpack.c.l.b16 %v415
      %v1636 = vunpack.c.l.b16 %v416
      %v1637 = vunpack.c.l.b16 %v417
      %v1638 = vunpack.c.l.b16 %v418
      %v1639 = vunpack.c.l.b16 %v419
      %v1640 = vunpack.c.l.b16 %v420
      %v1641 = vunpack.c.l.b16 %v421
      %v1642 = vunpack.c.l.b16 %v422
      %v1643 = vunpack.c.l.b16 %v423
      %v1644 = vunpack.c.l.b16 %v424
      %v1645 = vunpack.c.l.b16 %v425
      %v1646 = vunpack.c.l.b16 %v426
      %v1647 = vunpack.c.l.b16 %v427
      %v1648 = vunpack.c.l.b16 %v428
      %v1649 = vunpack.c.l.b16 %v429
      %v1650 = vunpack.c.l.b16 %v430
      %v1651 = vunpack.c.l.b16 %v431
      %v1652 = vunpack.c.l.b16 %v432
      %v1653 = vunpack.c.l.b16 %v433
      %v1654 = vunpack.c.l.b16 %v434
      %v1655 = vunpack.c.l.b16 %v435
      %v1656 = vunpack.c.l.b16 %v436
      %v1657 = vunpack.c.l.b16 %v437
      %v1658 = vunpack.c.l.b16 %v438
      %v1659 = vunpack.c.l.b16 %v439
      %v1660 = vunpack.c.l.b16 %v440
      %v1661 = vunpack.c.l.b16 %v441
      %v1662 = vunpack.c.l.b16 %v442
      %v1663 = vunpack.c.l.b16 %v443
      %v1664 = vunpack.c.l.b16 %v444
      %v1665 = vunpack.c.l.b16 %v445
      %v1666 = vunpack.c.l.b16 %v446
      %v1667 = vunpack.c.l.b16 %v447
      %v1668 = vunpack.c.l.b16 %v448
      %v1669 = vunpack.c.l.b16 %v449
      %v1670 = vunpack.c.l.b16 %v450
      %v1671 = vunpack.c.l.b16 %v451
      %v1672 = vunpack.c.l.b16 %v452
      %v1673 = vunpack.c.l.b16 %v453
      %v1674 = vunpack.c.l.b16 %v454
      %v1675 = vunpack.c.l.b16 %v455
      %v1676 = vunpack.c.l.b16 %v456
      %v1677 = vunpack.c.l.b16 %v457
      %v1678 = vunpack.c.l.b16 %v458
      %v1679 = vunpack.c.l.b16 %v459
      %v1680 = vunpack.c.l.b16 %v460
      %v1681 = vunpack.c.l.b16 %v461
      %v1682 = vunpack.c.l.b16 %v462
      %v1683 = vunpack.c.l.b16 %v463
      %v1684 = vunpack.c.l.b16 %v464
      %v1685 = vunpack.c.l.b16 %v465
      %v1686 = vunpack.c.l.b16 %v466
      %v1687 = vunpack.c.l.b16 %v467
      %v1688 = vunpack.c.l.b16 %v468
      %v1689 = vunpack.c.l.b16 %v469
      %v1690 = vunpack.c.l.b16 %v470
      %v1691 = vunpack.c.l.b16 %v471
      %v1692 = vunpack.c.l.b16 %v472
      %v1693 = vunpack.c.l.b16 %v473
      %v1694 = vunpack.c.l.b16 %v474
      %v1695 = vunpack.c.l.b16 %v475
      %v1696 = vunpack.c.l.b16 %v476
      %v1697 = vunpack.c.l.b16 %v477
      %v1698 = vunpack.c.l.b16 %v478
      %v1699 = vunpack.c.l.b16 %v479
      %v1700 = vunpack.c.l.b16 %v480
      %v1701 = vunpack.c.l.b16 %v481
      %v1702 = vunpack.c.l.b16 %v482
      %v1703 = vunpack.c.l.b16 %v483
      %v1704 = vunpack.c.l.b16 %v484
      %v1705 = vunpack.c.l.b16 %v485
      %v1706 = vunpack.c.l.b16 %v486
      %v1707 = vunpack.c.l.b16 %v487
      %v1708 = vunpack.c.l.b16 %v488
      %v1709 = vunpack.c.l.b16 %v489
      %v1710 = vunpack.c.l.b16 %v490
      %v1711 = vunpack.c.l.b16 %v491
      %v1712 = vunpack.c.l.b16 %v492
      %v1713 = vunpack.c.l.b16 %v493
      %v1714 = vunpack.c.l.b16 %v494
      %v1715 = vunpack.c.l.b16 %v495
      %v1716 = vunpack.c.l.b16 %v496
      %v1717 = vunpack.c.l.b16 %v497
      %v1718 = vunpack.c.l.b16 %v498
      %v1719 = vunpack.c.l.b16 %v499
      %v1720 = vunpack.c.l.b16 %v500
      %v1721 = vunpack.c.l.b16 %v501
      %v1722 = vunpack.c.l.b16 %v502
      %v1723 = vunpack.c.l.b16 %v503
      %v1724 = vunpack.c.l.b16 %v504
      %v1725 = vunpack.c.l.b16 %v505
      %v1726 = vunpack.c.l.b16 %v506
      %v1727 = vunpack.c.l.b16 %v507
      %v1728 = vunpack.c.l.b16 %v508
      %v1729 = vunpack.c.l.b16 %v509
      %v1730 = vunpack.c.l.b16 %v510
      %v1731 = vunpack.c.l.b16 %v511
      %v1732 = vunpack.c.l.b16 %v512
      %v1733 = vunpack.c.l.b16 %v513
      %v1734 = vunpack.c.l.b16 %v514
      %v1735 = vunpack.c.l.b16 %v515
      %v1736 = vunpack.c.l.b16 %v516
      %v1737 = vunpack.c.l.b16 %v517
      %v1738 = vunpack.c.l.b16 %v518
      %v1739 = vunpack.c.l.b16 %v519
      %v1740 = vunpack.c.l.b16 %v520
      %v1741 = vunpack.c.l.b16 %v521
      %v1742 = vunpack.c.l.b16 %v522
      %v1743 = vunpack.c.l.b16 %v523
      %v1744 = vunpack.c.l.b16 %v524
      %v1745 = vunpack.c.l.b16 %v525
      %v1746 = vunpack.c.l.b16 %v526
      %v1747 = vunpack.c.l.b16 %v527
      %v1748 = vunpack.c.l.b16 %v528
      %v1749 = vunpack.c.l.b16 %v529
      %v1750 = vunpack.c.l.b16 %v530
      %v1751 = vunpack.c.l.b16 %v531
      %v1752 = vunpack.c.l.b16 %v532
      %v1753 = vunpack.c.l.b16 %v533
      %v1754 = vunpack.c.l.b16 %v534
      %v1755 = vunpack.c.l.b16 %v535
      %v1756 = vunpack.c.l.b16 %v536
      %v1757 = vunpack.c.l.b16 %v537
      %v1758 = vunpack.c.l.b16 %v538
      %v1759 = vunpack.c.l.b16 %v539
      %v1760 = vunpack.c.l.b16 %v540
      %v1761 = vunpack.c.l.b16 %v541
      %v1762 = vunpack.c.l.b16 %v542
      %v1763 = vunpack.c.l.b16 %v543
      %v1764 = vunpack.c.l.b16 %v544
      %v1765 = vunpack.c.l.b16 %v545
      %v1766 = vunpack.c.l.b16 %v546
      %v1767 = vunpack.c.l.b16 %v547
      %v1768 = vunpack.c.l.b16 %v548
      %v1769 = vunpack.c.l.b16 %v549
      %v1770 = vunpack.c.l.b16 %v550
      %v1771 = vunpack.c.l.b16 %v551
      %v1772 = vunpack.c.l.b16 %v552
      %v1773 = vunpack.c.l.b16 %v553
      %v1774 = vunpack.c.l.b16 %v554
      %v1775 = vunpack.c.l.b16 %v555
      %v1776 = vunpack.c.l.b16 %v556
      %v1777 = vunpack.c.l.b16 %v557
      %v1778 = vunpack.c.l.b16 %v558
      %v1779 = vunpack.c.l.b16 %v559
      %v1780 = vunpack.c.l.b16 %v560
      %v1781 = vunpack.c.l.b16 %v561
      %v1782 = vunpack.c.l.b16 %v562
      %v1783 = vunpack.c.l.b16 %v563
      %v1784 = vunpack.c.l.b16 %v564
      %v1785 = vunpack.c.l.b16 %v565
      %v1786 = vunpack.c.l.b16 %v566
      %v1787 = vunpack.c.l.b16 %v567
      %v1788 = vunpack.c.l.b16 %v568
      %v1789 = vunpack.c.l.b16 %v569
      %v1790 = vunpack.c.l.b16 %v570
      %v1791 = vunpack.c.l.b16 %v571
      %v1792 = vunpack.c.l.b16 %v572
      %v1793 = vunpack.c.l.b16 %v573
      %v1794 = vunpack.c.l.b16 %v574
      %v1795 = vunpack.c.l.b16 %v575
      %v1796 = vunpack.c.l.b16 %v576
      %v1797 = vunpack.c.l.b16 %v577
      %v1798 = vunpack.c.l.b16 %v578
      %v1799 = vunpack.c.l.b16 %v579
      %v1800 = vunpack.c.l.b16 %v580
      %v1801 = vunpack.c.l.b16 %v581
      %v1802 = vunpack.c.l.b16 %v582
      %v1803 = vunpack.c.l.b16 %v583
      %v1804 = vunpack.c.l.b16 %v584
      %v1805 = vunpack.c.l.b16 %v585
      %v1806 = vunpack.c.l.b16 %v586
      %v1807 = vunpack.c.l.b16 %v587
      %v1808 = vunpack.c.l.b16 %v588
      %v1809 = vunpack.c.l.b16 %v589
      %v1810 = vunpack.c.l.b16 %v590
      %v1811 = vunpack.c.l.b16 %v591
      %v1812 = vunpack.c.l.b16 %v592
      %v1813 = vunpack.c.l.b16 %v593
      %v1814 = vunpack.c.l.b16 %v594
      %v1815 = vunpack.c.l.b16 %v595
      %v1816 = vunpack.c.l.b16 %v596
      %v1817 = vunpack.c.l.b16 %v597
      %v1818 = vunpack.c.l.b16 %v598
      %v1819 = vunpack.c.l.b16 %v599
      %v1820 = vunpack.c.l.b16 %v600
      %v1821 = vunpack.c.l.b16 %v601
      %v1822 = vunpack.c.l.b16 %v602
      %v1823 = vunpack.c.l.b16 %v603
      %v1824 = vunpack.c.l.b16 %v604
      %v1825 = vunpack.c.l.b16 %v605
      %v1826 = vunpack.c.l.b16 %v606
      %v1827 = vunpack.c.l.b16 %v607
      %v1828 = vunpack.c.l.b16 %v608
      %v1829 = vunpack.c.l.b16 %v609
      %v1830 = vunpack.c.l.b16 %v610
      %v1831 = vunpack.c.l.b16 %v611
      %v1832 = vunpack.c.l.b16 %v612
      %v1833 = vunpack.c.l.b16 %v613
      %v1834 = vunpack.c.l.b16 %v614
      %v1835 = vunpack.c.l.b16 %v615
      %v1836 = vunpack.c.l.b16 %v616
      %v1837 = vunpack.c.l.b16 %v617
      %v1838 = vunpack.c.l.b16 %v618
      %v1839 = vunpack.c.l.b16 %v619
      %v1840 = vunpack.c.l.b16 %v620
      %v1841 = vunpack.c.l.b16 %v621
      %v1842 = vunpack.c.l.b16 %v622
      %v1843 = vunpack.c.l.b16 %v623
      %v1844 = vunpack.c.l.b16 %v624
      %v1845 = vunpack.c.l.b16 %v625
      %v1846 = vunpack.c.l.b16 %v626
      %v1847 = vunpack.c.l.b16 %v627
      %v1848 = vunpack.c.l.b16 %v628
      %v1849 = vunpack.c.l.b16 %v629
      %v1850 = vunpack.c.l.b16 %v630
      %v1851 = vunpack.c.l.b16 %v631
      %v1852 = vunpack.c.l.b16 %v632
      %v1853 = vunpack.c.l.b16 %v633
      %v1854 = vunpack.c.l.b16 %v634
      %v1855 = vunpack.c.l.b16 %v635
      %v1856 = vunpack.c.l.b16 %v636
      %v1857 = vunpack.c.l.b16 %v637
      %v1858 = vunpack.c.l.b16 %v638
      %v1859 = vunpack.c.l.b16 %v639
      %v1860 = vunpack.c.l.b16 %v640
      %v1861 = vunpack.c.l.b16 %v641
      %v1862 = vunpack.c.l.b16 %v642
      %v1863 = vunpack.c.l.b16 %v643
      %v1864 = vunpack.c.l.b16 %v644
      %v1865 = vunpack.c.l.b16 %v645
      %v1866 = vunpack.c.l.b16 %v646
      %v1867 = vunpack.c.l.b16 %v647
      %v1868 = vunpack.c.l.b16 %v648
      %v1869 = vunpack.c.l.b16 %v649
      %v1870 = vunpack.c.l.b16 %v650
      %v1871 = vunpack.c.l.b16 %v651
      %v1872 = vunpack.c.l.b16 %v652
      %v1873 = vunpack.c.l.b16 %v653
      %v1874 = vunpack.c.l.b16 %v654
      %v1875 = vunpack.c.l.b16 %v655
      %v1876 = vunpack.c.l.b16 %v656
      %v1877 = vunpack.c.l.b16 %v657
      %v1878 = vunpack.c.l.b16 %v658
      %v1879 = vunpack.c.l.b16 %v659
      %v1880 = vunpack.c.l.b16 %v660
      %v1881 = vunpack.c.l.b16 %v661
      %v1882 = vunpack.c.l.b16 %v662
      %v1883 = vunpack.c.l.b16 %v663
      %v1884 = vunpack.c.l.b16 %v664
      %v1885 = vunpack.c.l.b16 %v665
      %v1886 = vunpack.c.l.b16 %v666
      %v1887 = vunpack.c.l.b16 %v667
      %v1888 = vunpack.c.l.b16 %v668
      %v1889 = vunpack.c.l.b16 %v669
      %v1890 = vunpack.c.l.b16 %v670
      %v1891 = vunpack.c.l.b16 %v671
      %v1892 = vunpack.c.l.b16 %v672
      %v1893 = vunpack.c.l.b16 %v673
      %v1894 = vunpack.c.l.b16 %v674
      %v1895 = vunpack.c.l.b16 %v675
      %v1896 = vunpack.c.l.b16 %v676
      %v1897 = vunpack.c.l.b16 %v677
      %v1898 = vunpack.c.l.b16 %v678
      %v1899 = vunpack.c.l.b16 %v679
      %v1900 = vunpack.c.l.b16 %v680
      %v1901 = vunpack.c.l.b16 %v681
      %v1902 = vunpack.c.l.b16 %v682
      %v1903 = vunpack.c.l.b16 %v683
      %v1904 = vunpack.c.l.b16 %v684
      %v1905 = vunpack.c.l.b16 %v685
      %v1906 = vunpack.c.l.b16 %v686
      %v1907 = vunpack.c.l.b16 %v687
      %v1908 = vunpack.c.l.b16 %v688
      %v1909 = vunpack.c.l.b16 %v689
      %v1910 = vunpack.c.l.b16 %v690
      %v1911 = vunpack.c.l.b16 %v691
      %v1912 = vunpack.c.l.b16 %v692
      %v1913 = vunpack.c.l.b16 %v693
      %v1914 = vunpack.c.l.b16 %v694
      %v1915 = vunpack.c.l.b16 %v695
      %v1916 = vunpack.c.l.b16 %v696
      %v1917 = vunpack.c.l.b16 %v697
      %v1918 = vunpack.c.l.b16 %v698
      %v1919 = vunpack.c.l.b16 %v699
      %v1920 = vunpack.c.l.b16 %v700
      %v1921 = vunpack.c.l.b16 %v701
      %v1922 = vunpack.c.l.b16 %v702
      %v1923 = vunpack.c.l.b16 %v703
      %v1924 = vunpack.c.l.b16 %v704
      %v1925 = vunpack.c.l.b16 %v705
      %v1926 = vunpack.c.l.b16 %v706
      %v1927 = vunpack.c.l.b16 %v707
      %v1928 = vunpack.c.l.b16 %v708
      %v1929 = vunpack.c.l.b16 %v709
      %v1930 = vunpack.c.l.b16 %v710
      %v1931 = vunpack.c.l.b16 %v711
      %v1932 = vunpack.c.l.b16 %v712
      %v1933 = vunpack.c.l.b16 %v713
      %v1934 = vunpack.c.l.b16 %v714
      %v1935 = vunpack.c.l.b16 %v715
      %v1936 = vunpack.c.l.b16 %v716
      %v1937 = vunpack.c.l.b16 %v717
      %v1938 = vunpack.c.l.b16 %v718
      %v1939 = vunpack.c.l.b16 %v719
      %v1940 = vunpack.c.l.b16 %v720
      %v1941 = vunpack.c.l.b16 %v721
      %v1942 = vunpack.c.l.b16 %v722
      %v1943 = vunpack.c.l.b16 %v723
      %v1944 = vunpack.c.l.b16 %v724
      %v1945 = vunpack.c.l.b16 %v725
      %v1946 = vunpack.c.l.b16 %v726
      %v1947 = vunpack.c.l.b16 %v727
      %v1948 = vunpack.c.l.b16 %v728
      %v1949 = vunpack.c.l.b16 %v729
      %v1950 = vunpack.c.l.b16 %v730
      %v1951 = vunpack.c.l.b16 %v731
      %v1952 = vunpack.c.l.b16 %v732
      %v1953 = vunpack.c.l.b16 %v733
      %v1954 = vunpack.c.l.b16 %v734
      %v1955 = vunpack.c.l.b16 %v735
      %v1956 = vunpack.c.l.b16 %v736
      %v1957 = vunpack.c.l.b16 %v737
      %v1958 = vunpack.c.l.b16 %v738
      %v1959 = vunpack.c.l.b16 %v739
      %v1960 = vunpack.c.l.b16 %v740
      %v1961 = vunpack.c.l.b16 %v741
      %v1962 = vunpack.c.l.b16 %v742
      %v1963 = vunpack.c.l.b16 %v743
      %v1964 = vunpack.c.l.b16 %v744
      %v1965 = vunpack.c.l.b16 %v745
      %v1966 = vunpack.c.l.b16 %v746
      %v1967 = vunpack.c.l.b16 %v747
      %v1968 = vunpack.c.l.b16 %v748
      %v1969 = vunpack.c.l.b16 %v749
      %v1970 = vunpack.c.l.b16 %v750
      %v1971 = vunpack.c.l.b16 %v751
      %v1972 = vunpack.c.l.b16 %v752
      %v1973 = vunpack.c.l.b16 %v753
      %v1974 = vunpack.c.l.b16 %v754
      %v1975 = vunpack.c.l.b16 %v755
      %v1976 = vunpack.c.l.b16 %v756
      %v1977 = vunpack.c.l.b16 %v757
      %v1978 = vunpack.c.l.b16 %v758
      %v1979 = vunpack.c.l.b16 %v759
      %v1980 = vunpack.c.l.b16 %v760
      %v1981 = vunpack.c.l.b16 %v761
      %v1982 = vpack.c.b16 %v1519, %v1518
      %v1983 = vpack.c.b16 %v1521, %v1520
      %v1984 = vpack.c.b16 %v1523, %v1522
      %v1985 = vpack.c.b16 %v1525, %v1524
      %v1986 = vpack.c.b16 %v1527, %v1526
      %v1987 = vpack.c.b16 %v1529, %v1528
      %v1988 = vpack.c.b16 %v1531, %v1530
      %v1989 = vpack.c.b16 %v1533, %v1532
      %v1990 = vpack.c.b16 %v1535, %v1534
      %v1991 = vpack.c.b16 %v1537, %v1536
      %v1992 = vpack.c.b16 %v1539, %v1538
      %v1993 = vpack.c.b16 %v1541, %v1540
      %v1994 = vpack.c.b16 %v1543, %v1542
      %v1995 = vpack.c.b16 %v1545, %v1544
      %v1996 = vpack.c.b16 %v1547, %v1546
      %v1997 = vpack.c.b16 %v1549, %v1548
      %v1998 = vpack.c.b16 %v1551, %v1550
      %v1999 = vpack.c.b16 %v1553, %v1552
      %v2000 = vpack.c.b16 %v1555, %v1554
      %v2001 = vpack.c.b16 %v1557, %v1556
      %v2002 = vpack.c.b16 %v1559, %v1558
      %v2003 = vpack.c.b16 %v1561, %v1560
      %v2004 = vpack.c.b16 %v1563, %v1562
      %v2005 = vpack.c.b16 %v1565, %v1564
      %v2006 = vpack.c.b16 %v1567, %v1566
      %v2007 = vpack.c.b16 %v1569, %v1568
      %v2008 = vpack.c.b16 %v1571, %v1570
      %v2009 = vpack.c.b16 %v1573, %v1572
      %v2010 = vpack.c.b16 %v1575, %v1574
      %v2011 = vpack.c.b16 %v1577, %v1576
      %v2012 = vpack.c.b16 %v1579, %v1578
      %v2013 = vpack.c.b16 %v1581, %v1580
      %v2014 = vpack.c.b16 %v1583, %v1582
      %v2015 = vpack.c.b16 %v1585, %v1584
      %v2016 = vpack.c.b16 %v1587, %v1586
      %v2017 = vpack.c.b16 %v1589, %v1588
      %v2018 = vpack.c.b16 %v1591, %v1590
      %v2019 = vpack.c.b16 %v1593, %v1592
      %v2020 = vpack.c.b16 %v1595, %v1594
      %v2021 = vpack.c.b16 %v1597, %v1596
      %v2022 = vpack.c.b16 %v1599, %v1598
      %v2023 = vpack.c.b16 %v1601, %v1600
      %v2024 = vpack.c.b16 %v1603, %v1602
      %v2025 = vpack.c.b16 %v1605, %v1604
      %v2026 = vpack.c.b16 %v1607, %v1606
      %v2027 = vpack.c.b16 %v1609, %v1608
      %v2028 = vpack.c.b16 %v1611, %v1610
      %v2029 = vpack.c.b16 %v1613, %v1612
      %v2030 = vpack.c.b16 %v1615, %v1614
      %v2031 = vpack.c.b16 %v1617, %v1616
      %v2032 = vpack.c.b16 %v1619, %v1618
      %v2033 = vpack.c.b16 %v1621, %v1620
      %v2034 = vpack.c.b16 %v1623, %v1622
      %v2035 = vpack.c.b16 %v1625, %v1624
      %v2036 = vpack.c.b16 %v1627, %v1626
      %v2037 = vpack.c.b16 %v1629, %v1628
      %v2038 = vpack.c.b16 %v1631, %v1630
      %v2039 = vpack.c.b16 %v1633, %v1632
      %v2040 = vpack.c.b16 %v1635, %v1634
      %v2041 = vpack.c.b16 %v1637, %v1636
      %v2042 = vpack.c.b16 %v1639, %v1638
      %v2043 = vpack.c.b16 %v1641, %v1640
      %v2044 = vpack.c.b16 %v1643, %v1642
      %v2045 = vpack.c.b16 %v1645, %v1644
      %v2046 = vpack.c.b16 %v1647, %v1646
      %v2047 = vpack.c.b16 %v1649, %v1648
      %v2048 = vpack.c.b16 %v1651, %v1650
      %v2049 = vpack.c.b16 %v1653, %v1652
      %v2050 = vpack.c.b16 %v1655, %v1654
      %v2051 = vpack.c.b16 %v1657, %v1656
      %v2052 = vpack.c.b16 %v1659, %v1658
      %v2053 = vpack.c.b16 %v1661, %v1660
      %v2054 = vpack.c.b16 %v1663, %v1662
      %v2055 = vpack.c.b16 %v1665, %v1664
      %v2056 = vpack.c.b16 %v1667, %v1666
      %v2057 = vpack.c.b16 %v1669, %v1668
      %v2058 = vpack.c.b16 %v1671, %v1670
      %v2059 = vpack.c.b16 %v1673, %v1672
      %v2060 = vpack.c.b16 %v1675, %v1674
      %v2061 = vpack.c.b16 %v1677, %v1676
      %v2062 = vpack.c.b16 %v1679, %v1678
      %v2063 = vpack.c.b16 %v1681, %v1680
      %v2064 = vpack.c.b16 %v1683, %v1682
      %v2065 = vpack.c.b16 %v1685, %v1684
      %v2066 = vpack.c.b16 %v1687, %v1686
      %v2067 = vpack.c.b16 %v1689, %v1688
      %v2068 = vpack.c.b16 %v1691, %v1690
      %v2069 = vpack.c.b16 %v1693, %v1692
      %v2070 = vpack.c.b16 %v1695, %v1694
      %v2071 = vpack.c.b16 %v1697, %v1696
      %v2072 = vpack.c.b16 %v1699, %v1698
      %v2073 = vpack.c.b16 %v1701, %v1700
      %v2074 = vpack.c.b16 %v1703, %v1702
      %v2075 = vpack.c.b16 %v1705, %v1704
      %v2076 = vpack.c.b16 %v1707, %v1706
      %v2077 = vpack.c.b16 %v1709, %v1708
      %v2078 = vpack.c.b16 %v1711, %v1710
      %v2079 = vpack.c.b16 %v1713, %v1712
      %v2080 = vpack.c.b16 %v1715, %v1714
      %v2081 = vpack.c.b16 %v1717, %v1716
      %v2082 = vpack.c.b16 %v1719, %v1718
      %v2083 = vpack.c.b16 %v1721, %v1720
      %v2084 = vpack.c.b16 %v1723, %v1722
      %v2085 = vpack.c.b16 %v1725, %v1724
      %v2086 = vpack.c.b16 %v1727, %v1726
      %v2087 = vpack.c.b16 %v1729, %v1728
      %v2088 = vpack.c.b16 %v1731, %v1730
      %v2089 = vpack.c.b16 %v1733, %v1732
      %v2090 = vpack.c.b16 %v1735, %v1734
      %v2091 = vpack.c.b16 %v1737, %v1736
      %v2092 = vpack.c.b16 %v1739, %v1738
      %v2093 = vpack.c.b16 %v1741, %v1740
      %v2094 = vpack.c.b16 %v1743, %v1742
      %v2095 = vpack.c.b16 %v1745, %v1744
      %v2096 = vpack.c.b16 %v1747, %v1746
      %v2097 = vpack.c.b16 %v1749, %v1748
      %v2098 = vpack.c.b16 %v1751, %v1750
      %v2099 = vpack.c.b16 %v1753, %v1752
      %v2100 = vpack.c.b16 %v1755, %v1754
      %v2101 = vpack.c.b16 %v1757, %v1756
      %v2102 = vpack.c.b16 %v1759, %v1758
      %v2103 = vpack.c.b16 %v1761, %v1760
      %v2104 = vpack.c.b16 %v1763, %v1762
      %v2105 = vpack.c.b16 %v1765, %v1764
      %v2106 = vpack.c.b16 %v1767, %v1766
      %v2107 = vpack.c.b16 %v1769, %v1768
      %v2108 = vpack.c.b16 %v1771, %v1770
      %v2109 = vpack.c.b16 %v1773, %v1772
      %v2110 = vpack.c.b16 %v1775, %v1774
      %v2111 = vpack.c.b16 %v1777, %v1776
      %v2112 = vpack.c.b16 %v1779, %v1778
      %v2113 = vpack.c.b16 %v1781, %v1780
      %v2114 = vpack.c.b16 %v1783, %v1782
      %v2115 = vpack.c.b16 %v1785, %v1784
      %v2116 = vpack.c.b16 %v1787, %v1786
      %v2117 = vpack.c.b16 %v1789, %v1788
      %v2118 = vpack.c.b16 %v1791, %v1790
      %v2119 = vpack.c.b16 %v1793, %v1792
      %v2120 = vpack.c.b16 %v1795, %v1794
      %v2121 = vpack.c.b16 %v1797, %v1796
      %v2122 = vpack.c.b16 %v1799, %v1798
      %v2123 = vpack.c.b16 %v1801, %v1800
      %v2124 = vpack.c.b16 %v1803, %v1802
      %v2125 = vpack.c.b16 %v1805, %v1804
      %v2126 = vpack.c.b16 %v1807, %v1806
      %v2127 = vpack.c.b16 %v1809, %v1808
      %v2128 = vpack.c.b16 %v1811, %v1810
      %v2129 = vpack.c.b16 %v1813, %v1812
      %v2130 = vpack.c.b16 %v1815, %v1814
      %v2131 = vpack.c.b16 %v1817, %v1816
      %v2132 = vpack.c.b16 %v1819, %v1818
      %v2133 = vpack.c.b16 %v1821, %v1820
      %v2134 = vpack.c.b16 %v1823, %v1822
      %v2135 = vpack.c.b16 %v1825, %v1824
      %v2136 = vpack.c.b16 %v1827, %v1826
      %v2137 = vpack.c.b16 %v1829, %v1828
      %v2138 = vpack.c.b16 %v1831, %v1830
      %v2139 = vpack.c.b16 %v1833, %v1832
      %v2140 = vpack.c.b16 %v1835, %v1834
      %v2141 = vpack.c.b16 %v1837, %v1836
      %v2142 = vpack.c.b16 %v1839, %v1838
      %v2143 = vpack.c.b16 %v1841, %v1840
      %v2144 = vpack.c.b16 %v1843, %v1842
      %v2145 = vpack.c.b16 %v1845, %v1844
      %v2146 = vpack.c.b16 %v1847, %v1846
      %v2147 = vpack.c.b16 %v1849, %v1848
      %v2148 = vpack.c.b16 %v1851, %v1850
      %v2149 = vpack.c.b16 %v1853, %v1852
      %v2150 = vpack.c.b16 %v1855, %v1854
      %v2151 = vpack.c.b16 %v1857, %v1856
      %v2152 = vpack.c.b16 %v1859, %v1858
      %v2153 = vpack.c.b16 %v1861, %v1860
      %v2154 = vpack.c.b16 %v1863, %v1862
      %v2155 = vpack.c.b16 %v1865, %v1864
      %v2156 = vpack.c.b16 %v1867, %v1866
      %v2157 = vpack.c.b16 %v1869, %v1868
      %v2158 = vpack.c.b16 %v1871, %v1870
      %v2159 = vpack.c.b16 %v1873, %v1872
      %v2160 = vpack.c.b16 %v1875, %v1874
      %v2161 = vpack.c.b16 %v1877, %v1876
      %v2162 = vpack.c.b16 %v1879, %v1878
      %v2163 = vpack.c.b16 %v1881, %v1880
      %v2164 = vpack.c.b16 %v1883, %v1882
      %v2165 = vpack.c.b16 %v1885, %v1884
      %v2166 = vpack.c.b16 %v1887, %v1886
      %v2167 = vpack.c.b16 %v1889, %v1888
      %v2168 = vpack.c.b16 %v1891, %v1890
      %v2169 = vpack.c.b16 %v1893, %v1892
      %v2170 = vpack.c.b16 %v1895, %v1894
      %v2171 = vpack.c.b16 %v1897, %v1896
      %v2172 = vpack.c.b16 %v1899, %v1898
      %v2173 = vpack.c.b16 %v1901, %v1900
      %v2174 = vpack.c.b16 %v1903, %v1902
      %v2175 = vpack.c.b16 %v1905, %v1904
      %v2176 = vpack.c.b16 %v1907, %v1906
      %v2177 = vpack.c.b16 %v1909, %v1908
      %v2178 = vpack.c.b16 %v1911, %v1910
      %v2179 = vpack.c.b16 %v1913, %v1912
      %v2180 = vpack.c.b16 %v1915, %v1914
      %v2181 = vpack.c.b16 %v1917, %v1916
      %v2182 = vpack.c.b16 %v1919, %v1918
      %v2183 = vpack.c.b16 %v1921, %v1920
      %v2184 = vpack.c.b16 %v1923, %v1922
      %v2185 = vpack.c.b16 %v1925, %v1924
      %v2186 = vpack.c.b16 %v1927, %v1926
      %v2187 = vpack.c.b16 %v1929, %v1928
      %v2188 = vpack.c.b16 %v1931, %v1930
      %v2189 = vpack.c.b16 %v1933, %v1932
      %v2190 = vpack.c.b16 %v1935, %v1934
      %v2191 = vpack.c.b16 %v1937, %v1936
      %v2192 = vpack.c.b16 %v1939, %v1938
      %v2193 = vpack.c.b16 %v1941, %v1940
      %v2194 = vpack.c.b16 %v1943, %v1942
      %v2195 = vpack.c.b16 %v1945, %v1944
      %v2196 = vpack.c.b16 %v1947, %v1946
      %v2197 = vpack.c.b16 %v1949, %v1948
      %v2198 = vpack.c.b16 %v1951, %v1950
      %v2199 = vpack.c.b16 %v1953, %v1952
      %v2200 = vpack.c.b16 %v1955, %v1954
      %v2201 = vpack.c.b16 %v1957, %v1956
      %v2202 = vpack.c.b16 %v1959, %v1958
      %v2203 = vpack.c.b16 %v1961, %v1960
      %v2204 = vpack.c.b16 %v1963, %v1962
      %v2205 = vpack.c.b16 %v1965, %v1964
      %v2206 = vpack.c.b16 %v1967, %v1966
      %v2207 = vpack.c.b16 %v1969, %v1968
      %v2208 = vpack.c.b16 %v1971, %v1970
      %v2209 = vpack.c.b16 %v1973, %v1972
      %v2210 = vpack.c.b16 %v1975, %v1974
      %v2211 = vpack.c.b16 %v1977, %v1976
      %v2212 = vpack.c.b16 %v1979, %v1978
      %v2213 = vpack.c.b16 %v1981, %v1980
      %2446 = vmatprep.subr.bf16.mxu0 0
      %2447 = vmatpush1.bf16.msra.mxu0 %v1982
      %2448 = vmatprep.subr.bf16.mxu0 0
      %2449 = vmatpush1.bf16.msra.mxu0 %v1983
      %2450 = vmatprep.subr.bf16.mxu0 0
      %2451 = vmatpush1.bf16.msra.mxu0 %v1984
      %2452 = vmatprep.subr.bf16.mxu0 0
      %2453 = vmatpush1.bf16.msra.mxu0 %v1985
      %2454 = vmatprep.subr.bf16.mxu0 0
      %2455 = vmatpush1.bf16.msra.mxu0 %v1986
      %2456 = vmatprep.subr.bf16.mxu0 0
      %2457 = vmatpush1.bf16.msra.mxu0 %v1987
      %2458 = vmatprep.subr.bf16.mxu0 0
      %2459 = vmatpush1.bf16.msra.mxu0 %v1988
      %2460 = vmatprep.subr.bf16.mxu0 0
      %2461 = vmatpush1.bf16.msra.mxu0 %v1989
      %2462 = vmatprep.subr.bf16.mxu0 0
      %2463 = vmatpush1.bf16.msra.mxu0 %v1990
      %2464 = vmatprep.subr.bf16.mxu0 0
      %2465 = vmatpush1.bf16.msra.mxu0 %v1991
      %2466 = vmatprep.subr.bf16.mxu0 0
      %2467 = vmatpush1.bf16.msra.mxu0 %v1992
      %2468 = vmatprep.subr.bf16.mxu0 0
      %2469 = vmatpush1.bf16.msra.mxu0 %v1993
      %2470 = vmatprep.subr.bf16.mxu0 0
      %2471 = vmatpush1.bf16.msra.mxu0 %v1994
      %2472 = vmatprep.subr.bf16.mxu0 0
      %2473 = vmatpush1.bf16.msra.mxu0 %v1995
      %2474 = vmatprep.subr.bf16.mxu0 0
      %2475 = vmatpush1.bf16.msra.mxu0 %v1996
      %2476 = vmatprep.subr.bf16.mxu0 0
      %2477 = vmatpush1.bf16.msra.mxu0 %v1997
      %2478 = vmatprep.mubr.bf16.mxu0 %v939
      %2479 = vmatmul.mubr.bf16.gmra.mrb[0].mxu0 %v938
      %v2480 = vpop.f32.mrb[0].mxu0
      %v2481 = vadd.f32 0.0, %v2480
      %v2482 = vpop.f32.mrb[0].mxu0
      %v2483 = vpop.f32.mrb[0].mxu0
      %v2484 = vadd.f32 0.0, %v2483
      %v2485 = vpop.f32.mrb[0].mxu0
      %2486 = vmatprep.mubr.bf16.mxu0 %v968
      %2487 = vmatmul.mubr.bf16.gmra.mrb[0].mxu0 %v967
      %v2488 = vpop.f32.mrb[0].mxu0
      %v2489 = vadd.f32 0.0, %v2488
      %v2490 = vpop.f32.mrb[0].mxu0
      %v2491 = vpop.f32.mrb[0].mxu0
      %v2492 = vadd.f32 0.0, %v2491
      %v2493 = vpop.f32.mrb[0].mxu0
      %2494 = vdwg.mxu0
      %2495 = vmatprep.subr.bf16.mxu0 0
      %2496 = vmatpush1.bf16.msra.mxu0 %v1998
      %2497 = vmatprep.subr.bf16.mxu0 0
      %2498 = vmatpush1.bf16.msra.mxu0 %v1999
      %2499 = vmatprep.subr.bf16.mxu0 0
      %2500 = vmatpush1.bf16.msra.mxu0 %v2000
      %2501 = vmatprep.subr.bf16.mxu0 0
      %2502 = vmatpush1.bf16.msra.mxu0 %v2001
      %2503 = vmatprep.subr.bf16.mxu0 0
      %2504 = vmatpush1.bf16.msra.mxu0 %v2002
      %2505 = vmatprep.subr.bf16.mxu0 0
      %2506 = vmatpush1.bf16.msra.mxu0 %v2003
      %2507 = vmatprep.subr.bf16.mxu0 0
      %2508 = vmatpush1.bf16.msra.mxu0 %v2004
      %2509 = vmatprep.subr.bf16.mxu0 0
      %2510 = vmatpush1.bf16.msra.mxu0 %v2005
      %2511 = vmatprep.subr.bf16.mxu0 0
      %2512 = vmatpush1.bf16.msra.mxu0 %v2006
      %2513 = vmatprep.subr.bf16.mxu0 0
      %2514 = vmatpush1.bf16.msra.mxu0 %v2007
      %2515 = vmatprep.subr.bf16.mxu0 0
      %2516 = vmatpush1.bf16.msra.mxu0 %v2008
      %2517 = vmatprep.subr.bf16.mxu0 0
      %2518 = vmatpush1.bf16.msra.mxu0 %v2009
      %2519 = vmatprep.subr.bf16.mxu0 0
      %2520 = vmatpush1.bf16.msra.mxu0 %v2010
      %2521 = vmatprep.subr.bf16.mxu0 0
      %2522 = vmatpush1.bf16.msra.mxu0 %v2011
      %2523 = vmatprep.subr.bf16.mxu0 0
      %2524 = vmatpush1.bf16.msra.mxu0 %v2012
      %2525 = vmatprep.subr.bf16.mxu0 0
      %2526 = vmatpush1.bf16.msra.mxu0 %v2013
      %2527 = vmatprep.mubr.bf16.mxu0 %v941
      %2528 = vmatmul.mubr.bf16.gmra.mrb[0].mxu0 %v940
      %v2529 = vpop.f32.mrb[0].mxu0
      %v2530 = vadd.f32 %v2481, %v2529
      %v2531 = vpop.f32.mrb[0].mxu0
      %v2532 = vpop.f32.mrb[0].mxu0
      %v2533 = vadd.f32 %v2484, %v2532
      %v2534 = vpop.f32.mrb[0].mxu0
      %2535 = vmatprep.mubr.bf16.mxu0 %v970
      %2536 = vmatmul.mubr.bf16.gmra.mrb[0].mxu0 %v969
      %v2537 = vpop.f32.mrb[0].mxu0
      %v2538 = vadd.f32 %v2489, %v2537
      %v2539 = vpop.f32.mrb[0].mxu0
      %v2540 = vpop.f32.mrb[0].mxu0
      %v2541 = vadd.f32 %v2492, %v2540
      %v2542 = vpop.f32.mrb[0].mxu0
      %2543 = vdwg.mxu0
      %2544 = vmatprep.subr.bf16.mxu0 0
      %2545 = vmatpush1.bf16.msra.mxu0 %v2014
      %2546 = vmatprep.subr.bf16.mxu0 0
      %2547 = vmatpush1.bf16.msra.mxu0 %v2015
      %2548 = vmatprep.subr.bf16.mxu0 0
      %2549 = vmatpush1.bf16.msra.mxu0 %v2016
      %2550 = vmatprep.subr.bf16.mxu0 0
      %2551 = vmatpush1.bf16.msra.mxu0 %v2017
      %2552 = vmatprep.subr.bf16.mxu0 0
      %2553 = vmatpush1.bf16.msra.mxu0 %v2018
      %2554 = vmatprep.subr.bf16.mxu0 0
      %2555 = vmatpush1.bf16.msra.mxu0 %v2019
      %2556 = vmatprep.subr.bf16.mxu0 0
      %2557 = vmatpush1.bf16.msra.mxu0 %v2020
      %2558 = vmatprep.subr.bf16.mxu0 0
      %2559 = vmatpush1.bf16.msra.mxu0 %v2021
      %2560 = vmatprep.subr.bf16.mxu0 0
      %2561 = vmatpush1.bf16.msra.mxu0 %v2022
      %2562 = vmatprep.subr.bf16.mxu0 0
      %2563 = vmatpush1.bf16.msra.mxu0 %v2023
      %2564 = vmatprep.subr.bf16.mxu0 0
      %2565 = vmatpush1.bf16.msra.mxu0 %v2024
      %2566 = vmatprep.subr.bf16.mxu0 0
      %2567 = vmatpush1.bf16.msra.mxu0 %v2025
      %2568 = vmatprep.subr.bf16.mxu0 0
      %2569 = vmatpush1.bf16.msra.mxu0 %v2026
      %2570 = vmatprep.subr.bf16.mxu0 0
      %2571 = vmatpush1.bf16.msra.mxu0 %v2027
      %2572 = vmatprep.subr.bf16.mxu0 0
      %2573 = vmatpush1.bf16.msra.mxu0 %v2028
      %2574 = vmatprep.subr.bf16.mxu0 0
      %2575 = vmatpush1.bf16.msra.mxu0 %v2029
      %2576 = vmatprep.mubr.bf16.mxu0 %v943
      %2577 = vmatmul.mubr.bf16.gmra.mrb[0].mxu0 %v942
      %v2578 = vpop.f32.mrb[0].mxu0
      %v2579 = vadd.f32 %v2530, %v2578
      %v2580 = vpop.f32.mrb[0].mxu0
      %v2581 = vpop.f32.mrb[0].mxu0
      %v2582 = vadd.f32 %v2533, %v2581
      %v2583 = vpop.f32.mrb[0].mxu0
      %2584 = vmatprep.mubr.bf16.mxu0 %v972
      %2585 = vmatmul.mubr.bf16.gmra.mrb[0].mxu0 %v971
      %v2586 = vpop.f32.mrb[0].mxu0
      %v2587 = vadd.f32 %v2538, %v2586
      %v2588 = vpop.f32.mrb[0].mxu0
      %v2589 = vpop.f32.mrb[0].mxu0
      %v2590 = vadd.f32 %v2541, %v2589
      %v2591 = vpop.f32.mrb[0].mxu0
      %2592 = vdwg.mxu0
      %2593 = vmatprep.subr.bf16.mxu0 0
      %2594 = vmatpush1.bf16.msra.mxu0 %v2030
      %2595 = vmatprep.subr.bf16.mxu0 0
      %2596 = vmatpush1.bf16.msra.mxu0 %v2031
      %2597 = vmatprep.subr.bf16.mxu0 0
      %2598 = vmatpush1.bf16.msra.mxu0 %v2032
      %2599 = vmatprep.subr.bf16.mxu0 0
      %2600 = vmatpush1.bf16.msra.mxu0 %v2033
      %2601 = vmatprep.subr.bf16.mxu0 0
      %2602 = vmatpush1.bf16.msra.mxu0 %v2034
      %2603 = vmatprep.subr.bf16.mxu0 0
      %2604 = vmatpush1.bf16.msra.mxu0 %v2035
      %2605 = vmatprep.subr.bf16.mxu0 0
      %2606 = vmatpush1.bf16.msra.mxu0 %v2036
      %2607 = vmatprep.subr.bf16.mxu0 0
      %2608 = vmatpush1.bf16.msra.mxu0 %v2037
      %2609 = vmatprep.subr.bf16.mxu0 0
      %2610 = vmatpush1.bf16.msra.mxu0 %v2038
      %2611 = vmatprep.subr.bf16.mxu0 0
      %2612 = vmatpush1.bf16.msra.mxu0 %v2039
      %2613 = vmatprep.subr.bf16.mxu0 0
      %2614 = vmatpush1.bf16.msra.mxu0 %v2040
      %2615 = vmatprep.subr.bf16.mxu0 0
      %2616 = vmatpush1.bf16.msra.mxu0 %v2041
      %2617 = vmatprep.subr.bf16.mxu0 0
      %2618 = vmatpush1.bf16.msra.mxu0 %v2042
      %2619 = vmatprep.subr.bf16.mxu0 0
      %2620 = vmatpush1.bf16.msra.mxu0 %v2043
      %2621 = vmatprep.subr.bf16.mxu0 0
      %2622 = vmatpush1.bf16.msra.mxu0 %v2044
      %2623 = vmatprep.subr.bf16.mxu0 0
      %2624 = vmatpush1.bf16.msra.mxu0 %v2045
      %2625 = vmatprep.mubr.bf16.mxu0 %v945
      %2626 = vmatmul.mubr.bf16.gmra.mrb[0].mxu0 %v944
      %v2627 = vpop.f32.mrb[0].mxu0
      %v2628 = vadd.f32 %v2579, %v2627
      %v2629 = vpop.f32.mrb[0].mxu0
      %v2630 = vpop.f32.mrb[0].mxu0
      %v2631 = vadd.f32 %v2582, %v2630
      %v2632 = vpop.f32.mrb[0].mxu0
      %2633 = vmatprep.mubr.bf16.mxu0 %v974
      %2634 = vmatmul.mubr.bf16.gmra.mrb[0].mxu0 %v973
      %v2635 = vpop.f32.mrb[0].mxu0
      %v2636 = vadd.f32 %v2587, %v2635
      %v2637 = vpop.f32.mrb[0].mxu0
      %v2638 = vpop.f32.mrb[0].mxu0
      %v2639 = vadd.f32 %v2590, %v2638
      %v2640 = vpop.f32.mrb[0].mxu0
      %2641 = vdwg.mxu0
      %2642 = vmatprep.subr.bf16.mxu0 0
      %2643 = vmatpush1.bf16.msra.mxu0 %v2046
      %2644 = vmatprep.subr.bf16.mxu0 0
      %2645 = vmatpush1.bf16.msra.mxu0 %v2047
      %2646 = vmatprep.subr.bf16.mxu0 0
      %2647 = vmatpush1.bf16.msra.mxu0 %v2048
      %2648 = vmatprep.subr.bf16.mxu0 0
      %2649 = vmatpush1.bf16.msra.mxu0 %v2049
      %2650 = vmatprep.subr.bf16.mxu0 0
      %2651 = vmatpush1.bf16.msra.mxu0 %v2050
      %2652 = vmatprep.subr.bf16.mxu0 0
      %2653 = vmatpush1.bf16.msra.mxu0 %v2051
      %2654 = vmatprep.subr.bf16.mxu0 0
      %2655 = vmatpush1.bf16.msra.mxu0 %v2052
      %2656 = vmatprep.subr.bf16.mxu0 0
      %2657 = vmatpush1.bf16.msra.mxu0 %v2053
      %2658 = vmatprep.subr.bf16.mxu0 0
      %2659 = vmatpush1.bf16.msra.mxu0 %v2054
      %2660 = vmatprep.subr.bf16.mxu0 0
      %2661 = vmatpush1.bf16.msra.mxu0 %v2055
      %2662 = vmatprep.subr.bf16.mxu0 0
      %2663 = vmatpush1.bf16.msra.mxu0 %v2056
      %2664 = vmatprep.subr.bf16.mxu0 0
      %2665 = vmatpush1.bf16.msra.mxu0 %v2057
      %2666 = vmatprep.subr.bf16.mxu0 0
      %2667 = vmatpush1.bf16.msra.mxu0 %v2058
      %2668 = vmatprep.subr.bf16.mxu0 0
      %2669 = vmatpush1.bf16.msra.mxu0 %v2059
      %2670 = vmatprep.subr.bf16.mxu0 0
      %2671 = vmatpush1.bf16.msra.mxu0 %v2060
      %2672 = vmatprep.subr.bf16.mxu0 0
      %2673 = vmatpush1.bf16.msra.mxu0 %v2061
      %2674 = vmatprep.mubr.bf16.mxu0 %v947
      %2675 = vmatmul.mubr.bf16.gmra.mrb[0].mxu0 %v946
      %v2676 = vpop.f32.mrb[0].mxu0
      %v2677 = vadd.f32 %v2628, %v2676
      %v2678 = vpop.f32.mrb[0].mxu0
      %v2679 = vpop.f32.mrb[0].mxu0
      %v2680 = vadd.f32 %v2631, %v2679
      %v2681 = vpop.f32.mrb[0].mxu0
      %2682 = vmatprep.mubr.bf16.mxu0 %v976
      %2683 = vmatmul.mubr.bf16.gmra.mrb[0].mxu0 %v975
      %v2684 = vpop.f32.mrb[0].mxu0
      %v2685 = vadd.f32 %v2636, %v2684
      %v2686 = vpop.f32.mrb[0].mxu0
      %v2687 = vpop.f32.mrb[0].mxu0
      %v2688 = vadd.f32 %v2639, %v2687
      %v2689 = vpop.f32.mrb[0].mxu0
      %2690 = vdwg.mxu0
      %2691 = vmatprep.subr.bf16.mxu0 0
      %2692 = vmatpush1.bf16.msra.mxu0 %v2062
      %2693 = vmatprep.subr.bf16.mxu0 0
      %2694 = vmatpush1.bf16.msra.mxu0 %v2063
      %2695 = vmatprep.subr.bf16.mxu0 0
      %2696 = vmatpush1.bf16.msra.mxu0 %v2064
      %2697 = vmatprep.subr.bf16.mxu0 0
      %2698 = vmatpush1.bf16.msra.mxu0 %v2065
      %2699 = vmatprep.subr.bf16.mxu0 0
      %2700 = vmatpush1.bf16.msra.mxu0 %v2066
      %2701 = vmatprep.subr.bf16.mxu0 0
      %2702 = vmatpush1.bf16.msra.mxu0 %v2067
      %2703 = vmatprep.subr.bf16.mxu0 0
      %2704 = vmatpush1.bf16.msra.mxu0 %v2068
      %2705 = vmatprep.subr.bf16.mxu0 0
      %2706 = vmatpush1.bf16.msra.mxu0 %v2069
      %2707 = vmatprep.subr.bf16.mxu0 0
      %2708 = vmatpush1.bf16.msra.mxu0 %v2070
      %2709 = vmatprep.subr.bf16.mxu0 0
      %2710 = vmatpush1.bf16.msra.mxu0 %v2071
      %2711 = vmatprep.subr.bf16.mxu0 0
      %2712 = vmatpush1.bf16.msra.mxu0 %v2072
      %2713 = vmatprep.subr.bf16.mxu0 0
      %2714 = vmatpush1.bf16.msra.mxu0 %v2073
      %2715 = vmatprep.subr.bf16.mxu0 0
      %2716 = vmatpush1.bf16.msra.mxu0 %v2074
      %2717 = vmatprep.subr.bf16.mxu0 0
      %2718 = vmatpush1.bf16.msra.mxu0 %v2075
      %2719 = vmatprep.subr.bf16.mxu0 0
      %2720 = vmatpush1.bf16.msra.mxu0 %v2076
      %2721 = vmatprep.subr.bf16.mxu0 0
      %2722 = vmatpush1.bf16.msra.mxu0 %v2077
      %2723 = vmatprep.mubr.bf16.mxu0 %v949
      %2724 = vmatmul.mubr.bf16.gmra.mrb[0].mxu0 %v948
      %v2725 = vpop.f32.mrb[0].mxu0
      %v2726 = vadd.f32 %v2677, %v2725
      %v2727 = vpop.f32.mrb[0].mxu0
      %v2728 = vpop.f32.mrb[0].mxu0
      %v2729 = vadd.f32 %v2680, %v2728
      %v2730 = vpop.f32.mrb[0].mxu0
      %2731 = vmatprep.mubr.bf16.mxu0 %v978
      %2732 = vmatmul.mubr.bf16.gmra.mrb[0].mxu0 %v977
      %v2733 = vpop.f32.mrb[0].mxu0
      %v2734 = vadd.f32 %v2685, %v2733
      %v2735 = vpop.f32.mrb[0].mxu0
      %v2736 = vpop.f32.mrb[0].mxu0
      %v2737 = vadd.f32 %v2688, %v2736
      %v2738 = vpop.f32.mrb[0].mxu0
      %2739 = vdwg.mxu0
      %2740 = vmatprep.subr.bf16.mxu0 0
      %2741 = vmatpush1.bf16.msra.mxu0 %v2078
      %2742 = vmatprep.subr.bf16.mxu0 0
      %2743 = vmatpush1.bf16.msra.mxu0 %v2079
      %2744 = vmatprep.subr.bf16.mxu0 0
      %2745 = vmatpush1.bf16.msra.mxu0 %v2080
      %2746 = vmatprep.subr.bf16.mxu0 0
      %2747 = vmatpush1.bf16.msra.mxu0 %v2081
      %2748 = vmatprep.subr.bf16.mxu0 0
      %2749 = vmatpush1.bf16.msra.mxu0 %v2082
      %2750 = vmatprep.subr.bf16.mxu0 0
      %2751 = vmatpush1.bf16.msra.mxu0 %v2083
      %2752 = vmatprep.subr.bf16.mxu0 0
      %2753 = vmatpush1.bf16.msra.mxu0 %v2084
      %2754 = vmatprep.subr.bf16.mxu0 0
      %2755 = vmatpush1.bf16.msra.mxu0 %v2085
      %2756 = vmatprep.subr.bf16.mxu0 0
      %2757 = vmatpush1.bf16.msra.mxu0 %v2086
      %2758 = vmatprep.subr.bf16.mxu0 0
      %2759 = vmatpush1.bf16.msra.mxu0 %v2087
      %2760 = vmatprep.subr.bf16.mxu0 0
      %2761 = vmatpush1.bf16.msra.mxu0 %v2088
      %2762 = vmatprep.subr.bf16.mxu0 0
      %2763 = vmatpush1.bf16.msra.mxu0 %v2089
      %2764 = vmatprep.subr.bf16.mxu0 0
      %2765 = vmatpush1.bf16.msra.mxu0 %v2090
      %2766 = vmatprep.subr.bf16.mxu0 0
      %2767 = vmatpush1.bf16.msra.mxu0 %v2091
      %2768 = vmatprep.subr.bf16.mxu0 0
      %2769 = vmatpush1.bf16.msra.mxu0 %v2092
      %2770 = vmatprep.subr.bf16.mxu0 0
      %2771 = vmatpush1.bf16.msra.mxu0 %v2093
      %2772 = vmatprep.mubr.bf16.mxu0 %v951
      %2773 = vmatmul.mubr.bf16.gmra.mrb[0].mxu0 %v950
      %v2774 = vpop.f32.mrb[0].mxu0
      %v2775 = vadd.f32 %v2726, %v2774
      %v2776 = vpop.f32.mrb[0].mxu0
      %v2777 = vpop.f32.mrb[0].mxu0
      %v2778 = vadd.f32 %v2729, %v2777
      %v2779 = vpop.f32.mrb[0].mxu0
      %2780 = vmatprep.mubr.bf16.mxu0 %v980
      %2781 = vmatmul.mubr.bf16.gmra.mrb[0].mxu0 %v979
      %v2782 = vpop.f32.mrb[0].mxu0
      %v2783 = vadd.f32 %v2734, %v2782
      %v2784 = vpop.f32.mrb[0].mxu0
      %v2785 = vpop.f32.mrb[0].mxu0
      %v2786 = vadd.f32 %v2737, %v2785
      %v2787 = vpop.f32.mrb[0].mxu0
      %2788 = vdwg.mxu0
      %2789 = vmatprep.subr.bf16.mxu0 0
      %2790 = vmatpush1.bf16.msra.mxu0 %v2094
      %2791 = vmatprep.subr.bf16.mxu0 0
      %2792 = vmatpush1.bf16.msra.mxu0 %v2095
      %2793 = vmatprep.subr.bf16.mxu0 0
      %2794 = vmatpush1.bf16.msra.mxu0 %v2096
      %2795 = vmatprep.subr.bf16.mxu0 0
      %2796 = vmatpush1.bf16.msra.mxu0 %v2097
      %2797 = vmatprep.subr.bf16.mxu0 0
      %2798 = vmatpush1.bf16.msra.mxu0 %v2098
      %2799 = vmatprep.subr.bf16.mxu0 0
      %2800 = vmatpush1.bf16.msra.mxu0 %v2099
      %2801 = vmatprep.subr.bf16.mxu0 0
      %2802 = vmatpush1.bf16.msra.mxu0 %v2100
      %2803 = vmatprep.subr.bf16.mxu0 0
      %2804 = vmatpush1.bf16.msra.mxu0 %v2101
      %2805 = vmatprep.subr.bf16.mxu0 0
      %2806 = vmatpush1.bf16.msra.mxu0 %v2102
      %2807 = vmatprep.subr.bf16.mxu0 0
      %2808 = vmatpush1.bf16.msra.mxu0 %v2103
      %2809 = vmatprep.subr.bf16.mxu0 0
      %2810 = vmatpush1.bf16.msra.mxu0 %v2104
      %2811 = vmatprep.subr.bf16.mxu0 0
      %2812 = vmatpush1.bf16.msra.mxu0 %v2105
      %2813 = vmatprep.subr.bf16.mxu0 0
      %2814 = vmatpush1.bf16.msra.mxu0 %v2106
      %2815 = vmatprep.subr.bf16.mxu0 0
      %2816 = vmatpush1.bf16.msra.mxu0 %v2107
      %2817 = vmatprep.subr.bf16.mxu0 0
      %2818 = vmatpush1.bf16.msra.mxu0 %v2108
      %2819 = vmatprep.subr.bf16.mxu0 0
      %2820 = vmatpush1.bf16.msra.mxu0 %v2109
      %2821 = vmatprep.mubr.bf16.mxu0 %v953
      %2822 = vmatmul.mubr.bf16.gmra.mrb[0].mxu0 %v952
      %v2823 = vpop.f32.mrb[0].mxu0
      %v2824 = vadd.f32 %v2775, %v2823
      %v2825 = vpop.f32.mrb[0].mxu0
      %v2826 = vpop.f32.mrb[0].mxu0
      %v2827 = vadd.f32 %v2778, %v2826
      %v2828 = vpop.f32.mrb[0].mxu0
      %2829 = vmatprep.mubr.bf16.mxu0 %v982
      %2830 = vmatmul.mubr.bf16.gmra.mrb[0].mxu0 %v981
      %v2831 = vpop.f32.mrb[0].mxu0
      %v2832 = vadd.f32 %v2783, %v2831
      %v2833 = vpop.f32.mrb[0].mxu0
      %v2834 = vpop.f32.mrb[0].mxu0
      %v2835 = vadd.f32 %v2786, %v2834
      %v2836 = vpop.f32.mrb[0].mxu0
      %2837 = vdwg.mxu0
      %2838 = vmatprep.subr.bf16.mxu0 0
      %2839 = vmatpush1.bf16.msra.mxu0 %v2110
      %2840 = vmatprep.subr.bf16.mxu0 0
      %2841 = vmatpush1.bf16.msra.mxu0 %v2111
      %2842 = vmatprep.subr.bf16.mxu0 0
      %2843 = vmatpush1.bf16.msra.mxu0 %v2112
      %2844 = vmatprep.subr.bf16.mxu0 0
      %2845 = vmatpush1.bf16.msra.mxu0 %v2113
      %2846 = vmatprep.subr.bf16.mxu0 0
      %2847 = vmatpush1.bf16.msra.mxu0 %v2114
      %2848 = vmatprep.subr.bf16.mxu0 0
      %2849 = vmatpush1.bf16.msra.mxu0 %v2115
      %2850 = vmatprep.subr.bf16.mxu0 0
      %2851 = vmatpush1.bf16.msra.mxu0 %v2116
      %2852 = vmatprep.subr.bf16.mxu0 0
      %2853 = vmatpush1.bf16.msra.mxu0 %v2117
      %2854 = vmatprep.subr.bf16.mxu0 0
      %2855 = vmatpush1.bf16.msra.mxu0 %v2118
      %2856 = vmatprep.subr.bf16.mxu0 0
      %2857 = vmatpush1.bf16.msra.mxu0 %v2119
      %2858 = vmatprep.subr.bf16.mxu0 0
      %2859 = vmatpush1.bf16.msra.mxu0 %v2120
      %2860 = vmatprep.subr.bf16.mxu0 0
      %2861 = vmatpush1.bf16.msra.mxu0 %v2121
      %2862 = vmatprep.subr.bf16.mxu0 0
      %2863 = vmatpush1.bf16.msra.mxu0 %v2122
      %2864 = vmatprep.subr.bf16.mxu0 0
      %2865 = vmatpush1.bf16.msra.mxu0 %v2123
      %2866 = vmatprep.subr.bf16.mxu0 0
      %2867 = vmatpush1.bf16.msra.mxu0 %v2124
      %2868 = vmatprep.subr.bf16.mxu0 0
      %2869 = vmatpush1.bf16.msra.mxu0 %v2125
      %2870 = vmatprep.mubr.bf16.mxu0 %v955
      %2871 = vmatmul.mubr.bf16.gmra.mrb[0].mxu0 %v954
      %v2872 = vpop.f32.mrb[0].mxu0
      %v2873 = vadd.f32 %v2824, %v2872
      %v2874 = vpop.f32.mrb[0].mxu0
      %v2875 = vpop.f32.mrb[0].mxu0
      %v2876 = vadd.f32 %v2827, %v2875
      %v2877 = vpop.f32.mrb[0].mxu0
      %2878 = vmatprep.mubr.bf16.mxu0 %v984
      %2879 = vmatmul.mubr.bf16.gmra.mrb[0].mxu0 %v983
      %v2880 = vpop.f32.mrb[0].mxu0
      %v2881 = vadd.f32 %v2832, %v2880
      %v2882 = vpop.f32.mrb[0].mxu0
      %v2883 = vpop.f32.mrb[0].mxu0
      %v2884 = vadd.f32 %v2835, %v2883
      %v2885 = vpop.f32.mrb[0].mxu0
      %2886 = vdwg.mxu0
      %2887 = vmatprep.subr.bf16.mxu0 0
      %2888 = vmatpush1.bf16.msra.mxu0 %v2126
      %2889 = vmatprep.subr.bf16.mxu0 0
      %2890 = vmatpush1.bf16.msra.mxu0 %v2127
      %2891 = vmatprep.subr.bf16.mxu0 0
      %2892 = vmatpush1.bf16.msra.mxu0 %v2128
      %2893 = vmatprep.subr.bf16.mxu0 0
      %2894 = vmatpush1.bf16.msra.mxu0 %v2129
      %2895 = vmatprep.subr.bf16.mxu0 0
      %2896 = vmatpush1.bf16.msra.mxu0 %v2130
      %2897 = vmatprep.subr.bf16.mxu0 0
      %2898 = vmatpush1.bf16.msra.mxu0 %v2131
      %2899 = vmatprep.subr.bf16.mxu0 0
      %2900 = vmatpush1.bf16.msra.mxu0 %v2132
      %2901 = vmatprep.subr.bf16.mxu0 0
      %2902 = vmatpush1.bf16.msra.mxu0 %v2133
      %2903 = vmatprep.subr.bf16.mxu0 0
      %2904 = vmatpush1.bf16.msra.mxu0 %v2134
      %2905 = vmatprep.subr.bf16.mxu0 0
      %2906 = vmatpush1.bf16.msra.mxu0 %v2135
      %2907 = vmatprep.subr.bf16.mxu0 0
      %2908 = vmatpush1.bf16.msra.mxu0 %v2136
      %2909 = vmatprep.subr.bf16.mxu0 0
      %2910 = vmatpush1.bf16.msra.mxu0 %v2137
      %2911 = vmatprep.subr.bf16.mxu0 0
      %2912 = vmatpush1.bf16.msra.mxu0 %v2138
      %2913 = vmatprep.subr.bf16.mxu0 0
      %2914 = vmatpush1.bf16.msra.mxu0 %v2139
      %2915 = vmatprep.subr.bf16.mxu0 0
      %2916 = vmatpush1.bf16.msra.mxu0 %v2140
      %2917 = vmatprep.subr.bf16.mxu0 0
      %2918 = vmatpush1.bf16.msra.mxu0 %v2141
      %2919 = vmatprep.mubr.bf16.mxu0 %v957
      %2920 = vmatmul.mubr.bf16.gmra.mrb[0].mxu0 %v956
      %v2921 = vpop.f32.mrb[0].mxu0
      %v2922 = vadd.f32 %v2873, %v2921
      %v2923 = vpop.f32.mrb[0].mxu0
      %v2924 = vpop.f32.mrb[0].mxu0
      %v2925 = vadd.f32 %v2876, %v2924
      %v2926 = vpop.f32.mrb[0].mxu0
      %2927 = vmatprep.mubr.bf16.mxu0 %v986
      %2928 = vmatmul.mubr.bf16.gmra.mrb[0].mxu0 %v985
      %v2929 = vpop.f32.mrb[0].mxu0
      %v2930 = vadd.f32 %v2881, %v2929
      %v2931 = vpop.f32.mrb[0].mxu0
      %v2932 = vpop.f32.mrb[0].mxu0
      %v2933 = vadd.f32 %v2884, %v2932
      %v2934 = vpop.f32.mrb[0].mxu0
      %2935 = vdwg.mxu0
      %2936 = vmatprep.subr.bf16.mxu0 0
      %2937 = vmatpush1.bf16.msra.mxu0 %v2142
      %2938 = vmatprep.subr.bf16.mxu0 0
      %2939 = vmatpush1.bf16.msra.mxu0 %v2143
      %2940 = vmatprep.subr.bf16.mxu0 0
      %2941 = vmatpush1.bf16.msra.mxu0 %v2144
      %2942 = vmatprep.subr.bf16.mxu0 0
      %2943 = vmatpush1.bf16.msra.mxu0 %v2145
      %2944 = vmatprep.subr.bf16.mxu0 0
      %2945 = vmatpush1.bf16.msra.mxu0 %v2146
      %2946 = vmatprep.subr.bf16.mxu0 0
      %2947 = vmatpush1.bf16.msra.mxu0 %v2147
      %2948 = vmatprep.subr.bf16.mxu0 0
      %2949 = vmatpush1.bf16.msra.mxu0 %v2148
      %2950 = vmatprep.subr.bf16.mxu0 0
      %2951 = vmatpush1.bf16.msra.mxu0 %v2149
      %2952 = vmatprep.subr.bf16.mxu0 0
      %2953 = vmatpush1.bf16.msra.mxu0 %v2150
      %2954 = vmatprep.subr.bf16.mxu0 0
      %2955 = vmatpush1.bf16.msra.mxu0 %v2151
      %2956 = vmatprep.subr.bf16.mxu0 0
      %2957 = vmatpush1.bf16.msra.mxu0 %v2152
      %2958 = vmatprep.subr.bf16.mxu0 0
      %2959 = vmatpush1.bf16.msra.mxu0 %v2153
      %2960 = vmatprep.subr.bf16.mxu0 0
      %2961 = vmatpush1.bf16.msra.mxu0 %v2154
      %2962 = vmatprep.subr.bf16.mxu0 0
      %2963 = vmatpush1.bf16.msra.mxu0 %v2155
      %2964 = vmatprep.subr.bf16.mxu0 0
      %2965 = vmatpush1.bf16.msra.mxu0 %v2156
      %2966 = vmatprep.subr.bf16.mxu0 0
      %2967 = vmatpush1.bf16.msra.mxu0 %v2157
      %2968 = vmatprep.mubr.bf16.mxu0 %v959
      %2969 = vmatmul.mubr.bf16.gmra.mrb[0].mxu0 %v958
      %v2970 = vpop.f32.mrb[0].mxu0
      %v2971 = vadd.f32 %v2922, %v2970
      %v2972 = vpop.f32.mrb[0].mxu0
      %v2973 = vpop.f32.mrb[0].mxu0
      %v2974 = vadd.f32 %v2925, %v2973
      %v2975 = vpop.f32.mrb[0].mxu0
      %2976 = vmatprep.mubr.bf16.mxu0 %v988
      %2977 = vmatmul.mubr.bf16.gmra.mrb[0].mxu0 %v987
      %v2978 = vpop.f32.mrb[0].mxu0
      %v2979 = vadd.f32 %v2930, %v2978
      %v2980 = vpop.f32.mrb[0].mxu0
      %v2981 = vpop.f32.mrb[0].mxu0
      %v2982 = vadd.f32 %v2933, %v2981
      %v2983 = vpop.f32.mrb[0].mxu0
      %2984 = vdwg.mxu0
      %2985 = vmatprep.subr.bf16.mxu0 0
      %2986 = vmatpush1.bf16.msra.mxu0 %v2158
      %2987 = vmatprep.subr.bf16.mxu0 0
      %2988 = vmatpush1.bf16.msra.mxu0 %v2159
      %2989 = vmatprep.subr.bf16.mxu0 0
      %2990 = vmatpush1.bf16.msra.mxu0 %v2160
      %2991 = vmatprep.subr.bf16.mxu0 0
      %2992 = vmatpush1.bf16.msra.mxu0 %v2161
      %2993 = vmatprep.subr.bf16.mxu0 0
      %2994 = vmatpush1.bf16.msra.mxu0 %v2162
      %2995 = vmatprep.subr.bf16.mxu0 0
      %2996 = vmatpush1.bf16.msra.mxu0 %v2163
      %2997 = vmatprep.subr.bf16.mxu0 0
      %2998 = vmatpush1.bf16.msra.mxu0 %v2164
      %2999 = vmatprep.subr.bf16.mxu0 0
      %3000 = vmatpush1.bf16.msra.mxu0 %v2165
      %3001 = vmatprep.subr.bf16.mxu0 0
      %3002 = vmatpush1.bf16.msra.mxu0 %v2166
      %3003 = vmatprep.subr.bf16.mxu0 0
      %3004 = vmatpush1.bf16.msra.mxu0 %v2167
      %3005 = vmatprep.subr.bf16.mxu0 0
      %3006 = vmatpush1.bf16.msra.mxu0 %v2168
      %3007 = vmatprep.subr.bf16.mxu0 0
      %3008 = vmatpush1.bf16.msra.mxu0 %v2169
      %3009 = vmatprep.subr.bf16.mxu0 0
      %3010 = vmatpush1.bf16.msra.mxu0 %v2170
      %3011 = vmatprep.subr.bf16.mxu0 0
      %3012 = vmatpush1.bf16.msra.mxu0 %v2171
      %3013 = vmatprep.subr.bf16.mxu0 0
      %3014 = vmatpush1.bf16.msra.mxu0 %v2172
      %3015 = vmatprep.subr.bf16.mxu0 0
      %3016 = vmatpush1.bf16.msra.mxu0 %v2173
      %3017 = vmatprep.mubr.bf16.mxu0 %v961
      %3018 = vmatmul.mubr.bf16.gmra.mrb[0].mxu0 %v960
      %v3019 = vpop.f32.mrb[0].mxu0
      %v3020 = vadd.f32 %v2971, %v3019
      %v3021 = vpop.f32.mrb[0].mxu0
      %v3022 = vpop.f32.mrb[0].mxu0
      %v3023 = vadd.f32 %v2974, %v3022
      %v3024 = vpop.f32.mrb[0].mxu0
      %3025 = vmatprep.mubr.bf16.mxu0 %v990
      %3026 = vmatmul.mubr.bf16.gmra.mrb[0].mxu0 %v989
      %v3027 = vpop.f32.mrb[0].mxu0
      %v3028 = vadd.f32 %v2979, %v3027
      %v3029 = vpop.f32.mrb[0].mxu0
      %v3030 = vpop.f32.mrb[0].mxu0
      %v3031 = vadd.f32 %v2982, %v3030
      %v3032 = vpop.f32.mrb[0].mxu0
      %3033 = vdwg.mxu0
      %3034 = vmatprep.subr.bf16.mxu0 0
      %3035 = vmatpush1.bf16.msra.mxu0 %v2174
      %3036 = vmatprep.subr.bf16.mxu0 0
      %3037 = vmatpush1.bf16.msra.mxu0 %v2175
      %3038 = vmatprep.subr.bf16.mxu0 0
      %3039 = vmatpush1.bf16.msra.mxu0 %v2176
      %3040 = vmatprep.subr.bf16.mxu0 0
      %3041 = vmatpush1.bf16.msra.mxu0 %v2177
      %3042 = vmatprep.subr.bf16.mxu0 0
      %3043 = vmatpush1.bf16.msra.mxu0 %v2178
      %3044 = vmatprep.subr.bf16.mxu0 0
      %3045 = vmatpush1.bf16.msra.mxu0 %v2179
      %3046 = vmatprep.subr.bf16.mxu0 0
      %3047 = vmatpush1.bf16.msra.mxu0 %v2180
      %3048 = vmatprep.subr.bf16.mxu0 0
      %3049 = vmatpush1.bf16.msra.mxu0 %v2181
      %3050 = vmatprep.subr.bf16.mxu0 0
      %3051 = vmatpush1.bf16.msra.mxu0 %v2182
      %3052 = vmatprep.subr.bf16.mxu0 0
      %3053 = vmatpush1.bf16.msra.mxu0 %v2183
      %3054 = vmatprep.subr.bf16.mxu0 0
      %3055 = vmatpush1.bf16.msra.mxu0 %v2184
      %3056 = vmatprep.subr.bf16.mxu0 0
      %3057 = vmatpush1.bf16.msra.mxu0 %v2185
      %3058 = vmatprep.subr.bf16.mxu0 0
      %3059 = vmatpush1.bf16.msra.mxu0 %v2186
      %3060 = vmatprep.subr.bf16.mxu0 0
      %3061 = vmatpush1.bf16.msra.mxu0 %v2187
      %3062 = vmatprep.subr.bf16.mxu0 0
      %3063 = vmatpush1.bf16.msra.mxu0 %v2188
      %3064 = vmatprep.subr.bf16.mxu0 0
      %3065 = vmatpush1.bf16.msra.mxu0 %v2189
      %3066 = vmatprep.mubr.bf16.mxu0 %v963
      %3067 = vmatmul.mubr.bf16.gmra.mrb[0].mxu0 %v962
      %v3068 = vpop.f32.mrb[0].mxu0
      %v3069 = vadd.f32 %v3020, %v3068
      %v3070 = vpop.f32.mrb[0].mxu0
      %v3071 = vpop.f32.mrb[0].mxu0
      %v3072 = vadd.f32 %v3023, %v3071
      %v3073 = vpop.f32.mrb[0].mxu0
      %3074 = vmatprep.mubr.bf16.mxu0 %v992
      %3075 = vmatmul.mubr.bf16.gmra.mrb[0].mxu0 %v991
      %v3076 = vpop.f32.mrb[0].mxu0
      %v3077 = vadd.f32 %v3028, %v3076
      %v3078 = vpop.f32.mrb[0].mxu0
      %v3079 = vpop.f32.mrb[0].mxu0
      %v3080 = vadd.f32 %v3031, %v3079
      %v3081 = vpop.f32.mrb[0].mxu0
      %3082 = vdwg.mxu0
      %3083 = vmatprep.subr.bf16.mxu0 0
      %3084 = vmatpush1.bf16.msra.mxu0 %v2190
      %3085 = vmatprep.subr.bf16.mxu0 0
      %3086 = vmatpush1.bf16.msra.mxu0 %v2191
      %3087 = vmatprep.subr.bf16.mxu0 0
      %3088 = vmatpush1.bf16.msra.mxu0 %v2192
      %3089 = vmatprep.subr.bf16.mxu0 0
      %3090 = vmatpush1.bf16.msra.mxu0 %v2193
      %3091 = vmatprep.subr.bf16.mxu0 0
      %3092 = vmatpush1.bf16.msra.mxu0 %v2194
      %3093 = vmatprep.subr.bf16.mxu0 0
      %3094 = vmatpush1.bf16.msra.mxu0 %v2195
      %3095 = vmatprep.subr.bf16.mxu0 0
      %3096 = vmatpush1.bf16.msra.mxu0 %v2196
      %3097 = vmatprep.subr.bf16.mxu0 0
      %3098 = vmatpush1.bf16.msra.mxu0 %v2197
      %3099 = vmatprep.subr.bf16.mxu0 0
      %3100 = vmatpush1.bf16.msra.mxu0 %v2198
      %3101 = vmatprep.subr.bf16.mxu0 0
      %3102 = vmatpush1.bf16.msra.mxu0 %v2199
      %3103 = vmatprep.subr.bf16.mxu0 0
      %3104 = vmatpush1.bf16.msra.mxu0 %v2200
      %3105 = vmatprep.subr.bf16.mxu0 0
      %3106 = vmatpush1.bf16.msra.mxu0 %v2201
      %3107 = vmatprep.subr.bf16.mxu0 0
      %3108 = vmatpush1.bf16.msra.mxu0 %v2202
      %3109 = vmatprep.subr.bf16.mxu0 0
      %3110 = vmatpush1.bf16.msra.mxu0 %v2203
      %3111 = vmatprep.subr.bf16.mxu0 0
      %3112 = vmatpush1.bf16.msra.mxu0 %v2204
      %3113 = vmatprep.subr.bf16.mxu0 0
      %3114 = vmatpush1.bf16.msra.mxu0 %v2205
      %3115 = vmatprep.mubr.bf16.mxu0 %v965
      %3116 = vmatmul.mubr.bf16.gmra.mrb[0].mxu0 %v964
      %v3117 = vpop.f32.mrb[0].mxu0
      %v3118 = vadd.f32 %v3069, %v3117
      %v3119 = vpop.f32.mrb[0].mxu0
      %v3120 = vpop.f32.mrb[0].mxu0
      %v3121 = vadd.f32 %v3072, %v3120
      %v3122 = vpop.f32.mrb[0].mxu0
      %3123 = vmatprep.mubr.bf16.mxu0 %v994
      %3124 = vmatmul.mubr.bf16.gmra.mrb[0].mxu0 %v993
      %v3125 = vpop.f32.mrb[0].mxu0
      %v3126 = vadd.f32 %v3077, %v3125
      %v3127 = vpop.f32.mrb[0].mxu0
      %v3128 = vpop.f32.mrb[0].mxu0
      %v3129 = vadd.f32 %v3080, %v3128
      %v3130 = vpop.f32.mrb[0].mxu0
      %3131 = vdwg.mxu0
      %3132 = vmatprep.subr.bf16.mxu0 0
      %3133 = vmatpush1.bf16.msra.mxu0 %v2206
      %3134 = vmatprep.subr.bf16.mxu0 0
      %3135 = vmatpush1.bf16.msra.mxu0 %v2207
      %3136 = vmatprep.subr.bf16.mxu0 0
      %3137 = vmatpush1.bf16.msra.mxu0 %v2208
      %3138 = vmatprep.subr.bf16.mxu0 0
      %3139 = vmatpush1.bf16.msra.mxu0 %v2209
      %3140 = vmatprep.subr.bf16.mxu0 0
      %3141 = vmatpush1.bf16.msra.mxu0 %v2210
      %3142 = vmatprep.subr.bf16.mxu0 0
      %3143 = vmatpush1.bf16.msra.mxu0 %v2211
      %3144 = vmatprep.subr.bf16.mxu0 0
      %3145 = vmatpush1.bf16.msra.mxu0 %v2212
      %3146 = vmatprep.subr.bf16.mxu0 0
      %3147 = vmatpush1.bf16.msra.mxu0 %v2213
      %3148 = vmatprep.subr.bf16.mxu0 0
      %3149 = vmatpush1.bf16.msra.mxu0 0
      %3150 = vmatprep.subr.bf16.mxu0 0
      %3151 = vmatpush1.bf16.msra.mxu0 0
      %3152 = vmatprep.subr.bf16.mxu0 0
      %3153 = vmatpush1.bf16.msra.mxu0 0
      %3154 = vmatprep.subr.bf16.mxu0 0
      %3155 = vmatpush1.bf16.msra.mxu0 0
      %3156 = vmatprep.subr.bf16.mxu0 0
      %3157 = vmatpush1.bf16.msra.mxu0 0
      %3158 = vmatprep.subr.bf16.mxu0 0
      %3159 = vmatpush1.bf16.msra.mxu0 0
      %3160 = vmatprep.subr.bf16.mxu0 0
      %3161 = vmatpush1.bf16.msra.mxu0 0
      %3162 = vmatprep.subr.bf16.mxu0 0
      %3163 = vmatpush1.bf16.msra.mxu0 0
      %3164 = vmatprep.mubr.bf16.mxu0 0
      %3165 = vmatmul.mubr.bf16.gmra.mrb[0].mxu0 %v966
      %v3166 = vpop.f32.mrb[0].mxu0
      %v3167 = vadd.f32 %v3118, %v3166
      %v3168 = vpop.f32.mrb[0].mxu0
      %v3169 = vpop.f32.mrb[0].mxu0
      %v3170 = vadd.f32 %v3121, %v3169
      %v3171 = vpop.f32.mrb[0].mxu0
      %3172 = vmatprep.mubr.bf16.mxu0 0
      %3173 = vmatmul.mubr.bf16.gmra.mrb[0].mxu0 %v995
      %v3174 = vpop.f32.mrb[0].mxu0
      %v3175 = vadd.f32 %v3126, %v3174
      %v3176 = vpop.f32.mrb[0].mxu0
      %v3177 = vpop.f32.mrb[0].mxu0
      %v3178 = vadd.f32 %v3129, %v3177
      %v3179 = vpop.f32.mrb[0].mxu0
      %3180 = vdwg.mxu0
      %v3181 = vadd.f32 %v231, %v3167
      %v3182 = vadd.f32 %v232, %v3170
      %v3183 = vadd.f32 %v233, %v3175
      %v3184 = vadd.f32 %v234, %v3178
      %vm3185 = vcmask 523264
      %3186 = vst.msk [vmem:[%s220] sm:$0xff] %vm3185, %v3181
      %3187 = vst.msk [vmem:[%s220 + $0x8] sm:$0xff] %vm3185, %v3182
      %3188 = vst.msk [vmem:[%s220 + $0x10] sm:$0xff] %vm3185, %v3183
      %3189 = vst.msk [vmem:[%s220 + $0x18] sm:$0xff] %vm3185, %v3184
      %p3190 = scmp.eq.s32.totalorder %s20, 1
      // Predicated region
      $region41: #{cnn_forward.3} parent=35 // pred_check
        %p3191 = pneg %p3190
      $region42: #{cnn_forward.3} parent=35 // pred_check_branch
        %3193 = sbr.rel (%p3191) target = $region44
      $region43: #{cnn_forward.3} parent=35 // pred_region
        %v3194 = vld [vmem:[%s220] sm:$0xff]
        %v3195 = vld [vmem:[%s220 + $0x8] sm:$0xff]
        %v3196 = vld [vmem:[%s220 + $0x10] sm:$0xff]
        %v3197 = vld [vmem:[%s220 + $0x18] sm:$0xff]
        %v3198 = vld [vmem:[%s2] sm:$0xff]
        %v3199 = vld [vmem:[%s2 + $0x8] sm:$0xff]
        %v3200 = vld [vmem:[%s2 + $0x10] sm:$0xff]
        %v3201 = vld [vmem:[%s2 + $0x18] sm:$0xff]
        %3203 = vset.pattern.permute.xlu0 0
        %3204 = vperm.xlu0 %3203, %v3198
        %v3205 = vpop.permute.xlu0 %3204
        %3208 = vset.pattern.permute.xlu0 0
        %3209 = vperm.xlu0 %3208, %v3199
        %v3210 = vpop.permute.xlu0 %3209
        %3213 = vset.pattern.permute.xlu0 0
        %3214 = vperm.xlu0 %3213, %v3200
        %v3215 = vpop.permute.xlu0 %3214
        %3218 = vset.pattern.permute.xlu0 0
        %3219 = vperm.xlu0 %3218, %v3201
        %v3220 = vpop.permute.xlu0 %3219
        %v3222 = vmul.f32 %v3194, %v3205
        %v3223 = vmul.f32 %v3195, %v3210
        %v3224 = vmul.f32 %v3196, %v3215
        %v3225 = vmul.f32 %v3197, %v3220
        %v3226 = vld [vmem:[%s3] sm:$0xff]
        %v3227 = vld [vmem:[%s3 + $0x8] sm:$0xff]
        %v3228 = vld [vmem:[%s3 + $0x10] sm:$0xff]
        %v3229 = vld [vmem:[%s3 + $0x18] sm:$0xff]
        %3231 = vset.pattern.permute.xlu0 0
        %3232 = vperm.xlu0 %3231, %v3226
        %v3233 = vpop.permute.xlu0 %3232
        %3236 = vset.pattern.permute.xlu0 0
        %3237 = vperm.xlu0 %3236, %v3227
        %v3238 = vpop.permute.xlu0 %3237
        %3241 = vset.pattern.permute.xlu0 0
        %3242 = vperm.xlu0 %3241, %v3228
        %v3243 = vpop.permute.xlu0 %3242
        %3246 = vset.pattern.permute.xlu0 0
        %3247 = vperm.xlu0 %3246, %v3229
        %v3248 = vpop.permute.xlu0 %3247
        %v3250 = vadd.f32 %v3222, %v3233
        %v3251 = vadd.f32 %v3223, %v3238
        %v3252 = vadd.f32 %v3224, %v3243
        %v3253 = vadd.f32 %v3225, %v3248
        %v3254 = vmax.f32 %v3250, 0.0
        %v3255 = vmax.f32 %v3251, 0.0
        %v3256 = vmax.f32 %v3252, 0.0
        %v3257 = vmax.f32 %v3253, 0.0
        %v3258 = vmin.f32 %v3254, 20.0
        %v3259 = vmin.f32 %v3255, 20.0
        %v3260 = vmin.f32 %v3256, 20.0
        %v3261 = vmin.f32 %v3257, 20.0
        %3262 = vst.msk [vmem:[%s220] sm:$0xff] %vm3185, %v3258
        %3263 = vst.msk [vmem:[%s220 + $0x8] sm:$0xff] %vm3185, %v3259
        %3264 = vst.msk [vmem:[%s220 + $0x10] sm:$0xff] %vm3185, %v3260
        %3265 = vst.msk [vmem:[%s220 + $0x18] sm:$0xff] %vm3185, %v3261
      $region44: #{cnn_forward.3} parent=35 // pred_fallthru
        _
      %p3266 = scmp.lt.s32.totalorder %s19, 0
      %s3267 = scalar_select %p3266, %s19, 0
      %s3268 = smul.addr %s3267, 8
      %s3269 = scalar_lea.vmem %s4, %s3268
      // Predicated region
      $region45: #{cnn_forward.3} parent=35 // pred_check
        %p3270 = pneg %p136
      $region46: #{cnn_forward.3} parent=35 // pred_check_branch
        %3272 = sbr.rel (%p3270) target = $region48
      $region47: #{cnn_forward.3} parent=35 // pred_region
        _
      $region48: #{cnn_forward.3} parent=35 // pred_fallthru
        _
      // Predicated region
      $region49: #{cnn_forward.3} parent=35 // pred_check
        %p3273 = pneg %p136
      $region50: #{cnn_forward.3} parent=35 // pred_check_branch
        %3275 = sbr.rel (%p3273) target = $region52
      $region51: #{cnn_forward.3} parent=35 // pred_region
        %p3276 = scmp.lt.s32.totalorder %s19, 0
        %s3277 = scalar_select %p3276, %s19, 0
        %s3278 = smul.addr %s3277, 8
        %s3279 = scalar_lea.vmem %s4, %s3278
      $region52: #{cnn_forward.3} parent=35 // pred_fallthru
        _
    $region36: #{cnn_forward.3} parent=5 // pred_fallthru
      _
    %p3280 = scmp.le.s32.totalorder 2, %s10
    // Predicated region
    $region53: #{cnn_forward.3} parent=5 // pred_check
      %p3281 = pneg %p3280
    $region54: #{cnn_forward.3} parent=5 // pred_check_branch
      %3283 = sbr.rel (%p3281) target = $region56
    $region55: #{cnn_forward.3} parent=5 // pred_region
      %s3284 = ssub.s32 %s10, 2
    $region56: #{cnn_forward.3} parent=5 // pred_fallthru
      _
  $region6: #{cnn_forward.3} parent=0 // loop_footer
    %s14 = sadd.s32 1, %s10
  $region7: #{cnn_forward.3} parent=0 // loop_footer_branch
    %9 = sbr.rel target = $region3
  $region8: #{cnn_forward.3} parent=0 // loop_exit
    _

</llo_original>
